<compile_context>
chip_gen: v5e
topology: v5e:2x2
jax: 0.10.0
libtpu: 0.0.40
codegen_flags: <defaults>
</compile_context>

<pallas_src>
import jax
import jax.numpy as jnp
from jax.experimental import pallas as pl
from jax.experimental.pallas import tpu as pltpu  # noqa: F401  (TPU backend)

# ----------------------------- config ---------------------------------------
BATCH = 2
INPUT_NC = 4          # number of channels -> number of independent LSTMs
TIME_STEP = 8
INPUT_SIZE = 16
HIDDEN_SIZE = 32      # C * H = 128  -> exactly one lane tile
NUM_CLASSES = 10
NUM_LAYERS = 2        # hard-wired to the module default (2 stacked LSTM layers)
NUM_GATES = 4         # PyTorch gate order: i, f, g, o


# ----------------------------- Pallas kernel ---------------------------------
def _lstm_fused_kernel(x_ref, wih0_ref, whh0_ref, b0_ref,
                       wih1_ref, whh1_ref, b1_ref, wfc_ref, bfc_ref, out_ref):
    """Full model forward (all channels, both layers, all time steps, FC).

    x_ref   : (T, B, C*I)        time-major input, channel-major lanes
    wih0_ref: (C*I, 4*C*H)       block-diag packed, cols ordered (gate, chan, h)
    whh0_ref: (C*H, 4*C*H)
    b0_ref  : (1, 4*C*H)         b_ih + b_hh, same column order
    wih1_ref: (C*H, 4*C*H)
    whh1_ref: (C*H, 4*C*H)
    b1_ref  : (1, 4*C*H)
    wfc_ref : (C*H, NC)          channel-major rows (matches torch.cat order)
    bfc_ref : (1, NC)
    out_ref : (B, NC)
    """
    T = x_ref.shape[0]
    B = x_ref.shape[1]
    CH = whh0_ref.shape[0]                 # C * H = 128

    wih0 = wih0_ref[...]
    whh0 = whh0_ref[...]
    b0 = b0_ref[...]
    wih1 = wih1_ref[...]
    whh1 = whh1_ref[...]
    b1 = b1_ref[...]

    h0 = jnp.zeros((B, CH), jnp.float32)
    c0 = jnp.zeros((B, CH), jnp.float32)
    h1 = jnp.zeros((B, CH), jnp.float32)
    c1 = jnp.zeros((B, CH), jnp.float32)

    def cell(z, c_state):
        # z: (B, 4*C*H); gate slices are 128-lane aligned -> whole-vreg picks.
        i_g = jax.nn.sigmoid(z[:, 0 * CH:1 * CH])
        f_g = jax.nn.sigmoid(z[:, 1 * CH:2 * CH])
        g_g = jnp.tanh(z[:, 2 * CH:3 * CH])
        o_g = jax.nn.sigmoid(z[:, 3 * CH:4 * CH])
        c_new = f_g * c_state + i_g * g_g
        h_new = o_g * jnp.tanh(c_new)
        return h_new, c_new

    # T is small & static -> fully unrolled recurrence; the x @ Wih0 matmuls do
    # not depend on the recurrent state, so the scheduler can hoist/overlap them.
    for t in range(T):
        x_t = x_ref[t]                                       # (B, C*I)
        z0 = (jnp.dot(x_t, wih0, preferred_element_type=jnp.float32)
              + jnp.dot(h0, whh0, preferred_element_type=jnp.float32)
              + b0)
        h0, c0 = cell(z0, c0)                                # layer 0
        z1 = (jnp.dot(h0, wih1, preferred_element_type=jnp.float32)
              + jnp.dot(h1, whh1, preferred_element_type=jnp.float32)
              + b1)
        h1, c1 = cell(z1, c1)                                # layer 1

    # h1 is already the channel-major (B, C*H) concat of last-step hidden states.
    out_ref[...] = (jnp.dot(h1, wfc_ref[...], preferred_element_type=jnp.float32)
                    + bfc_ref[...]).astype(out_ref.dtype)


# ------------------------------ wrapper --------------------------------------
@jax.jit
def lstm_forward(x, packed):
    """x: (B, C, T, I) float32, packed: dict from pack_params -> (B, NUM_CLASSES)."""
    C, T, I = INPUT_NC, TIME_STEP, INPUT_SIZE

    # mimic the torch .view(-1, input_nc, time_step, input_size)
    x = x.reshape(-1, C, T, I).astype(jnp.float32)
    B = x.shape[0]
    # (B, C, T, I) -> (T, B, C*I): time leading for static per-step indexing,
    # channel-major lane packing to match the block-diagonal weight layout.
    x_tbk = jnp.transpose(x, (2, 0, 1, 3)).reshape(T, B, C * I)

    logits = pl.pallas_call(
        _lstm_fused_kernel,
        out_shape=jax.ShapeDtypeStruct((B, NUM_CLASSES), jnp.float32),
    )(x_tbk,
      packed["wih0"], packed["whh0"], packed["b0"],
      packed["wih1"], packed["whh1"], packed["b1"],
      packed["w_fc"], packed["b_fc"])
    return logits


# ----------------------- parameter packing (host side) -----------------------
def pack_params(p):
    """Pack per-channel gate weights into lane-blocked block-diagonal form.

    Column layout of every packed weight/bias: col = g*(C*H) + c*H + h, with the
    PyTorch gate order (i, f, g, o).  Row layout: row = c*K + k for channel-c
    input feature k.  Hidden/cell states live as (B, C*H) with index c*H + h,
    which is exactly the torch.cat((y0, y1, ...), dim=1) feature layout.
    """
    C, H = INPUT_NC, HIDDEN_SIZE
    G = NUM_GATES
    CH = C * H

    def block_diag(w):                         # w: (C, G, K, H)
        K = w.shape[2]
        out = jnp.zeros((C, K, G, C, H), jnp.float32)
        for c in range(C):
            out = out.at[c, :, :, c, :].set(jnp.transpose(w[c], (1, 0, 2)))
        return out.reshape(C * K, G * CH)

    def pack_bias(b):                          # b: (C, G, H) -> (1, G*C*H)
        return jnp.transpose(b, (1, 0, 2)).reshape(1, G * CH)

    return {
        "wih0": block_diag(p["wih0"]),         # (C*I, 4*C*H) = (64, 512)
        "whh0": block_diag(p["whh0"]),         # (C*H, 4*C*H) = (128, 512)
        "b0":   pack_bias(p["b0"]),            # (1, 512)
        "wih1": block_diag(p["wih1"]),         # (128, 512)
        "whh1": block_diag(p["whh1"]),         # (128, 512)
        "b1":   pack_bias(p["b1"]),            # (1, 512)
        "w_fc": p["w_fc"],                     # (C*H, NC)
        "b_fc": p["b_fc"],                     # (1, NC)
    }


# ----------------------- deterministic parameter init ------------------------
def init_params(key):
    """PyTorch-style uniform(-1/sqrt(H), 1/sqrt(H)) init, stacked per channel.

    Logical layout: W_ih gate g is (In, H) (= PyTorch weight_ih chunk g,
    transposed for x @ W).  b = b_ih + b_hh (combined).
    """
    C, I, H, NC = INPUT_NC, INPUT_SIZE, HIDDEN_SIZE, NUM_CLASSES
    k = 1.0 / jnp.sqrt(jnp.float32(H))

    def u(key, shape):
        return jax.random.uniform(key, shape, jnp.float32, -k, k)

    keys = jax.random.split(key, 9)
    params = {
        "wih0": u(keys[0], (C, 4, I, H)),
        "whh0": u(keys[1], (C, 4, H, H)),
        "b0":   u(keys[2], (C, 4, H)) + u(keys[3], (C, 4, H)),   # b_ih + b_hh
        "wih1": u(keys[4], (C, 4, H, H)),
        "whh1": u(keys[5], (C, 4, H, H)),
        "b1":   u(keys[6], (C, 4, H)) + u(keys[7], (C, 4, H)),
    }
    kf = 1.0 / jnp.sqrt(jnp.float32(H * C))
    kw, kb = jax.random.split(keys[8])
    params["w_fc"] = jax.random.uniform(kw, (C * H, NC), jnp.float32, -kf, kf)
    params["b_fc"] = jax.random.uniform(kb, (1, NC), jnp.float32, -kf, kf)
    return params


# ----------------------------- pure-JAX reference ----------------------------
def _lstm_cell_ref(x_t, h, c, w_ih, w_hh, b):
    """One LSTM cell step (per-channel, per-gate logical weights)."""
    def gate(g):
        return x_t @ w_ih[g] + h @ w_hh[g] + b[g:g + 1, :]

    i_g = jax.nn.sigmoid(gate(0))
    f_g = jax.nn.sigmoid(gate(1))
    g_g = jnp.tanh(gate(2))
    o_g = jax.nn.sigmoid(gate(3))
    c_new = f_g * c + i_g * g_g
    h_new = o_g * jnp.tanh(c_new)
    return h_new, c_new


def reference_forward(x, p):
    C, T, I, H = INPUT_NC, TIME_STEP, INPUT_SIZE, HIDDEN_SIZE
    x = x.reshape(-1, C, T, I).astype(jnp.float32)
    B = x.shape[0]
    ys = []
    for c in range(C):
        h0 = c0 = h1 = c1 = jnp.zeros((B, H), jnp.float32)
        for t in range(T):
            x_t = x[:, c, t, :]
            h0, c0 = _lstm_cell_ref(x_t, h0, c0, p["wih0"][c], p["whh0"][c], p["b0"][c])
            h1, c1 = _lstm_cell_ref(h0, h1, c1, p["wih1"][c], p["whh1"][c], p["b1"][c])
        ys.append(h1)
    feat = jnp.concatenate(ys, axis=1)
    return feat @ p["w_fc"] + p["b_fc"]


# ---------------------------------- main --------------------------------------
if __name__ == "__main__":
    key = jax.random.PRNGKey(0)
    k_x, k_p = jax.random.split(key)

    x = jax.random.normal(k_x, (BATCH, INPUT_NC, TIME_STEP, INPUT_SIZE),
                          dtype=jnp.float32)
    params = init_params(k_p)
    packed = pack_params(params)

    logits = lstm_forward(x, packed)
    logits = jax.block_until_ready(logits)

    ref = reference_forward(x, params)
    assert logits.shape == (BATCH, NUM_CLASSES), logits.shape
    assert jnp.allclose(logits, ref, rtol=1e-4, atol=5e-4), (
        "Pallas output does not match pure-JAX reference")

    print("KERNEL_OK")
</pallas_src>

<mosaic_0001>
module attributes {stable_mosaic.version = 11 : i64} {
  func.func @_lstm_fused_kernel(%arg0: memref<8x2x64xf32, #tpu.memory_space<vmem>>, %arg1: memref<64x512xf32, #tpu.memory_space<vmem>>, %arg2: memref<128x512xf32, #tpu.memory_space<vmem>>, %arg3: memref<1x512xf32, #tpu.memory_space<vmem>>, %arg4: memref<128x512xf32, #tpu.memory_space<vmem>>, %arg5: memref<128x512xf32, #tpu.memory_space<vmem>>, %arg6: memref<1x512xf32, #tpu.memory_space<vmem>>, %arg7: memref<128x10xf32, #tpu.memory_space<vmem>>, %arg8: memref<1x10xf32, #tpu.memory_space<vmem>>, %arg9: memref<2x10xf32, #tpu.memory_space<vmem>>) attributes {dimension_semantics = [], scalar_prefetch = 0 : i64, scratch_operands = 0 : i64, tpu.core_type = #tpu.core_type<tc>} {
    %c0 = arith.constant 0 : index
    %c0_0 = arith.constant 0 : index
    %0 = vector.load %arg1[%c0, %c0_0] : memref<64x512xf32, #tpu.memory_space<vmem>>, vector<64x512xf32>
    %c0_1 = arith.constant 0 : index
    %c0_2 = arith.constant 0 : index
    %1 = vector.load %arg2[%c0_1, %c0_2] : memref<128x512xf32, #tpu.memory_space<vmem>>, vector<128x512xf32>
    %c0_3 = arith.constant 0 : index
    %c0_4 = arith.constant 0 : index
    %2 = vector.load %arg3[%c0_3, %c0_4] : memref<1x512xf32, #tpu.memory_space<vmem>>, vector<1x512xf32>
    %c0_5 = arith.constant 0 : index
    %c0_6 = arith.constant 0 : index
    %3 = vector.load %arg4[%c0_5, %c0_6] : memref<128x512xf32, #tpu.memory_space<vmem>>, vector<128x512xf32>
    %c0_7 = arith.constant 0 : index
    %c0_8 = arith.constant 0 : index
    %4 = vector.load %arg5[%c0_7, %c0_8] : memref<128x512xf32, #tpu.memory_space<vmem>>, vector<128x512xf32>
    %c0_9 = arith.constant 0 : index
    %c0_10 = arith.constant 0 : index
    %5 = vector.load %arg6[%c0_9, %c0_10] : memref<1x512xf32, #tpu.memory_space<vmem>>, vector<1x512xf32>
    %cst = arith.constant 0.000000e+00 : f32
    %6 = vector.broadcast %cst : f32 to vector<2x128xf32>
    %cst_11 = arith.constant 0.000000e+00 : f32
    %7 = vector.broadcast %cst_11 : f32 to vector<2x128xf32>
    %cst_12 = arith.constant 0.000000e+00 : f32
    %8 = vector.broadcast %cst_12 : f32 to vector<2x128xf32>
    %cst_13 = arith.constant 0.000000e+00 : f32
    %9 = vector.broadcast %cst_13 : f32 to vector<2x128xf32>
    %c0_14 = arith.constant 0 : index
    %c0_15 = arith.constant 0 : index
    %c0_16 = arith.constant 0 : index
    %10 = vector.load %arg0[%c0_14, %c0_15, %c0_16] : memref<8x2x64xf32, #tpu.memory_space<vmem>>, vector<1x2x64xf32>
    %11 = vector.shape_cast %10 : vector<1x2x64xf32> to vector<2x64xf32>
    %cst_17 = arith.constant dense<0.000000e+00> : vector<2x512xf32>
    %12 = tpu.matmul %11, %0, %cst_17 {dimension_numbers = #tpu.dot_dimension_numbers<[1], [0], [0], [1], [0, 0, 1, 1], [], []>} : vector<2x64xf32>, vector<64x512xf32>, vector<2x512xf32> -> vector<2x512xf32>
    %cst_18 = arith.constant dense<0.000000e+00> : vector<2x512xf32>
    %13 = tpu.matmul %6, %1, %cst_18 {dimension_numbers = #tpu.dot_dimension_numbers<[1], [0], [0], [1], [0, 0, 1, 1], [], []>} : vector<2x128xf32>, vector<128x512xf32>, vector<2x512xf32> -> vector<2x512xf32>
    %14 = arith.addf %12, %13 : vector<2x512xf32>
    %15 = vector.broadcast %2 : vector<1x512xf32> to vector<2x512xf32>
    %16 = arith.addf %14, %15 : vector<2x512xf32>
    %17 = vector.extract_strided_slice %16 {offsets = [0, 0], sizes = [2, 128], strides = [1, 1]} : vector<2x512xf32> to vector<2x128xf32>
    %18 = arith.negf %17 : vector<2x128xf32>
    %19 = math.exp %18 : vector<2x128xf32>
    %cst_19 = arith.constant 1.000000e+00 : f32
    %20 = vector.broadcast %cst_19 : f32 to vector<2x128xf32>
    %21 = arith.addf %20, %19 : vector<2x128xf32>
    %22 = arith.divf %20, %21 : vector<2x128xf32>
    %23 = vector.extract_strided_slice %16 {offsets = [0, 128], sizes = [2, 128], strides = [1, 1]} : vector<2x512xf32> to vector<2x128xf32>
    %24 = arith.negf %23 : vector<2x128xf32>
    %25 = math.exp %24 : vector<2x128xf32>
    %cst_20 = arith.constant 1.000000e+00 : f32
    %26 = vector.broadcast %cst_20 : f32 to vector<2x128xf32>
    %27 = arith.addf %26, %25 : vector<2x128xf32>
    %28 = arith.divf %26, %27 : vector<2x128xf32>
    %29 = vector.extract_strided_slice %16 {offsets = [0, 256], sizes = [2, 128], strides = [1, 1]} : vector<2x512xf32> to vector<2x128xf32>
    %30 = math.tanh %29 : vector<2x128xf32>
    %31 = vector.extract_strided_slice %16 {offsets = [0, 384], sizes = [2, 128], strides = [1, 1]} : vector<2x512xf32> to vector<2x128xf32>
    %32 = arith.negf %31 : vector<2x128xf32>
    %33 = math.exp %32 : vector<2x128xf32>
    %cst_21 = arith.constant 1.000000e+00 : f32
    %34 = vector.broadcast %cst_21 : f32 to vector<2x128xf32>
    %35 = arith.addf %34, %33 : vector<2x128xf32>
    %36 = arith.divf %34, %35 : vector<2x128xf32>
    %37 = arith.mulf %28, %7 : vector<2x128xf32>
    %38 = arith.mulf %22, %30 : vector<2x128xf32>
    %39 = arith.addf %37, %38 : vector<2x128xf32>
    %40 = math.tanh %39 : vector<2x128xf32>
    %41 = arith.mulf %36, %40 : vector<2x128xf32>
    %cst_22 = arith.constant dense<0.000000e+00> : vector<2x512xf32>
    %42 = tpu.matmul %41, %3, %cst_22 {dimension_numbers = #tpu.dot_dimension_numbers<[1], [0], [0], [1], [0, 0, 1, 1], [], []>} : vector<2x128xf32>, vector<128x512xf32>, vector<2x512xf32> -> vector<2x512xf32>
    %cst_23 = arith.constant dense<0.000000e+00> : vector<2x512xf32>
    %43 = tpu.matmul %8, %4, %cst_23 {dimension_numbers = #tpu.dot_dimension_numbers<[1], [0], [0], [1], [0, 0, 1, 1], [], []>} : vector<2x128xf32>, vector<128x512xf32>, vector<2x512xf32> -> vector<2x512xf32>
    %44 = arith.addf %42, %43 : vector<2x512xf32>
    %45 = vector.broadcast %5 : vector<1x512xf32> to vector<2x512xf32>
    %46 = arith.addf %44, %45 : vector<2x512xf32>
    %47 = vector.extract_strided_slice %46 {offsets = [0, 0], sizes = [2, 128], strides = [1, 1]} : vector<2x512xf32> to vector<2x128xf32>
    %48 = arith.negf %47 : vector<2x128xf32>
    %49 = math.exp %48 : vector<2x128xf32>
    %cst_24 = arith.constant 1.000000e+00 : f32
    %50 = vector.broadcast %cst_24 : f32 to vector<2x128xf32>
    %51 = arith.addf %50, %49 : vector<2x128xf32>
    %52 = arith.divf %50, %51 : vector<2x128xf32>
    %53 = vector.extract_strided_slice %46 {offsets = [0, 128], sizes = [2, 128], strides = [1, 1]} : vector<2x512xf32> to vector<2x128xf32>
    %54 = arith.negf %53 : vector<2x128xf32>
    %55 = math.exp %54 : vector<2x128xf32>
    %cst_25 = arith.constant 1.000000e+00 : f32
    %56 = vector.broadcast %cst_25 : f32 to vector<2x128xf32>
    %57 = arith.addf %56, %55 : vector<2x128xf32>
    %58 = arith.divf %56, %57 : vector<2x128xf32>
    %59 = vector.extract_strided_slice %46 {offsets = [0, 256], sizes = [2, 128], strides = [1, 1]} : vector<2x512xf32> to vector<2x128xf32>
    %60 = math.tanh %59 : vector<2x128xf32>
    %61 = vector.extract_strided_slice %46 {offsets = [0, 384], sizes = [2, 128], strides = [1, 1]} : vector<2x512xf32> to vector<2x128xf32>
    %62 = arith.negf %61 : vector<2x128xf32>
    %63 = math.exp %62 : vector<2x128xf32>
    %cst_26 = arith.constant 1.000000e+00 : f32
    %64 = vector.broadcast %cst_26 : f32 to vector<2x128xf32>
    %65 = arith.addf %64, %63 : vector<2x128xf32>
    %66 = arith.divf %64, %65 : vector<2x128xf32>
    %67 = arith.mulf %58, %9 : vector<2x128xf32>
    %68 = arith.mulf %52, %60 : vector<2x128xf32>
    %69 = arith.addf %67, %68 : vector<2x128xf32>
    %70 = math.tanh %69 : vector<2x128xf32>
    %71 = arith.mulf %66, %70 : vector<2x128xf32>
    %c1 = arith.constant 1 : index
    %c0_27 = arith.constant 0 : index
    %c0_28 = arith.constant 0 : index
    %72 = vector.load %arg0[%c1, %c0_27, %c0_28] : memref<8x2x64xf32, #tpu.memory_space<vmem>>, vector<1x2x64xf32>
    %73 = vector.shape_cast %72 : vector<1x2x64xf32> to vector<2x64xf32>
    %cst_29 = arith.constant dense<0.000000e+00> : vector<2x512xf32>
    %74 = tpu.matmul %73, %0, %cst_29 {dimension_numbers = #tpu.dot_dimension_numbers<[1], [0], [0], [1], [0, 0, 1, 1], [], []>} : vector<2x64xf32>, vector<64x512xf32>, vector<2x512xf32> -> vector<2x512xf32>
    %cst_30 = arith.constant dense<0.000000e+00> : vector<2x512xf32>
    %75 = tpu.matmul %41, %1, %cst_30 {dimension_numbers = #tpu.dot_dimension_numbers<[1], [0], [0], [1], [0, 0, 1, 1], [], []>} : vector<2x128xf32>, vector<128x512xf32>, vector<2x512xf32> -> vector<2x512xf32>
    %76 = arith.addf %74, %75 : vector<2x512xf32>
    %77 = vector.broadcast %2 : vector<1x512xf32> to vector<2x512xf32>
    %78 = arith.addf %76, %77 : vector<2x512xf32>
    %79 = vector.extract_strided_slice %78 {offsets = [0, 0], sizes = [2, 128], strides = [1, 1]} : vector<2x512xf32> to vector<2x128xf32>
    %80 = arith.negf %79 : vector<2x128xf32>
    %81 = math.exp %80 : vector<2x128xf32>
    %cst_31 = arith.constant 1.000000e+00 : f32
    %82 = vector.broadcast %cst_31 : f32 to vector<2x128xf32>
    %83 = arith.addf %82, %81 : vector<2x128xf32>
    %84 = arith.divf %82, %83 : vector<2x128xf32>
    %85 = vector.extract_strided_slice %78 {offsets = [0, 128], sizes = [2, 128], strides = [1, 1]} : vector<2x512xf32> to vector<2x128xf32>
    %86 = arith.negf %85 : vector<2x128xf32>
    %87 = math.exp %86 : vector<2x128xf32>
    %cst_32 = arith.constant 1.000000e+00 : f32
    %88 = vector.broadcast %cst_32 : f32 to vector<2x128xf32>
    %89 = arith.addf %88, %87 : vector<2x128xf32>
    %90 = arith.divf %88, %89 : vector<2x128xf32>
    %91 = vector.extract_strided_slice %78 {offsets = [0, 256], sizes = [2, 128], strides = [1, 1]} : vector<2x512xf32> to vector<2x128xf32>
    %92 = math.tanh %91 : vector<2x128xf32>
    %93 = vector.extract_strided_slice %78 {offsets = [0, 384], sizes = [2, 128], strides = [1, 1]} : vector<2x512xf32> to vector<2x128xf32>
    %94 = arith.negf %93 : vector<2x128xf32>
    %95 = math.exp %94 : vector<2x128xf32>
    %cst_33 = arith.constant 1.000000e+00 : f32
    %96 = vector.broadcast %cst_33 : f32 to vector<2x128xf32>
    %97 = arith.addf %96, %95 : vector<2x128xf32>
    %98 = arith.divf %96, %97 : vector<2x128xf32>
    %99 = arith.mulf %90, %39 : vector<2x128xf32>
    %100 = arith.mulf %84, %92 : vector<2x128xf32>
    %101 = arith.addf %99, %100 : vector<2x128xf32>
    %102 = math.tanh %101 : vector<2x128xf32>
    %103 = arith.mulf %98, %102 : vector<2x128xf32>
    %cst_34 = arith.constant dense<0.000000e+00> : vector<2x512xf32>
    %104 = tpu.matmul %103, %3, %cst_34 {dimension_numbers = #tpu.dot_dimension_numbers<[1], [0], [0], [1], [0, 0, 1, 1], [], []>} : vector<2x128xf32>, vector<128x512xf32>, vector<2x512xf32> -> vector<2x512xf32>
    %cst_35 = arith.constant dense<0.000000e+00> : vector<2x512xf32>
    %105 = tpu.matmul %71, %4, %cst_35 {dimension_numbers = #tpu.dot_dimension_numbers<[1], [0], [0], [1], [0, 0, 1, 1], [], []>} : vector<2x128xf32>, vector<128x512xf32>, vector<2x512xf32> -> vector<2x512xf32>
    %106 = arith.addf %104, %105 : vector<2x512xf32>
    %107 = vector.broadcast %5 : vector<1x512xf32> to vector<2x512xf32>
    %108 = arith.addf %106, %107 : vector<2x512xf32>
    %109 = vector.extract_strided_slice %108 {offsets = [0, 0], sizes = [2, 128], strides = [1, 1]} : vector<2x512xf32> to vector<2x128xf32>
    %110 = arith.negf %109 : vector<2x128xf32>
    %111 = math.exp %110 : vector<2x128xf32>
    %cst_36 = arith.constant 1.000000e+00 : f32
    %112 = vector.broadcast %cst_36 : f32 to vector<2x128xf32>
    %113 = arith.addf %112, %111 : vector<2x128xf32>
    %114 = arith.divf %112, %113 : vector<2x128xf32>
    %115 = vector.extract_strided_slice %108 {offsets = [0, 128], sizes = [2, 128], strides = [1, 1]} : vector<2x512xf32> to vector<2x128xf32>
    %116 = arith.negf %115 : vector<2x128xf32>
    %117 = math.exp %116 : vector<2x128xf32>
    %cst_37 = arith.constant 1.000000e+00 : f32
    %118 = vector.broadcast %cst_37 : f32 to vector<2x128xf32>
    %119 = arith.addf %118, %117 : vector<2x128xf32>
    %120 = arith.divf %118, %119 : vector<2x128xf32>
    %121 = vector.extract_strided_slice %108 {offsets = [0, 256], sizes = [2, 128], strides = [1, 1]} : vector<2x512xf32> to vector<2x128xf32>
    %122 = math.tanh %121 : vector<2x128xf32>
    %123 = vector.extract_strided_slice %108 {offsets = [0, 384], sizes = [2, 128], strides = [1, 1]} : vector<2x512xf32> to vector<2x128xf32>
    %124 = arith.negf %123 : vector<2x128xf32>
    %125 = math.exp %124 : vector<2x128xf32>
    %cst_38 = arith.constant 1.000000e+00 : f32
    %126 = vector.broadcast %cst_38 : f32 to vector<2x128xf32>
    %127 = arith.addf %126, %125 : vector<2x128xf32>
    %128 = arith.divf %126, %127 : vector<2x128xf32>
    %129 = arith.mulf %120, %69 : vector<2x128xf32>
    %130 = arith.mulf %114, %122 : vector<2x128xf32>
    %131 = arith.addf %129, %130 : vector<2x128xf32>
    %132 = math.tanh %131 : vector<2x128xf32>
    %133 = arith.mulf %128, %132 : vector<2x128xf32>
    %c2 = arith.constant 2 : index
    %c0_39 = arith.constant 0 : index
    %c0_40 = arith.constant 0 : index
    %134 = vector.load %arg0[%c2, %c0_39, %c0_40] : memref<8x2x64xf32, #tpu.memory_space<vmem>>, vector<1x2x64xf32>
    %135 = vector.shape_cast %134 : vector<1x2x64xf32> to vector<2x64xf32>
    %cst_41 = arith.constant dense<0.000000e+00> : vector<2x512xf32>
    %136 = tpu.matmul %135, %0, %cst_41 {dimension_numbers = #tpu.dot_dimension_numbers<[1], [0], [0], [1], [0, 0, 1, 1], [], []>} : vector<2x64xf32>, vector<64x512xf32>, vector<2x512xf32> -> vector<2x512xf32>
    %cst_42 = arith.constant dense<0.000000e+00> : vector<2x512xf32>
    %137 = tpu.matmul %103, %1, %cst_42 {dimension_numbers = #tpu.dot_dimension_numbers<[1], [0], [0], [1], [0, 0, 1, 1], [], []>} : vector<2x128xf32>, vector<128x512xf32>, vector<2x512xf32> -> vector<2x512xf32>
    %138 = arith.addf %136, %137 : vector<2x512xf32>
    %139 = vector.broadcast %2 : vector<1x512xf32> to vector<2x512xf32>
    %140 = arith.addf %138, %139 : vector<2x512xf32>
    %141 = vector.extract_strided_slice %140 {offsets = [0, 0], sizes = [2, 128], strides = [1, 1]} : vector<2x512xf32> to vector<2x128xf32>
    %142 = arith.negf %141 : vector<2x128xf32>
    %143 = math.exp %142 : vector<2x128xf32>
    %cst_43 = arith.constant 1.000000e+00 : f32
    %144 = vector.broadcast %cst_43 : f32 to vector<2x128xf32>
    %145 = arith.addf %144, %143 : vector<2x128xf32>
    %146 = arith.divf %144, %145 : vector<2x128xf32>
    %147 = vector.extract_strided_slice %140 {offsets = [0, 128], sizes = [2, 128], strides = [1, 1]} : vector<2x512xf32> to vector<2x128xf32>
    %148 = arith.negf %147 : vector<2x128xf32>
    %149 = math.exp %148 : vector<2x128xf32>
    %cst_44 = arith.constant 1.000000e+00 : f32
    %150 = vector.broadcast %cst_44 : f32 to vector<2x128xf32>
    %151 = arith.addf %150, %149 : vector<2x128xf32>
    %152 = arith.divf %150, %151 : vector<2x128xf32>
    %153 = vector.extract_strided_slice %140 {offsets = [0, 256], sizes = [2, 128], strides = [1, 1]} : vector<2x512xf32> to vector<2x128xf32>
    %154 = math.tanh %153 : vector<2x128xf32>
    %155 = vector.extract_strided_slice %140 {offsets = [0, 384], sizes = [2, 128], strides = [1, 1]} : vector<2x512xf32> to vector<2x128xf32>
    %156 = arith.negf %155 : vector<2x128xf32>
    %157 = math.exp %156 : vector<2x128xf32>
    %cst_45 = arith.constant 1.000000e+00 : f32
    %158 = vector.broadcast %cst_45 : f32 to vector<2x128xf32>
    %159 = arith.addf %158, %157 : vector<2x128xf32>
    %160 = arith.divf %158, %159 : vector<2x128xf32>
    %161 = arith.mulf %152, %101 : vector<2x128xf32>
    %162 = arith.mulf %146, %154 : vector<2x128xf32>
    %163 = arith.addf %161, %162 : vector<2x128xf32>
    %164 = math.tanh %163 : vector<2x128xf32>
    %165 = arith.mulf %160, %164 : vector<2x128xf32>
    %cst_46 = arith.constant dense<0.000000e+00> : vector<2x512xf32>
    %166 = tpu.matmul %165, %3, %cst_46 {dimension_numbers = #tpu.dot_dimension_numbers<[1], [0], [0], [1], [0, 0, 1, 1], [], []>} : vector<2x128xf32>, vector<128x512xf32>, vector<2x512xf32> -> vector<2x512xf32>
    %cst_47 = arith.constant dense<0.000000e+00> : vector<2x512xf32>
    %167 = tpu.matmul %133, %4, %cst_47 {dimension_numbers = #tpu.dot_dimension_numbers<[1], [0], [0], [1], [0, 0, 1, 1], [], []>} : vector<2x128xf32>, vector<128x512xf32>, vector<2x512xf32> -> vector<2x512xf32>
    %168 = arith.addf %166, %167 : vector<2x512xf32>
    %169 = vector.broadcast %5 : vector<1x512xf32> to vector<2x512xf32>
    %170 = arith.addf %168, %169 : vector<2x512xf32>
    %171 = vector.extract_strided_slice %170 {offsets = [0, 0], sizes = [2, 128], strides = [1, 1]} : vector<2x512xf32> to vector<2x128xf32>
    %172 = arith.negf %171 : vector<2x128xf32>
    %173 = math.exp %172 : vector<2x128xf32>
    %cst_48 = arith.constant 1.000000e+00 : f32
    %174 = vector.broadcast %cst_48 : f32 to vector<2x128xf32>
    %175 = arith.addf %174, %173 : vector<2x128xf32>
    %176 = arith.divf %174, %175 : vector<2x128xf32>
    %177 = vector.extract_strided_slice %170 {offsets = [0, 128], sizes = [2, 128], strides = [1, 1]} : vector<2x512xf32> to vector<2x128xf32>
    %178 = arith.negf %177 : vector<2x128xf32>
    %179 = math.exp %178 : vector<2x128xf32>
    %cst_49 = arith.constant 1.000000e+00 : f32
    %180 = vector.broadcast %cst_49 : f32 to vector<2x128xf32>
    %181 = arith.addf %180, %179 : vector<2x128xf32>
    %182 = arith.divf %180, %181 : vector<2x128xf32>
    %183 = vector.extract_strided_slice %170 {offsets = [0, 256], sizes = [2, 128], strides = [1, 1]} : vector<2x512xf32> to vector<2x128xf32>
    %184 = math.tanh %183 : vector<2x128xf32>
    %185 = vector.extract_strided_slice %170 {offsets = [0, 384], sizes = [2, 128], strides = [1, 1]} : vector<2x512xf32> to vector<2x128xf32>
    %186 = arith.negf %185 : vector<2x128xf32>
    %187 = math.exp %186 : vector<2x128xf32>
    %cst_50 = arith.constant 1.000000e+00 : f32
    %188 = vector.broadcast %cst_50 : f32 to vector<2x128xf32>
    %189 = arith.addf %188, %187 : vector<2x128xf32>
    %190 = arith.divf %188, %189 : vector<2x128xf32>
    %191 = arith.mulf %182, %131 : vector<2x128xf32>
    %192 = arith.mulf %176, %184 : vector<2x128xf32>
    %193 = arith.addf %191, %192 : vector<2x128xf32>
    %194 = math.tanh %193 : vector<2x128xf32>
    %195 = arith.mulf %190, %194 : vector<2x128xf32>
    %c3 = arith.constant 3 : index
    %c0_51 = arith.constant 0 : index
    %c0_52 = arith.constant 0 : index
    %196 = vector.load %arg0[%c3, %c0_51, %c0_52] : memref<8x2x64xf32, #tpu.memory_space<vmem>>, vector<1x2x64xf32>
    %197 = vector.shape_cast %196 : vector<1x2x64xf32> to vector<2x64xf32>
    %cst_53 = arith.constant dense<0.000000e+00> : vector<2x512xf32>
    %198 = tpu.matmul %197, %0, %cst_53 {dimension_numbers = #tpu.dot_dimension_numbers<[1], [0], [0], [1], [0, 0, 1, 1], [], []>} : vector<2x64xf32>, vector<64x512xf32>, vector<2x512xf32> -> vector<2x512xf32>
    %cst_54 = arith.constant dense<0.000000e+00> : vector<2x512xf32>
    %199 = tpu.matmul %165, %1, %cst_54 {dimension_numbers = #tpu.dot_dimension_numbers<[1], [0], [0], [1], [0, 0, 1, 1], [], []>} : vector<2x128xf32>, vector<128x512xf32>, vector<2x512xf32> -> vector<2x512xf32>
    %200 = arith.addf %198, %199 : vector<2x512xf32>
    %201 = vector.broadcast %2 : vector<1x512xf32> to vector<2x512xf32>
    %202 = arith.addf %200, %201 : vector<2x512xf32>
    %203 = vector.extract_strided_slice %202 {offsets = [0, 0], sizes = [2, 128], strides = [1, 1]} : vector<2x512xf32> to vector<2x128xf32>
    %204 = arith.negf %203 : vector<2x128xf32>
    %205 = math.exp %204 : vector<2x128xf32>
    %cst_55 = arith.constant 1.000000e+00 : f32
    %206 = vector.broadcast %cst_55 : f32 to vector<2x128xf32>
    %207 = arith.addf %206, %205 : vector<2x128xf32>
    %208 = arith.divf %206, %207 : vector<2x128xf32>
    %209 = vector.extract_strided_slice %202 {offsets = [0, 128], sizes = [2, 128], strides = [1, 1]} : vector<2x512xf32> to vector<2x128xf32>
    %210 = arith.negf %209 : vector<2x128xf32>
    %211 = math.exp %210 : vector<2x128xf32>
    %cst_56 = arith.constant 1.000000e+00 : f32
    %212 = vector.broadcast %cst_56 : f32 to vector<2x128xf32>
    %213 = arith.addf %212, %211 : vector<2x128xf32>
    %214 = arith.divf %212, %213 : vector<2x128xf32>
    %215 = vector.extract_strided_slice %202 {offsets = [0, 256], sizes = [2, 128], strides = [1, 1]} : vector<2x512xf32> to vector<2x128xf32>
    %216 = math.tanh %215 : vector<2x128xf32>
    %217 = vector.extract_strided_slice %202 {offsets = [0, 384], sizes = [2, 128], strides = [1, 1]} : vector<2x512xf32> to vector<2x128xf32>
    %218 = arith.negf %217 : vector<2x128xf32>
    %219 = math.exp %218 : vector<2x128xf32>
    %cst_57 = arith.constant 1.000000e+00 : f32
    %220 = vector.broadcast %cst_57 : f32 to vector<2x128xf32>
    %221 = arith.addf %220, %219 : vector<2x128xf32>
    %222 = arith.divf %220, %221 : vector<2x128xf32>
    %223 = arith.mulf %214, %163 : vector<2x128xf32>
    %224 = arith.mulf %208, %216 : vector<2x128xf32>
    %225 = arith.addf %223, %224 : vector<2x128xf32>
    %226 = math.tanh %225 : vector<2x128xf32>
    %227 = arith.mulf %222, %226 : vector<2x128xf32>
    %cst_58 = arith.constant dense<0.000000e+00> : vector<2x512xf32>
    %228 = tpu.matmul %227, %3, %cst_58 {dimension_numbers = #tpu.dot_dimension_numbers<[1], [0], [0], [1], [0, 0, 1, 1], [], []>} : vector<2x128xf32>, vector<128x512xf32>, vector<2x512xf32> -> vector<2x512xf32>
    %cst_59 = arith.constant dense<0.000000e+00> : vector<2x512xf32>
    %229 = tpu.matmul %195, %4, %cst_59 {dimension_numbers = #tpu.dot_dimension_numbers<[1], [0], [0], [1], [0, 0, 1, 1], [], []>} : vector<2x128xf32>, vector<128x512xf32>, vector<2x512xf32> -> vector<2x512xf32>
    %230 = arith.addf %228, %229 : vector<2x512xf32>
    %231 = vector.broadcast %5 : vector<1x512xf32> to vector<2x512xf32>
    %232 = arith.addf %230, %231 : vector<2x512xf32>
    %233 = vector.extract_strided_slice %232 {offsets = [0, 0], sizes = [2, 128], strides = [1, 1]} : vector<2x512xf32> to vector<2x128xf32>
    %234 = arith.negf %233 : vector<2x128xf32>
    %235 = math.exp %234 : vector<2x128xf32>
    %cst_60 = arith.constant 1.000000e+00 : f32
    %236 = vector.broadcast %cst_60 : f32 to vector<2x128xf32>
    %237 = arith.addf %236, %235 : vector<2x128xf32>
    %238 = arith.divf %236, %237 : vector<2x128xf32>
    %239 = vector.extract_strided_slice %232 {offsets = [0, 128], sizes = [2, 128], strides = [1, 1]} : vector<2x512xf32> to vector<2x128xf32>
    %240 = arith.negf %239 : vector<2x128xf32>
    %241 = math.exp %240 : vector<2x128xf32>
    %cst_61 = arith.constant 1.000000e+00 : f32
    %242 = vector.broadcast %cst_61 : f32 to vector<2x128xf32>
    %243 = arith.addf %242, %241 : vector<2x128xf32>
    %244 = arith.divf %242, %243 : vector<2x128xf32>
    %245 = vector.extract_strided_slice %232 {offsets = [0, 256], sizes = [2, 128], strides = [1, 1]} : vector<2x512xf32> to vector<2x128xf32>
    %246 = math.tanh %245 : vector<2x128xf32>
    %247 = vector.extract_strided_slice %232 {offsets = [0, 384], sizes = [2, 128], strides = [1, 1]} : vector<2x512xf32> to vector<2x128xf32>
    %248 = arith.negf %247 : vector<2x128xf32>
    %249 = math.exp %248 : vector<2x128xf32>
    %cst_62 = arith.constant 1.000000e+00 : f32
    %250 = vector.broadcast %cst_62 : f32 to vector<2x128xf32>
    %251 = arith.addf %250, %249 : vector<2x128xf32>
    %252 = arith.divf %250, %251 : vector<2x128xf32>
    %253 = arith.mulf %244, %193 : vector<2x128xf32>
    %254 = arith.mulf %238, %246 : vector<2x128xf32>
    %255 = arith.addf %253, %254 : vector<2x128xf32>
    %256 = math.tanh %255 : vector<2x128xf32>
    %257 = arith.mulf %252, %256 : vector<2x128xf32>
    %c4 = arith.constant 4 : index
    %c0_63 = arith.constant 0 : index
    %c0_64 = arith.constant 0 : index
    %258 = vector.load %arg0[%c4, %c0_63, %c0_64] : memref<8x2x64xf32, #tpu.memory_space<vmem>>, vector<1x2x64xf32>
    %259 = vector.shape_cast %258 : vector<1x2x64xf32> to vector<2x64xf32>
    %cst_65 = arith.constant dense<0.000000e+00> : vector<2x512xf32>
    %260 = tpu.matmul %259, %0, %cst_65 {dimension_numbers = #tpu.dot_dimension_numbers<[1], [0], [0], [1], [0, 0, 1, 1], [], []>} : vector<2x64xf32>, vector<64x512xf32>, vector<2x512xf32> -> vector<2x512xf32>
    %cst_66 = arith.constant dense<0.000000e+00> : vector<2x512xf32>
    %261 = tpu.matmul %227, %1, %cst_66 {dimension_numbers = #tpu.dot_dimension_numbers<[1], [0], [0], [1], [0, 0, 1, 1], [], []>} : vector<2x128xf32>, vector<128x512xf32>, vector<2x512xf32> -> vector<2x512xf32>
    %262 = arith.addf %260, %261 : vector<2x512xf32>
    %263 = vector.broadcast %2 : vector<1x512xf32> to vector<2x512xf32>
    %264 = arith.addf %262, %263 : vector<2x512xf32>
    %265 = vector.extract_strided_slice %264 {offsets = [0, 0], sizes = [2, 128], strides = [1, 1]} : vector<2x512xf32> to vector<2x128xf32>
    %266 = arith.negf %265 : vector<2x128xf32>
    %267 = math.exp %266 : vector<2x128xf32>
    %cst_67 = arith.constant 1.000000e+00 : f32
    %268 = vector.broadcast %cst_67 : f32 to vector<2x128xf32>
    %269 = arith.addf %268, %267 : vector<2x128xf32>
    %270 = arith.divf %268, %269 : vector<2x128xf32>
    %271 = vector.extract_strided_slice %264 {offsets = [0, 128], sizes = [2, 128], strides = [1, 1]} : vector<2x512xf32> to vector<2x128xf32>
    %272 = arith.negf %271 : vector<2x128xf32>
    %273 = math.exp %272 : vector<2x128xf32>
    %cst_68 = arith.constant 1.000000e+00 : f32
    %274 = vector.broadcast %cst_68 : f32 to vector<2x128xf32>
    %275 = arith.addf %274, %273 : vector<2x128xf32>
    %276 = arith.divf %274, %275 : vector<2x128xf32>
    %277 = vector.extract_strided_slice %264 {offsets = [0, 256], sizes = [2, 128], strides = [1, 1]} : vector<2x512xf32> to vector<2x128xf32>
    %278 = math.tanh %277 : vector<2x128xf32>
    %279 = vector.extract_strided_slice %264 {offsets = [0, 384], sizes = [2, 128], strides = [1, 1]} : vector<2x512xf32> to vector<2x128xf32>
    %280 = arith.negf %279 : vector<2x128xf32>
    %281 = math.exp %280 : vector<2x128xf32>
    %cst_69 = arith.constant 1.000000e+00 : f32
    %282 = vector.broadcast %cst_69 : f32 to vector<2x128xf32>
    %283 = arith.addf %282, %281 : vector<2x128xf32>
    %284 = arith.divf %282, %283 : vector<2x128xf32>
    %285 = arith.mulf %276, %225 : vector<2x128xf32>
    %286 = arith.mulf %270, %278 : vector<2x128xf32>
    %287 = arith.addf %285, %286 : vector<2x128xf32>
    %288 = math.tanh %287 : vector<2x128xf32>
    %289 = arith.mulf %284, %288 : vector<2x128xf32>
    %cst_70 = arith.constant dense<0.000000e+00> : vector<2x512xf32>
    %290 = tpu.matmul %289, %3, %cst_70 {dimension_numbers = #tpu.dot_dimension_numbers<[1], [0], [0], [1], [0, 0, 1, 1], [], []>} : vector<2x128xf32>, vector<128x512xf32>, vector<2x512xf32> -> vector<2x512xf32>
    %cst_71 = arith.constant dense<0.000000e+00> : vector<2x512xf32>
    %291 = tpu.matmul %257, %4, %cst_71 {dimension_numbers = #tpu.dot_dimension_numbers<[1], [0], [0], [1], [0, 0, 1, 1], [], []>} : vector<2x128xf32>, vector<128x512xf32>, vector<2x512xf32> -> vector<2x512xf32>
    %292 = arith.addf %290, %291 : vector<2x512xf32>
    %293 = vector.broadcast %5 : vector<1x512xf32> to vector<2x512xf32>
    %294 = arith.addf %292, %293 : vector<2x512xf32>
    %295 = vector.extract_strided_slice %294 {offsets = [0, 0], sizes = [2, 128], strides = [1, 1]} : vector<2x512xf32> to vector<2x128xf32>
    %296 = arith.negf %295 : vector<2x128xf32>
    %297 = math.exp %296 : vector<2x128xf32>
    %cst_72 = arith.constant 1.000000e+00 : f32
    %298 = vector.broadcast %cst_72 : f32 to vector<2x128xf32>
    %299 = arith.addf %298, %297 : vector<2x128xf32>
    %300 = arith.divf %298, %299 : vector<2x128xf32>
    %301 = vector.extract_strided_slice %294 {offsets = [0, 128], sizes = [2, 128], strides = [1, 1]} : vector<2x512xf32> to vector<2x128xf32>
    %302 = arith.negf %301 : vector<2x128xf32>
    %303 = math.exp %302 : vector<2x128xf32>
    %cst_73 = arith.constant 1.000000e+00 : f32
    %304 = vector.broadcast %cst_73 : f32 to vector<2x128xf32>
    %305 = arith.addf %304, %303 : vector<2x128xf32>
    %306 = arith.divf %304, %305 : vector<2x128xf32>
    %307 = vector.extract_strided_slice %294 {offsets = [0, 256], sizes = [2, 128], strides = [1, 1]} : vector<2x512xf32> to vector<2x128xf32>
    %308 = math.tanh %307 : vector<2x128xf32>
    %309 = vector.extract_strided_slice %294 {offsets = [0, 384], sizes = [2, 128], strides = [1, 1]} : vector<2x512xf32> to vector<2x128xf32>
    %310 = arith.negf %309 : vector<2x128xf32>
    %311 = math.exp %310 : vector<2x128xf32>
    %cst_74 = arith.constant 1.000000e+00 : f32
    %312 = vector.broadcast %cst_74 : f32 to vector<2x128xf32>
    %313 = arith.addf %312, %311 : vector<2x128xf32>
    %314 = arith.divf %312, %313 : vector<2x128xf32>
    %315 = arith.mulf %306, %255 : vector<2x128xf32>
    %316 = arith.mulf %300, %308 : vector<2x128xf32>
    %317 = arith.addf %315, %316 : vector<2x128xf32>
    %318 = math.tanh %317 : vector<2x128xf32>
    %319 = arith.mulf %314, %318 : vector<2x128xf32>
    %c5 = arith.constant 5 : index
    %c0_75 = arith.constant 0 : index
    %c0_76 = arith.constant 0 : index
    %320 = vector.load %arg0[%c5, %c0_75, %c0_76] : memref<8x2x64xf32, #tpu.memory_space<vmem>>, vector<1x2x64xf32>
    %321 = vector.shape_cast %320 : vector<1x2x64xf32> to vector<2x64xf32>
    %cst_77 = arith.constant dense<0.000000e+00> : vector<2x512xf32>
    %322 = tpu.matmul %321, %0, %cst_77 {dimension_numbers = #tpu.dot_dimension_numbers<[1], [0], [0], [1], [0, 0, 1, 1], [], []>} : vector<2x64xf32>, vector<64x512xf32>, vector<2x512xf32> -> vector<2x512xf32>
    %cst_78 = arith.constant dense<0.000000e+00> : vector<2x512xf32>
    %323 = tpu.matmul %289, %1, %cst_78 {dimension_numbers = #tpu.dot_dimension_numbers<[1], [0], [0], [1], [0, 0, 1, 1], [], []>} : vector<2x128xf32>, vector<128x512xf32>, vector<2x512xf32> -> vector<2x512xf32>
    %324 = arith.addf %322, %323 : vector<2x512xf32>
    %325 = vector.broadcast %2 : vector<1x512xf32> to vector<2x512xf32>
    %326 = arith.addf %324, %325 : vector<2x512xf32>
    %327 = vector.extract_strided_slice %326 {offsets = [0, 0], sizes = [2, 128], strides = [1, 1]} : vector<2x512xf32> to vector<2x128xf32>
    %328 = arith.negf %327 : vector<2x128xf32>
    %329 = math.exp %328 : vector<2x128xf32>
    %cst_79 = arith.constant 1.000000e+00 : f32
    %330 = vector.broadcast %cst_79 : f32 to vector<2x128xf32>
    %331 = arith.addf %330, %329 : vector<2x128xf32>
    %332 = arith.divf %330, %331 : vector<2x128xf32>
    %333 = vector.extract_strided_slice %326 {offsets = [0, 128], sizes = [2, 128], strides = [1, 1]} : vector<2x512xf32> to vector<2x128xf32>
    %334 = arith.negf %333 : vector<2x128xf32>
    %335 = math.exp %334 : vector<2x128xf32>
    %cst_80 = arith.constant 1.000000e+00 : f32
    %336 = vector.broadcast %cst_80 : f32 to vector<2x128xf32>
    %337 = arith.addf %336, %335 : vector<2x128xf32>
    %338 = arith.divf %336, %337 : vector<2x128xf32>
    %339 = vector.extract_strided_slice %326 {offsets = [0, 256], sizes = [2, 128], strides = [1, 1]} : vector<2x512xf32> to vector<2x128xf32>
    %340 = math.tanh %339 : vector<2x128xf32>
    %341 = vector.extract_strided_slice %326 {offsets = [0, 384], sizes = [2, 128], strides = [1, 1]} : vector<2x512xf32> to vector<2x128xf32>
    %342 = arith.negf %341 : vector<2x128xf32>
    %343 = math.exp %342 : vector<2x128xf32>
    %cst_81 = arith.constant 1.000000e+00 : f32
    %344 = vector.broadcast %cst_81 : f32 to vector<2x128xf32>
    %345 = arith.addf %344, %343 : vector<2x128xf32>
    %346 = arith.divf %344, %345 : vector<2x128xf32>
    %347 = arith.mulf %338, %287 : vector<2x128xf32>
    %348 = arith.mulf %332, %340 : vector<2x128xf32>
    %349 = arith.addf %347, %348 : vector<2x128xf32>
    %350 = math.tanh %349 : vector<2x128xf32>
    %351 = arith.mulf %346, %350 : vector<2x128xf32>
    %cst_82 = arith.constant dense<0.000000e+00> : vector<2x512xf32>
    %352 = tpu.matmul %351, %3, %cst_82 {dimension_numbers = #tpu.dot_dimension_numbers<[1], [0], [0], [1], [0, 0, 1, 1], [], []>} : vector<2x128xf32>, vector<128x512xf32>, vector<2x512xf32> -> vector<2x512xf32>
    %cst_83 = arith.constant dense<0.000000e+00> : vector<2x512xf32>
    %353 = tpu.matmul %319, %4, %cst_83 {dimension_numbers = #tpu.dot_dimension_numbers<[1], [0], [0], [1], [0, 0, 1, 1], [], []>} : vector<2x128xf32>, vector<128x512xf32>, vector<2x512xf32> -> vector<2x512xf32>
    %354 = arith.addf %352, %353 : vector<2x512xf32>
    %355 = vector.broadcast %5 : vector<1x512xf32> to vector<2x512xf32>
    %356 = arith.addf %354, %355 : vector<2x512xf32>
    %357 = vector.extract_strided_slice %356 {offsets = [0, 0], sizes = [2, 128], strides = [1, 1]} : vector<2x512xf32> to vector<2x128xf32>
    %358 = arith.negf %357 : vector<2x128xf32>
    %359 = math.exp %358 : vector<2x128xf32>
    %cst_84 = arith.constant 1.000000e+00 : f32
    %360 = vector.broadcast %cst_84 : f32 to vector<2x128xf32>
    %361 = arith.addf %360, %359 : vector<2x128xf32>
    %362 = arith.divf %360, %361 : vector<2x128xf32>
    %363 = vector.extract_strided_slice %356 {offsets = [0, 128], sizes = [2, 128], strides = [1, 1]} : vector<2x512xf32> to vector<2x128xf32>
    %364 = arith.negf %363 : vector<2x128xf32>
    %365 = math.exp %364 : vector<2x128xf32>
    %cst_85 = arith.constant 1.000000e+00 : f32
    %366 = vector.broadcast %cst_85 : f32 to vector<2x128xf32>
    %367 = arith.addf %366, %365 : vector<2x128xf32>
    %368 = arith.divf %366, %367 : vector<2x128xf32>
    %369 = vector.extract_strided_slice %356 {offsets = [0, 256], sizes = [2, 128], strides = [1, 1]} : vector<2x512xf32> to vector<2x128xf32>
    %370 = math.tanh %369 : vector<2x128xf32>
    %371 = vector.extract_strided_slice %356 {offsets = [0, 384], sizes = [2, 128], strides = [1, 1]} : vector<2x512xf32> to vector<2x128xf32>
    %372 = arith.negf %371 : vector<2x128xf32>
    %373 = math.exp %372 : vector<2x128xf32>
    %cst_86 = arith.constant 1.000000e+00 : f32
    %374 = vector.broadcast %cst_86 : f32 to vector<2x128xf32>
    %375 = arith.addf %374, %373 : vector<2x128xf32>
    %376 = arith.divf %374, %375 : vector<2x128xf32>
    %377 = arith.mulf %368, %317 : vector<2x128xf32>
    %378 = arith.mulf %362, %370 : vector<2x128xf32>
    %379 = arith.addf %377, %378 : vector<2x128xf32>
    %380 = math.tanh %379 : vector<2x128xf32>
    %381 = arith.mulf %376, %380 : vector<2x128xf32>
    %c6 = arith.constant 6 : index
    %c0_87 = arith.constant 0 : index
    %c0_88 = arith.constant 0 : index
    %382 = vector.load %arg0[%c6, %c0_87, %c0_88] : memref<8x2x64xf32, #tpu.memory_space<vmem>>, vector<1x2x64xf32>
    %383 = vector.shape_cast %382 : vector<1x2x64xf32> to vector<2x64xf32>
    %cst_89 = arith.constant dense<0.000000e+00> : vector<2x512xf32>
    %384 = tpu.matmul %383, %0, %cst_89 {dimension_numbers = #tpu.dot_dimension_numbers<[1], [0], [0], [1], [0, 0, 1, 1], [], []>} : vector<2x64xf32>, vector<64x512xf32>, vector<2x512xf32> -> vector<2x512xf32>
    %cst_90 = arith.constant dense<0.000000e+00> : vector<2x512xf32>
    %385 = tpu.matmul %351, %1, %cst_90 {dimension_numbers = #tpu.dot_dimension_numbers<[1], [0], [0], [1], [0, 0, 1, 1], [], []>} : vector<2x128xf32>, vector<128x512xf32>, vector<2x512xf32> -> vector<2x512xf32>
    %386 = arith.addf %384, %385 : vector<2x512xf32>
    %387 = vector.broadcast %2 : vector<1x512xf32> to vector<2x512xf32>
    %388 = arith.addf %386, %387 : vector<2x512xf32>
    %389 = vector.extract_strided_slice %388 {offsets = [0, 0], sizes = [2, 128], strides = [1, 1]} : vector<2x512xf32> to vector<2x128xf32>
    %390 = arith.negf %389 : vector<2x128xf32>
    %391 = math.exp %390 : vector<2x128xf32>
    %cst_91 = arith.constant 1.000000e+00 : f32
    %392 = vector.broadcast %cst_91 : f32 to vector<2x128xf32>
    %393 = arith.addf %392, %391 : vector<2x128xf32>
    %394 = arith.divf %392, %393 : vector<2x128xf32>
    %395 = vector.extract_strided_slice %388 {offsets = [0, 128], sizes = [2, 128], strides = [1, 1]} : vector<2x512xf32> to vector<2x128xf32>
    %396 = arith.negf %395 : vector<2x128xf32>
    %397 = math.exp %396 : vector<2x128xf32>
    %cst_92 = arith.constant 1.000000e+00 : f32
    %398 = vector.broadcast %cst_92 : f32 to vector<2x128xf32>
    %399 = arith.addf %398, %397 : vector<2x128xf32>
    %400 = arith.divf %398, %399 : vector<2x128xf32>
    %401 = vector.extract_strided_slice %388 {offsets = [0, 256], sizes = [2, 128], strides = [1, 1]} : vector<2x512xf32> to vector<2x128xf32>
    %402 = math.tanh %401 : vector<2x128xf32>
    %403 = vector.extract_strided_slice %388 {offsets = [0, 384], sizes = [2, 128], strides = [1, 1]} : vector<2x512xf32> to vector<2x128xf32>
    %404 = arith.negf %403 : vector<2x128xf32>
    %405 = math.exp %404 : vector<2x128xf32>
    %cst_93 = arith.constant 1.000000e+00 : f32
    %406 = vector.broadcast %cst_93 : f32 to vector<2x128xf32>
    %407 = arith.addf %406, %405 : vector<2x128xf32>
    %408 = arith.divf %406, %407 : vector<2x128xf32>
    %409 = arith.mulf %400, %349 : vector<2x128xf32>
    %410 = arith.mulf %394, %402 : vector<2x128xf32>
    %411 = arith.addf %409, %410 : vector<2x128xf32>
    %412 = math.tanh %411 : vector<2x128xf32>
    %413 = arith.mulf %408, %412 : vector<2x128xf32>
    %cst_94 = arith.constant dense<0.000000e+00> : vector<2x512xf32>
    %414 = tpu.matmul %413, %3, %cst_94 {dimension_numbers = #tpu.dot_dimension_numbers<[1], [0], [0], [1], [0, 0, 1, 1], [], []>} : vector<2x128xf32>, vector<128x512xf32>, vector<2x512xf32> -> vector<2x512xf32>
    %cst_95 = arith.constant dense<0.000000e+00> : vector<2x512xf32>
    %415 = tpu.matmul %381, %4, %cst_95 {dimension_numbers = #tpu.dot_dimension_numbers<[1], [0], [0], [1], [0, 0, 1, 1], [], []>} : vector<2x128xf32>, vector<128x512xf32>, vector<2x512xf32> -> vector<2x512xf32>
    %416 = arith.addf %414, %415 : vector<2x512xf32>
    %417 = vector.broadcast %5 : vector<1x512xf32> to vector<2x512xf32>
    %418 = arith.addf %416, %417 : vector<2x512xf32>
    %419 = vector.extract_strided_slice %418 {offsets = [0, 0], sizes = [2, 128], strides = [1, 1]} : vector<2x512xf32> to vector<2x128xf32>
    %420 = arith.negf %419 : vector<2x128xf32>
    %421 = math.exp %420 : vector<2x128xf32>
    %cst_96 = arith.constant 1.000000e+00 : f32
    %422 = vector.broadcast %cst_96 : f32 to vector<2x128xf32>
    %423 = arith.addf %422, %421 : vector<2x128xf32>
    %424 = arith.divf %422, %423 : vector<2x128xf32>
    %425 = vector.extract_strided_slice %418 {offsets = [0, 128], sizes = [2, 128], strides = [1, 1]} : vector<2x512xf32> to vector<2x128xf32>
    %426 = arith.negf %425 : vector<2x128xf32>
    %427 = math.exp %426 : vector<2x128xf32>
    %cst_97 = arith.constant 1.000000e+00 : f32
    %428 = vector.broadcast %cst_97 : f32 to vector<2x128xf32>
    %429 = arith.addf %428, %427 : vector<2x128xf32>
    %430 = arith.divf %428, %429 : vector<2x128xf32>
    %431 = vector.extract_strided_slice %418 {offsets = [0, 256], sizes = [2, 128], strides = [1, 1]} : vector<2x512xf32> to vector<2x128xf32>
    %432 = math.tanh %431 : vector<2x128xf32>
    %433 = vector.extract_strided_slice %418 {offsets = [0, 384], sizes = [2, 128], strides = [1, 1]} : vector<2x512xf32> to vector<2x128xf32>
    %434 = arith.negf %433 : vector<2x128xf32>
    %435 = math.exp %434 : vector<2x128xf32>
    %cst_98 = arith.constant 1.000000e+00 : f32
    %436 = vector.broadcast %cst_98 : f32 to vector<2x128xf32>
    %437 = arith.addf %436, %435 : vector<2x128xf32>
    %438 = arith.divf %436, %437 : vector<2x128xf32>
    %439 = arith.mulf %430, %379 : vector<2x128xf32>
    %440 = arith.mulf %424, %432 : vector<2x128xf32>
    %441 = arith.addf %439, %440 : vector<2x128xf32>
    %442 = math.tanh %441 : vector<2x128xf32>
    %443 = arith.mulf %438, %442 : vector<2x128xf32>
    %c7 = arith.constant 7 : index
    %c0_99 = arith.constant 0 : index
    %c0_100 = arith.constant 0 : index
    %444 = vector.load %arg0[%c7, %c0_99, %c0_100] : memref<8x2x64xf32, #tpu.memory_space<vmem>>, vector<1x2x64xf32>
    %445 = vector.shape_cast %444 : vector<1x2x64xf32> to vector<2x64xf32>
    %cst_101 = arith.constant dense<0.000000e+00> : vector<2x512xf32>
    %446 = tpu.matmul %445, %0, %cst_101 {dimension_numbers = #tpu.dot_dimension_numbers<[1], [0], [0], [1], [0, 0, 1, 1], [], []>} : vector<2x64xf32>, vector<64x512xf32>, vector<2x512xf32> -> vector<2x512xf32>
    %cst_102 = arith.constant dense<0.000000e+00> : vector<2x512xf32>
    %447 = tpu.matmul %413, %1, %cst_102 {dimension_numbers = #tpu.dot_dimension_numbers<[1], [0], [0], [1], [0, 0, 1, 1], [], []>} : vector<2x128xf32>, vector<128x512xf32>, vector<2x512xf32> -> vector<2x512xf32>
    %448 = arith.addf %446, %447 : vector<2x512xf32>
    %449 = vector.broadcast %2 : vector<1x512xf32> to vector<2x512xf32>
    %450 = arith.addf %448, %449 : vector<2x512xf32>
    %451 = vector.extract_strided_slice %450 {offsets = [0, 0], sizes = [2, 128], strides = [1, 1]} : vector<2x512xf32> to vector<2x128xf32>
    %452 = arith.negf %451 : vector<2x128xf32>
    %453 = math.exp %452 : vector<2x128xf32>
    %cst_103 = arith.constant 1.000000e+00 : f32
    %454 = vector.broadcast %cst_103 : f32 to vector<2x128xf32>
    %455 = arith.addf %454, %453 : vector<2x128xf32>
    %456 = arith.divf %454, %455 : vector<2x128xf32>
    %457 = vector.extract_strided_slice %450 {offsets = [0, 128], sizes = [2, 128], strides = [1, 1]} : vector<2x512xf32> to vector<2x128xf32>
    %458 = arith.negf %457 : vector<2x128xf32>
    %459 = math.exp %458 : vector<2x128xf32>
    %cst_104 = arith.constant 1.000000e+00 : f32
    %460 = vector.broadcast %cst_104 : f32 to vector<2x128xf32>
    %461 = arith.addf %460, %459 : vector<2x128xf32>
    %462 = arith.divf %460, %461 : vector<2x128xf32>
    %463 = vector.extract_strided_slice %450 {offsets = [0, 256], sizes = [2, 128], strides = [1, 1]} : vector<2x512xf32> to vector<2x128xf32>
    %464 = math.tanh %463 : vector<2x128xf32>
    %465 = vector.extract_strided_slice %450 {offsets = [0, 384], sizes = [2, 128], strides = [1, 1]} : vector<2x512xf32> to vector<2x128xf32>
    %466 = arith.negf %465 : vector<2x128xf32>
    %467 = math.exp %466 : vector<2x128xf32>
    %cst_105 = arith.constant 1.000000e+00 : f32
    %468 = vector.broadcast %cst_105 : f32 to vector<2x128xf32>
    %469 = arith.addf %468, %467 : vector<2x128xf32>
    %470 = arith.divf %468, %469 : vector<2x128xf32>
    %471 = arith.mulf %462, %411 : vector<2x128xf32>
    %472 = arith.mulf %456, %464 : vector<2x128xf32>
    %473 = arith.addf %471, %472 : vector<2x128xf32>
    %474 = math.tanh %473 : vector<2x128xf32>
    %475 = arith.mulf %470, %474 : vector<2x128xf32>
    %cst_106 = arith.constant dense<0.000000e+00> : vector<2x512xf32>
    %476 = tpu.matmul %475, %3, %cst_106 {dimension_numbers = #tpu.dot_dimension_numbers<[1], [0], [0], [1], [0, 0, 1, 1], [], []>} : vector<2x128xf32>, vector<128x512xf32>, vector<2x512xf32> -> vector<2x512xf32>
    %cst_107 = arith.constant dense<0.000000e+00> : vector<2x512xf32>
    %477 = tpu.matmul %443, %4, %cst_107 {dimension_numbers = #tpu.dot_dimension_numbers<[1], [0], [0], [1], [0, 0, 1, 1], [], []>} : vector<2x128xf32>, vector<128x512xf32>, vector<2x512xf32> -> vector<2x512xf32>
    %478 = arith.addf %476, %477 : vector<2x512xf32>
    %479 = vector.broadcast %5 : vector<1x512xf32> to vector<2x512xf32>
    %480 = arith.addf %478, %479 : vector<2x512xf32>
    %481 = vector.extract_strided_slice %480 {offsets = [0, 0], sizes = [2, 128], strides = [1, 1]} : vector<2x512xf32> to vector<2x128xf32>
    %482 = arith.negf %481 : vector<2x128xf32>
    %483 = math.exp %482 : vector<2x128xf32>
    %cst_108 = arith.constant 1.000000e+00 : f32
    %484 = vector.broadcast %cst_108 : f32 to vector<2x128xf32>
    %485 = arith.addf %484, %483 : vector<2x128xf32>
    %486 = arith.divf %484, %485 : vector<2x128xf32>
    %487 = vector.extract_strided_slice %480 {offsets = [0, 128], sizes = [2, 128], strides = [1, 1]} : vector<2x512xf32> to vector<2x128xf32>
    %488 = arith.negf %487 : vector<2x128xf32>
    %489 = math.exp %488 : vector<2x128xf32>
    %cst_109 = arith.constant 1.000000e+00 : f32
    %490 = vector.broadcast %cst_109 : f32 to vector<2x128xf32>
    %491 = arith.addf %490, %489 : vector<2x128xf32>
    %492 = arith.divf %490, %491 : vector<2x128xf32>
    %493 = vector.extract_strided_slice %480 {offsets = [0, 256], sizes = [2, 128], strides = [1, 1]} : vector<2x512xf32> to vector<2x128xf32>
    %494 = math.tanh %493 : vector<2x128xf32>
    %495 = vector.extract_strided_slice %480 {offsets = [0, 384], sizes = [2, 128], strides = [1, 1]} : vector<2x512xf32> to vector<2x128xf32>
    %496 = arith.negf %495 : vector<2x128xf32>
    %497 = math.exp %496 : vector<2x128xf32>
    %cst_110 = arith.constant 1.000000e+00 : f32
    %498 = vector.broadcast %cst_110 : f32 to vector<2x128xf32>
    %499 = arith.addf %498, %497 : vector<2x128xf32>
    %500 = arith.divf %498, %499 : vector<2x128xf32>
    %501 = arith.mulf %492, %441 : vector<2x128xf32>
    %502 = arith.mulf %486, %494 : vector<2x128xf32>
    %503 = arith.addf %501, %502 : vector<2x128xf32>
    %504 = math.tanh %503 : vector<2x128xf32>
    %505 = arith.mulf %500, %504 : vector<2x128xf32>
    %c0_111 = arith.constant 0 : index
    %c0_112 = arith.constant 0 : index
    %506 = vector.load %arg7[%c0_111, %c0_112] : memref<128x10xf32, #tpu.memory_space<vmem>>, vector<128x10xf32>
    %cst_113 = arith.constant dense<0.000000e+00> : vector<2x10xf32>
    %507 = tpu.matmul %505, %506, %cst_113 {dimension_numbers = #tpu.dot_dimension_numbers<[1], [0], [0], [1], [0, 0, 1, 1], [], []>} : vector<2x128xf32>, vector<128x10xf32>, vector<2x10xf32> -> vector<2x10xf32>
    %c0_114 = arith.constant 0 : index
    %c0_115 = arith.constant 0 : index
    %508 = vector.load %arg8[%c0_114, %c0_115] : memref<1x10xf32, #tpu.memory_space<vmem>>, vector<1x10xf32>
    %509 = vector.broadcast %508 : vector<1x10xf32> to vector<2x10xf32>
    %510 = arith.addf %507, %509 : vector<2x10xf32>
    %c0_116 = arith.constant 0 : index
    %c0_117 = arith.constant 0 : index
    %511 = vector.load %arg9[%c0_116, %c0_117] : memref<2x10xf32, #tpu.memory_space<vmem>>, vector<2x10xf32>
    tpu.vector_store %arg9[%c0_116, %c0_117], %510 {strides = array<i32>} : memref<2x10xf32, #tpu.memory_space<vmem>>, vector<2x10xf32>,
    return
  }
}

</mosaic_0001>

<llo_original>
// kernel: lstm_forward.1
$region0: #{lstm_forward.1}
  #allocation0 [shape = 'u32[]', space=smem, size = 0x4, offset = 0x4, fixed_abs, tag = 'smem constant byte address 0x4 - core index']
  #allocation1 [shape = 'u32[72,128]{1,0:T(1,128)}', space=vmem, size = 0x9000, scoped, tag = 'internal scratch']
  %s0 = inlined_call_operand.vmem [shape: f32[8,2,64], index: 0, kind: input, shape index: {}]
  %s1 = inlined_call_operand.hbm [shape: f32[64,512], index: 1, kind: input, shape index: {}]
  %s2 = inlined_call_operand.hbm [shape: f32[128,512], index: 2, kind: input, shape index: {}]
  %s3 = inlined_call_operand.vmem [shape: f32[1,512], index: 3, kind: input, shape index: {}]
  %s4 = inlined_call_operand.hbm [shape: f32[128,512], index: 4, kind: input, shape index: {}]
  %s5 = inlined_call_operand.hbm [shape: f32[128,512], index: 5, kind: input, shape index: {}]
  %s6 = inlined_call_operand.vmem [shape: f32[1,512], index: 6, kind: input, shape index: {}]
  %s7 = inlined_call_operand.vmem [shape: f32[128,10], index: 7, kind: input, shape index: {}]
  %s8 = inlined_call_operand.vmem [shape: f32[1,10], index: 8, kind: input, shape index: {}]
  %s9 = inlined_call_operand.hbm [shape: f32[2,10], index: 9, kind: output, shape index: {}]
  %s10 = sld [smem:[#allocation0]]
  $region62: #{lstm_forward.1} parent=0
    _
  %s12 = ssub.s32 1, %s10
  %s13 = scalar_select 0, %s12, %s10
  $region1: #{lstm_forward.1} parent=0
    #allocation2 [shape = 'u8[131072]{0}', space=vmem, size = 0x20000, scoped, tag = 'input window, operand 1, single buffered']
    #allocation3 [shape = 's32[1]{0}', space=sflag, size = 0x4, scoped, tag = 'scoped memory for lstm_forward.1']
    #allocation4 [shape = 's32[1]{0}', space=sflag, size = 0x4, scoped, tag = 'scoped memory for lstm_forward.1']
    #allocation5 [shape = 'u8[262144]{0}', space=vmem, size = 0x40000, scoped, tag = 'input window, operand 2, single buffered']
    #allocation6 [shape = 's32[1]{0}', space=sflag, size = 0x4, scoped, tag = 'scoped memory for lstm_forward.1']
    #allocation7 [shape = 'u8[262144]{0}', space=vmem, size = 0x40000, scoped, tag = 'input window, operand 4, single buffered']
    #allocation8 [shape = 'u8[262144]{0}', space=vmem, size = 0x40000, scoped, tag = 'input window, operand 5, single buffered']
    #allocation9 [shape = 's32[1]{0}', space=sflag, size = 0x4, scoped, tag = 'scoped memory for lstm_forward.1']
    #allocation10 [shape = 'u8[1024]{0}', space=vmem, size = 0x400, scoped, tag = 'output window, operand 0, single buffered']
    %14 = vsyncpa [#allocation3], 0
    %15 = vsyncpa [#allocation6], 0
    %16 = vsyncpa [#allocation9], 0
    %17 = vsyncpa [#allocation4], 0
    // Predicated region
    $region2: #{lstm_forward.1} parent=1 // pred_check
      _
    $region3: #{lstm_forward.1} parent=1 // pred_check_branch
      %19 = sbr.rel (0) target = $region5
    $region4: #{lstm_forward.1} parent=1 // pred_region
      _
    $region5: #{lstm_forward.1} parent=1 // pred_fallthru
      _
    // Predicated region
    $region6: #{lstm_forward.1} parent=1 // pred_check
      _
    $region7: #{lstm_forward.1} parent=1 // pred_check_branch
      %21 = sbr.rel (0) target = $region9
    $region8: #{lstm_forward.1} parent=1 // pred_region
      %23 = vsyncadd [#allocation3], 0
      %s24 = sshll.u32 %s1, 4
      %s25 = int_to_ptr.hbm [resolvable:$true] %s24
      %s26 = sshll.u32 [#allocation2], 4
      %s27 = int_to_ptr.vmem [resolvable:$true] %s26
      %32 = dma.hbm_to_vmem [thread:$0]  %s25, 4096, %s27, [#allocation3], 512, 512, 32
    $region9: #{lstm_forward.1} parent=1 // pred_fallthru
      _
    // Predicated region
    $region10: #{lstm_forward.1} parent=1 // pred_check
      _
    $region11: #{lstm_forward.1} parent=1 // pred_check_branch
      %34 = sbr.rel (0) target = $region13
    $region12: #{lstm_forward.1} parent=1 // pred_region
      %36 = vsyncadd [#allocation6], 0
      %s37 = sshll.u32 %s2, 4
      %s38 = int_to_ptr.hbm [resolvable:$true] %s37
      %s39 = sshll.u32 [#allocation5], 4
      %s40 = int_to_ptr.vmem [resolvable:$true] %s39
      %45 = dma.hbm_to_vmem [thread:$0]  %s38, 8192, %s40, [#allocation6], 512, 512, 32
    $region13: #{lstm_forward.1} parent=1 // pred_fallthru
      _
    // Predicated region
    $region14: #{lstm_forward.1} parent=1 // pred_check
      _
    $region15: #{lstm_forward.1} parent=1 // pred_check_branch
      %47 = sbr.rel (0) target = $region17
    $region16: #{lstm_forward.1} parent=1 // pred_region
      _
    $region17: #{lstm_forward.1} parent=1 // pred_fallthru
      _
    // Predicated region
    $region18: #{lstm_forward.1} parent=1 // pred_check
      _
    $region19: #{lstm_forward.1} parent=1 // pred_check_branch
      %49 = sbr.rel (0) target = $region21
    $region20: #{lstm_forward.1} parent=1 // pred_region
      %51 = vsyncadd [#allocation6], 0
      %s52 = sshll.u32 %s4, 4
      %s53 = int_to_ptr.hbm [resolvable:$true] %s52
      %s54 = sshll.u32 [#allocation7], 4
      %s55 = int_to_ptr.vmem [resolvable:$true] %s54
      %60 = dma.hbm_to_vmem [thread:$0]  %s53, 8192, %s55, [#allocation6], 512, 512, 32
    $region21: #{lstm_forward.1} parent=1 // pred_fallthru
      _
    // Predicated region
    $region22: #{lstm_forward.1} parent=1 // pred_check
      _
    $region23: #{lstm_forward.1} parent=1 // pred_check_branch
      %62 = sbr.rel (0) target = $region25
    $region24: #{lstm_forward.1} parent=1 // pred_region
      %64 = vsyncadd [#allocation9], 0
      %s65 = sshll.u32 %s5, 4
      %s66 = int_to_ptr.hbm [resolvable:$true] %s65
      %s67 = sshll.u32 [#allocation8], 4
      %s68 = int_to_ptr.vmem [resolvable:$true] %s67
      %73 = dma.hbm_to_vmem [thread:$0]  %s66, 8192, %s68, [#allocation9], 512, 512, 32
    $region25: #{lstm_forward.1} parent=1 // pred_fallthru
      _
    // Predicated region
    $region26: #{lstm_forward.1} parent=1 // pred_check
      _
    $region27: #{lstm_forward.1} parent=1 // pred_check_branch
      %75 = sbr.rel (0) target = $region29
    $region28: #{lstm_forward.1} parent=1 // pred_region
      _
    $region29: #{lstm_forward.1} parent=1 // pred_fallthru
      _
    // Predicated region
    $region30: #{lstm_forward.1} parent=1 // pred_check
      _
    $region31: #{lstm_forward.1} parent=1 // pred_check_branch
      %77 = sbr.rel (0) target = $region33
    $region32: #{lstm_forward.1} parent=1 // pred_region
      _
    $region33: #{lstm_forward.1} parent=1 // pred_fallthru
      _
    // Predicated region
    $region34: #{lstm_forward.1} parent=1 // pred_check
      _
    $region35: #{lstm_forward.1} parent=1 // pred_check_branch
      %79 = sbr.rel (0) target = $region37
    $region36: #{lstm_forward.1} parent=1 // pred_region
      _
    $region37: #{lstm_forward.1} parent=1 // pred_fallthru
      _
    // Predicated region
    $region38: #{lstm_forward.1} parent=1 // pred_check
      _
    $region39: #{lstm_forward.1} parent=1 // pred_check_branch
      %81 = sbr.rel (0) target = $region41
    $region40: #{lstm_forward.1} parent=1 // pred_region
      %83 = dma.done [#allocation3], 4096
    $region41: #{lstm_forward.1} parent=1 // pred_fallthru
      _
    // Predicated region
    $region42: #{lstm_forward.1} parent=1 // pred_check
      _
    $region43: #{lstm_forward.1} parent=1 // pred_check_branch
      %85 = sbr.rel (0) target = $region45
    $region44: #{lstm_forward.1} parent=1 // pred_region
      %87 = dma.done [#allocation6], 8192
    $region45: #{lstm_forward.1} parent=1 // pred_fallthru
      _
    // Predicated region
    $region46: #{lstm_forward.1} parent=1 // pred_check
      _
    $region47: #{lstm_forward.1} parent=1 // pred_check_branch
      %89 = sbr.rel (0) target = $region49
    $region48: #{lstm_forward.1} parent=1 // pred_region
      %91 = dma.done [#allocation6], 8192
    $region49: #{lstm_forward.1} parent=1 // pred_fallthru
      _
    // Predicated region
    $region50: #{lstm_forward.1} parent=1 // pred_check
      _
    $region51: #{lstm_forward.1} parent=1 // pred_check_branch
      %93 = sbr.rel (0) target = $region53
    $region52: #{lstm_forward.1} parent=1 // pred_region
      %95 = dma.done [#allocation9], 8192
    $region53: #{lstm_forward.1} parent=1 // pred_fallthru
      _
    %v96 = vld [vmem:[#allocation2] sm:$0xff]
    %v97 = vld [vmem:[#allocation2 + $0x8] sm:$0xff]
    %v98 = vld [vmem:[#allocation2 + $0x10] sm:$0xff]
    %v99 = vld [vmem:[#allocation2 + $0x18] sm:$0xff]
    %v100 = vld [vmem:[#allocation2 + $0x20] sm:$0xff]
    %v101 = vld [vmem:[#allocation2 + $0x28] sm:$0xff]
    %v102 = vld [vmem:[#allocation2 + $0x30] sm:$0xff]
    %v103 = vld [vmem:[#allocation2 + $0x38] sm:$0xff]
    %v104 = vld [vmem:[#allocation2 + $0x40] sm:$0xff]
    %v105 = vld [vmem:[#allocation2 + $0x48] sm:$0xff]
    %v106 = vld [vmem:[#allocation2 + $0x50] sm:$0xff]
    %v107 = vld [vmem:[#allocation2 + $0x58] sm:$0xff]
    %v108 = vld [vmem:[#allocation2 + $0x60] sm:$0xff]
    %v109 = vld [vmem:[#allocation2 + $0x68] sm:$0xff]
    %v110 = vld [vmem:[#allocation2 + $0x70] sm:$0xff]
    %v111 = vld [vmem:[#allocation2 + $0x78] sm:$0xff]
    %v112 = vld [vmem:[#allocation2 + $0x80] sm:$0xff]
    %v113 = vld [vmem:[#allocation2 + $0x88] sm:$0xff]
    %v114 = vld [vmem:[#allocation2 + $0x90] sm:$0xff]
    %v115 = vld [vmem:[#allocation2 + $0x98] sm:$0xff]
    %v116 = vld [vmem:[#allocation2 + $0xa0] sm:$0xff]
    %v117 = vld [vmem:[#allocation2 + $0xa8] sm:$0xff]
    %v118 = vld [vmem:[#allocation2 + $0xb0] sm:$0xff]
    %v119 = vld [vmem:[#allocation2 + $0xb8] sm:$0xff]
    %v120 = vld [vmem:[#allocation2 + $0xc0] sm:$0xff]
    %v121 = vld [vmem:[#allocation2 + $0xc8] sm:$0xff]
    %v122 = vld [vmem:[#allocation2 + $0xd0] sm:$0xff]
    %v123 = vld [vmem:[#allocation2 + $0xd8] sm:$0xff]
    %v124 = vld [vmem:[#allocation2 + $0xe0] sm:$0xff]
    %v125 = vld [vmem:[#allocation2 + $0xe8] sm:$0xff]
    %v126 = vld [vmem:[#allocation2 + $0xf0] sm:$0xff]
    %v127 = vld [vmem:[#allocation2 + $0xf8] sm:$0xff]
    %v128 = vld [vmem:[#allocation5] sm:$0xff]
    %v129 = vld [vmem:[#allocation5 + $0x8] sm:$0xff]
    %v130 = vld [vmem:[#allocation5 + $0x10] sm:$0xff]
    %v131 = vld [vmem:[#allocation5 + $0x18] sm:$0xff]
    %v132 = vld [vmem:[#allocation5 + $0x20] sm:$0xff]
    %v133 = vld [vmem:[#allocation5 + $0x28] sm:$0xff]
    %v134 = vld [vmem:[#allocation5 + $0x30] sm:$0xff]
    %v135 = vld [vmem:[#allocation5 + $0x38] sm:$0xff]
    %v136 = vld [vmem:[#allocation5 + $0x40] sm:$0xff]
    %v137 = vld [vmem:[#allocation5 + $0x48] sm:$0xff]
    %v138 = vld [vmem:[#allocation5 + $0x50] sm:$0xff]
    %v139 = vld [vmem:[#allocation5 + $0x58] sm:$0xff]
    %v140 = vld [vmem:[#allocation5 + $0x60] sm:$0xff]
    %v141 = vld [vmem:[#allocation5 + $0x68] sm:$0xff]
    %v142 = vld [vmem:[#allocation5 + $0x70] sm:$0xff]
    %v143 = vld [vmem:[#allocation5 + $0x78] sm:$0xff]
    %v144 = vld [vmem:[#allocation5 + $0x80] sm:$0xff]
    %v145 = vld [vmem:[#allocation5 + $0x88] sm:$0xff]
    %v146 = vld [vmem:[#allocation5 + $0x90] sm:$0xff]
    %v147 = vld [vmem:[#allocation5 + $0x98] sm:$0xff]
    %v148 = vld [vmem:[#allocation5 + $0xa0] sm:$0xff]
    %v149 = vld [vmem:[#allocation5 + $0xa8] sm:$0xff]
    %v150 = vld [vmem:[#allocation5 + $0xb0] sm:$0xff]
    %v151 = vld [vmem:[#allocation5 + $0xb8] sm:$0xff]
    %v152 = vld [vmem:[#allocation5 + $0xc0] sm:$0xff]
    %v153 = vld [vmem:[#allocation5 + $0xc8] sm:$0xff]
    %v154 = vld [vmem:[#allocation5 + $0xd0] sm:$0xff]
    %v155 = vld [vmem:[#allocation5 + $0xd8] sm:$0xff]
    %v156 = vld [vmem:[#allocation5 + $0xe0] sm:$0xff]
    %v157 = vld [vmem:[#allocation5 + $0xe8] sm:$0xff]
    %v158 = vld [vmem:[#allocation5 + $0xf0] sm:$0xff]
    %v159 = vld [vmem:[#allocation5 + $0xf8] sm:$0xff]
    %v160 = vld [vmem:[#allocation5 + $0x100] sm:$0xff]
    %v161 = vld [vmem:[#allocation5 + $0x108] sm:$0xff]
    %v162 = vld [vmem:[#allocation5 + $0x110] sm:$0xff]
    %v163 = vld [vmem:[#allocation5 + $0x118] sm:$0xff]
    %v164 = vld [vmem:[#allocation5 + $0x120] sm:$0xff]
    %v165 = vld [vmem:[#allocation5 + $0x128] sm:$0xff]
    %v166 = vld [vmem:[#allocation5 + $0x130] sm:$0xff]
    %v167 = vld [vmem:[#allocation5 + $0x138] sm:$0xff]
    %v168 = vld [vmem:[#allocation5 + $0x140] sm:$0xff]
    %v169 = vld [vmem:[#allocation5 + $0x148] sm:$0xff]
    %v170 = vld [vmem:[#allocation5 + $0x150] sm:$0xff]
    %v171 = vld [vmem:[#allocation5 + $0x158] sm:$0xff]
    %v172 = vld [vmem:[#allocation5 + $0x160] sm:$0xff]
    %v173 = vld [vmem:[#allocation5 + $0x168] sm:$0xff]
    %v174 = vld [vmem:[#allocation5 + $0x170] sm:$0xff]
    %v175 = vld [vmem:[#allocation5 + $0x178] sm:$0xff]
    %v176 = vld [vmem:[#allocation5 + $0x180] sm:$0xff]
    %v177 = vld [vmem:[#allocation5 + $0x188] sm:$0xff]
    %v178 = vld [vmem:[#allocation5 + $0x190] sm:$0xff]
    %v179 = vld [vmem:[#allocation5 + $0x198] sm:$0xff]
    %v180 = vld [vmem:[#allocation5 + $0x1a0] sm:$0xff]
    %v181 = vld [vmem:[#allocation5 + $0x1a8] sm:$0xff]
    %v182 = vld [vmem:[#allocation5 + $0x1b0] sm:$0xff]
    %v183 = vld [vmem:[#allocation5 + $0x1b8] sm:$0xff]
    %v184 = vld [vmem:[#allocation5 + $0x1c0] sm:$0xff]
    %v185 = vld [vmem:[#allocation5 + $0x1c8] sm:$0xff]
    %v186 = vld [vmem:[#allocation5 + $0x1d0] sm:$0xff]
    %v187 = vld [vmem:[#allocation5 + $0x1d8] sm:$0xff]
    %v188 = vld [vmem:[#allocation5 + $0x1e0] sm:$0xff]
    %v189 = vld [vmem:[#allocation5 + $0x1e8] sm:$0xff]
    %v190 = vld [vmem:[#allocation5 + $0x1f0] sm:$0xff]
    %v191 = vld [vmem:[#allocation5 + $0x1f8] sm:$0xff]
    %v192 = vld [vmem:[%s3] sm:$0xf]
    %v193 = vld [vmem:[#allocation7] sm:$0xff]
    %v194 = vld [vmem:[#allocation7 + $0x8] sm:$0xff]
    %v195 = vld [vmem:[#allocation7 + $0x10] sm:$0xff]
    %v196 = vld [vmem:[#allocation7 + $0x18] sm:$0xff]
    %v197 = vld [vmem:[#allocation7 + $0x20] sm:$0xff]
    %v198 = vld [vmem:[#allocation7 + $0x28] sm:$0xff]
    %v199 = vld [vmem:[#allocation7 + $0x30] sm:$0xff]
    %v200 = vld [vmem:[#allocation7 + $0x38] sm:$0xff]
    %v201 = vld [vmem:[#allocation7 + $0x40] sm:$0xff]
    %v202 = vld [vmem:[#allocation7 + $0x48] sm:$0xff]
    %v203 = vld [vmem:[#allocation7 + $0x50] sm:$0xff]
    %v204 = vld [vmem:[#allocation7 + $0x58] sm:$0xff]
    %v205 = vld [vmem:[#allocation7 + $0x60] sm:$0xff]
    %v206 = vld [vmem:[#allocation7 + $0x68] sm:$0xff]
    %v207 = vld [vmem:[#allocation7 + $0x70] sm:$0xff]
    %v208 = vld [vmem:[#allocation7 + $0x78] sm:$0xff]
    %v209 = vld [vmem:[#allocation7 + $0x80] sm:$0xff]
    %v210 = vld [vmem:[#allocation7 + $0x88] sm:$0xff]
    %v211 = vld [vmem:[#allocation7 + $0x90] sm:$0xff]
    %v212 = vld [vmem:[#allocation7 + $0x98] sm:$0xff]
    %v213 = vld [vmem:[#allocation7 + $0xa0] sm:$0xff]
    %v214 = vld [vmem:[#allocation7 + $0xa8] sm:$0xff]
    %v215 = vld [vmem:[#allocation7 + $0xb0] sm:$0xff]
    %v216 = vld [vmem:[#allocation7 + $0xb8] sm:$0xff]
    %v217 = vld [vmem:[#allocation7 + $0xc0] sm:$0xff]
    %v218 = vld [vmem:[#allocation7 + $0xc8] sm:$0xff]
    %v219 = vld [vmem:[#allocation7 + $0xd0] sm:$0xff]
    %v220 = vld [vmem:[#allocation7 + $0xd8] sm:$0xff]
    %v221 = vld [vmem:[#allocation7 + $0xe0] sm:$0xff]
    %v222 = vld [vmem:[#allocation7 + $0xe8] sm:$0xff]
    %v223 = vld [vmem:[#allocation7 + $0xf0] sm:$0xff]
    %v224 = vld [vmem:[#allocation7 + $0xf8] sm:$0xff]
    %v225 = vld [vmem:[#allocation7 + $0x100] sm:$0xff]
    %v226 = vld [vmem:[#allocation7 + $0x108] sm:$0xff]
    %v227 = vld [vmem:[#allocation7 + $0x110] sm:$0xff]
    %v228 = vld [vmem:[#allocation7 + $0x118] sm:$0xff]
    %v229 = vld [vmem:[#allocation7 + $0x120] sm:$0xff]
    %v230 = vld [vmem:[#allocation7 + $0x128] sm:$0xff]
    %v231 = vld [vmem:[#allocation7 + $0x130] sm:$0xff]
    %v232 = vld [vmem:[#allocation7 + $0x138] sm:$0xff]
    %v233 = vld [vmem:[#allocation7 + $0x140] sm:$0xff]
    %v234 = vld [vmem:[#allocation7 + $0x148] sm:$0xff]
    %v235 = vld [vmem:[#allocation7 + $0x150] sm:$0xff]
    %v236 = vld [vmem:[#allocation7 + $0x158] sm:$0xff]
    %v237 = vld [vmem:[#allocation7 + $0x160] sm:$0xff]
    %v238 = vld [vmem:[#allocation7 + $0x168] sm:$0xff]
    %v239 = vld [vmem:[#allocation7 + $0x170] sm:$0xff]
    %v240 = vld [vmem:[#allocation7 + $0x178] sm:$0xff]
    %v241 = vld [vmem:[#allocation7 + $0x180] sm:$0xff]
    %v242 = vld [vmem:[#allocation7 + $0x188] sm:$0xff]
    %v243 = vld [vmem:[#allocation7 + $0x190] sm:$0xff]
    %v244 = vld [vmem:[#allocation7 + $0x198] sm:$0xff]
    %v245 = vld [vmem:[#allocation7 + $0x1a0] sm:$0xff]
    %v246 = vld [vmem:[#allocation7 + $0x1a8] sm:$0xff]
    %v247 = vld [vmem:[#allocation7 + $0x1b0] sm:$0xff]
    %v248 = vld [vmem:[#allocation7 + $0x1b8] sm:$0xff]
    %v249 = vld [vmem:[#allocation7 + $0x1c0] sm:$0xff]
    %v250 = vld [vmem:[#allocation7 + $0x1c8] sm:$0xff]
    %v251 = vld [vmem:[#allocation7 + $0x1d0] sm:$0xff]
    %v252 = vld [vmem:[#allocation7 + $0x1d8] sm:$0xff]
    %v253 = vld [vmem:[#allocation7 + $0x1e0] sm:$0xff]
    %v254 = vld [vmem:[#allocation7 + $0x1e8] sm:$0xff]
    %v255 = vld [vmem:[#allocation7 + $0x1f0] sm:$0xff]
    %v256 = vld [vmem:[#allocation7 + $0x1f8] sm:$0xff]
    %v257 = vld [vmem:[#allocation8] sm:$0xff]
    %v258 = vld [vmem:[#allocation8 + $0x8] sm:$0xff]
    %v259 = vld [vmem:[#allocation8 + $0x10] sm:$0xff]
    %v260 = vld [vmem:[#allocation8 + $0x18] sm:$0xff]
    %v261 = vld [vmem:[#allocation8 + $0x20] sm:$0xff]
    %v262 = vld [vmem:[#allocation8 + $0x28] sm:$0xff]
    %v263 = vld [vmem:[#allocation8 + $0x30] sm:$0xff]
    %v264 = vld [vmem:[#allocation8 + $0x38] sm:$0xff]
    %v265 = vld [vmem:[#allocation8 + $0x40] sm:$0xff]
    %v266 = vld [vmem:[#allocation8 + $0x48] sm:$0xff]
    %v267 = vld [vmem:[#allocation8 + $0x50] sm:$0xff]
    %v268 = vld [vmem:[#allocation8 + $0x58] sm:$0xff]
    %v269 = vld [vmem:[#allocation8 + $0x60] sm:$0xff]
    %v270 = vld [vmem:[#allocation8 + $0x68] sm:$0xff]
    %v271 = vld [vmem:[#allocation8 + $0x70] sm:$0xff]
    %v272 = vld [vmem:[#allocation8 + $0x78] sm:$0xff]
    %v273 = vld [vmem:[#allocation8 + $0x80] sm:$0xff]
    %v274 = vld [vmem:[#allocation8 + $0x88] sm:$0xff]
    %v275 = vld [vmem:[#allocation8 + $0x90] sm:$0xff]
    %v276 = vld [vmem:[#allocation8 + $0x98] sm:$0xff]
    %v277 = vld [vmem:[#allocation8 + $0xa0] sm:$0xff]
    %v278 = vld [vmem:[#allocation8 + $0xa8] sm:$0xff]
    %v279 = vld [vmem:[#allocation8 + $0xb0] sm:$0xff]
    %v280 = vld [vmem:[#allocation8 + $0xb8] sm:$0xff]
    %v281 = vld [vmem:[#allocation8 + $0xc0] sm:$0xff]
    %v282 = vld [vmem:[#allocation8 + $0xc8] sm:$0xff]
    %v283 = vld [vmem:[#allocation8 + $0xd0] sm:$0xff]
    %v284 = vld [vmem:[#allocation8 + $0xd8] sm:$0xff]
    %v285 = vld [vmem:[#allocation8 + $0xe0] sm:$0xff]
    %v286 = vld [vmem:[#allocation8 + $0xe8] sm:$0xff]
    %v287 = vld [vmem:[#allocation8 + $0xf0] sm:$0xff]
    %v288 = vld [vmem:[#allocation8 + $0xf8] sm:$0xff]
    %v289 = vld [vmem:[#allocation8 + $0x100] sm:$0xff]
    %v290 = vld [vmem:[#allocation8 + $0x108] sm:$0xff]
    %v291 = vld [vmem:[#allocation8 + $0x110] sm:$0xff]
    %v292 = vld [vmem:[#allocation8 + $0x118] sm:$0xff]
    %v293 = vld [vmem:[#allocation8 + $0x120] sm:$0xff]
    %v294 = vld [vmem:[#allocation8 + $0x128] sm:$0xff]
    %v295 = vld [vmem:[#allocation8 + $0x130] sm:$0xff]
    %v296 = vld [vmem:[#allocation8 + $0x138] sm:$0xff]
    %v297 = vld [vmem:[#allocation8 + $0x140] sm:$0xff]
    %v298 = vld [vmem:[#allocation8 + $0x148] sm:$0xff]
    %v299 = vld [vmem:[#allocation8 + $0x150] sm:$0xff]
    %v300 = vld [vmem:[#allocation8 + $0x158] sm:$0xff]
    %v301 = vld [vmem:[#allocation8 + $0x160] sm:$0xff]
    %v302 = vld [vmem:[#allocation8 + $0x168] sm:$0xff]
    %v303 = vld [vmem:[#allocation8 + $0x170] sm:$0xff]
    %v304 = vld [vmem:[#allocation8 + $0x178] sm:$0xff]
    %v305 = vld [vmem:[#allocation8 + $0x180] sm:$0xff]
    %v306 = vld [vmem:[#allocation8 + $0x188] sm:$0xff]
    %v307 = vld [vmem:[#allocation8 + $0x190] sm:$0xff]
    %v308 = vld [vmem:[#allocation8 + $0x198] sm:$0xff]
    %v309 = vld [vmem:[#allocation8 + $0x1a0] sm:$0xff]
    %v310 = vld [vmem:[#allocation8 + $0x1a8] sm:$0xff]
    %v311 = vld [vmem:[#allocation8 + $0x1b0] sm:$0xff]
    %v312 = vld [vmem:[#allocation8 + $0x1b8] sm:$0xff]
    %v313 = vld [vmem:[#allocation8 + $0x1c0] sm:$0xff]
    %v314 = vld [vmem:[#allocation8 + $0x1c8] sm:$0xff]
    %v315 = vld [vmem:[#allocation8 + $0x1d0] sm:$0xff]
    %v316 = vld [vmem:[#allocation8 + $0x1d8] sm:$0xff]
    %v317 = vld [vmem:[#allocation8 + $0x1e0] sm:$0xff]
    %v318 = vld [vmem:[#allocation8 + $0x1e8] sm:$0xff]
    %v319 = vld [vmem:[#allocation8 + $0x1f0] sm:$0xff]
    %v320 = vld [vmem:[#allocation8 + $0x1f8] sm:$0xff]
    %v321 = vld [vmem:[%s6] sm:$0xf]
    %v322 = vld [vmem:[%s0] sm:$0x3]
    %323 = vmatpush.msra.mxu0 %v188
    %324 = vmatpush.msra.mxu0 %v184
    %325 = vmatpush.msra.mxu0 %v180
    %326 = vmatpush.msra.mxu0 %v176
    %327 = vmatpush.msra.mxu0 %v172
    %328 = vmatpush.msra.mxu0 %v168
    %329 = vmatpush.msra.mxu0 %v164
    %330 = vmatpush.msra.mxu0 %v160
    %331 = vmatpush.msra.mxu0 %v156
    %332 = vmatpush.msra.mxu0 %v152
    %333 = vmatpush.msra.mxu0 %v148
    %334 = vmatpush.msra.mxu0 %v144
    %335 = vmatpush.msra.mxu0 %v140
    %336 = vmatpush.msra.mxu0 %v136
    %337 = vmatpush.msra.mxu0 %v132
    %338 = vmatpush.msra.mxu0 %v128
    %339 = vmatmul.f32.gmra.mxu0 0.0
    %v340 = vpop.f32.mrf.mxu0
    %v341 = vadd.f32 0.0, %v340
    %342 = vdwg.mxu0
    %343 = vmatpush.msra.mxu0 %v189
    %344 = vmatpush.msra.mxu0 %v185
    %345 = vmatpush.msra.mxu0 %v181
    %346 = vmatpush.msra.mxu0 %v177
    %347 = vmatpush.msra.mxu0 %v173
    %348 = vmatpush.msra.mxu0 %v169
    %349 = vmatpush.msra.mxu0 %v165
    %350 = vmatpush.msra.mxu0 %v161
    %351 = vmatpush.msra.mxu0 %v157
    %352 = vmatpush.msra.mxu0 %v153
    %353 = vmatpush.msra.mxu0 %v149
    %354 = vmatpush.msra.mxu0 %v145
    %355 = vmatpush.msra.mxu0 %v141
    %356 = vmatpush.msra.mxu0 %v137
    %357 = vmatpush.msra.mxu0 %v133
    %358 = vmatpush.msra.mxu0 %v129
    %359 = vmatmul.f32.gmra.mxu0 0.0
    %v360 = vpop.f32.mrf.mxu0
    %v361 = vadd.f32 0.0, %v360
    %362 = vdwg.mxu0
    %363 = vmatpush.msra.mxu0 %v190
    %364 = vmatpush.msra.mxu0 %v186
    %365 = vmatpush.msra.mxu0 %v182
    %366 = vmatpush.msra.mxu0 %v178
    %367 = vmatpush.msra.mxu0 %v174
    %368 = vmatpush.msra.mxu0 %v170
    %369 = vmatpush.msra.mxu0 %v166
    %370 = vmatpush.msra.mxu0 %v162
    %371 = vmatpush.msra.mxu0 %v158
    %372 = vmatpush.msra.mxu0 %v154
    %373 = vmatpush.msra.mxu0 %v150
    %374 = vmatpush.msra.mxu0 %v146
    %375 = vmatpush.msra.mxu0 %v142
    %376 = vmatpush.msra.mxu0 %v138
    %377 = vmatpush.msra.mxu0 %v134
    %378 = vmatpush.msra.mxu0 %v130
    %379 = vmatmul.f32.gmra.mxu0 0.0
    %v380 = vpop.f32.mrf.mxu0
    %v381 = vadd.f32 0.0, %v380
    %382 = vdwg.mxu0
    %383 = vmatpush.msra.mxu0 %v191
    %384 = vmatpush.msra.mxu0 %v187
    %385 = vmatpush.msra.mxu0 %v183
    %386 = vmatpush.msra.mxu0 %v179
    %387 = vmatpush.msra.mxu0 %v175
    %388 = vmatpush.msra.mxu0 %v171
    %389 = vmatpush.msra.mxu0 %v167
    %390 = vmatpush.msra.mxu0 %v163
    %391 = vmatpush.msra.mxu0 %v159
    %392 = vmatpush.msra.mxu0 %v155
    %393 = vmatpush.msra.mxu0 %v151
    %394 = vmatpush.msra.mxu0 %v147
    %395 = vmatpush.msra.mxu0 %v143
    %396 = vmatpush.msra.mxu0 %v139
    %397 = vmatpush.msra.mxu0 %v135
    %398 = vmatpush.msra.mxu0 %v131
    %399 = vmatmul.f32.gmra.mxu0 0.0
    %v400 = vpop.f32.mrf.mxu0
    %v401 = vadd.f32 0.0, %v400
    %402 = vdwg.mxu0
    %vm403 = vcmask 523264
    %v405 = vsel %vm403, %v322, 0
    %407 = vmatpush.msra.mxu0 0.0
    %408 = vmatpush.msra.mxu0 0.0
    %409 = vmatpush.msra.mxu0 0.0
    %410 = vmatpush.msra.mxu0 0.0
    %411 = vmatpush.msra.mxu0 0.0
    %412 = vmatpush.msra.mxu0 0.0
    %413 = vmatpush.msra.mxu0 0.0
    %414 = vmatpush.msra.mxu0 0.0
    %415 = vmatpush.msra.mxu0 %v124
    %416 = vmatpush.msra.mxu0 %v120
    %417 = vmatpush.msra.mxu0 %v116
    %418 = vmatpush.msra.mxu0 %v112
    %419 = vmatpush.msra.mxu0 %v108
    %420 = vmatpush.msra.mxu0 %v104
    %421 = vmatpush.msra.mxu0 %v100
    %422 = vmatpush.msra.mxu0 %v96
    %423 = vmatmul.f32.gmra.mxu0 %v405
    %v424 = vpop.f32.mrf.mxu0
    %v425 = vadd.f32 %v341, %v424
    %426 = vdwg.mxu0
    %427 = vmatpush.msra.mxu0 0.0
    %428 = vmatpush.msra.mxu0 0.0
    %429 = vmatpush.msra.mxu0 0.0
    %430 = vmatpush.msra.mxu0 0.0
    %431 = vmatpush.msra.mxu0 0.0
    %432 = vmatpush.msra.mxu0 0.0
    %433 = vmatpush.msra.mxu0 0.0
    %434 = vmatpush.msra.mxu0 0.0
    %435 = vmatpush.msra.mxu0 %v125
    %436 = vmatpush.msra.mxu0 %v121
    %437 = vmatpush.msra.mxu0 %v117
    %438 = vmatpush.msra.mxu0 %v113
    %439 = vmatpush.msra.mxu0 %v109
    %440 = vmatpush.msra.mxu0 %v105
    %441 = vmatpush.msra.mxu0 %v101
    %442 = vmatpush.msra.mxu0 %v97
    %443 = vmatmul.f32.gmra.mxu0 %v405
    %v444 = vpop.f32.mrf.mxu0
    %v445 = vadd.f32 %v361, %v444
    %446 = vdwg.mxu0
    %447 = vmatpush.msra.mxu0 0.0
    %448 = vmatpush.msra.mxu0 0.0
    %449 = vmatpush.msra.mxu0 0.0
    %450 = vmatpush.msra.mxu0 0.0
    %451 = vmatpush.msra.mxu0 0.0
    %452 = vmatpush.msra.mxu0 0.0
    %453 = vmatpush.msra.mxu0 0.0
    %454 = vmatpush.msra.mxu0 0.0
    %455 = vmatpush.msra.mxu0 %v126
    %456 = vmatpush.msra.mxu0 %v122
    %457 = vmatpush.msra.mxu0 %v118
    %458 = vmatpush.msra.mxu0 %v114
    %459 = vmatpush.msra.mxu0 %v110
    %460 = vmatpush.msra.mxu0 %v106
    %461 = vmatpush.msra.mxu0 %v102
    %462 = vmatpush.msra.mxu0 %v98
    %463 = vmatmul.f32.gmra.mxu0 %v405
    %v464 = vpop.f32.mrf.mxu0
    %v465 = vadd.f32 %v381, %v464
    %466 = vdwg.mxu0
    %467 = vmatpush.msra.mxu0 0.0
    %468 = vmatpush.msra.mxu0 0.0
    %469 = vmatpush.msra.mxu0 0.0
    %470 = vmatpush.msra.mxu0 0.0
    %471 = vmatpush.msra.mxu0 0.0
    %472 = vmatpush.msra.mxu0 0.0
    %473 = vmatpush.msra.mxu0 0.0
    %474 = vmatpush.msra.mxu0 0.0
    %475 = vmatpush.msra.mxu0 %v127
    %476 = vmatpush.msra.mxu0 %v123
    %477 = vmatpush.msra.mxu0 %v119
    %478 = vmatpush.msra.mxu0 %v115
    %479 = vmatpush.msra.mxu0 %v111
    %480 = vmatpush.msra.mxu0 %v107
    %481 = vmatpush.msra.mxu0 %v103
    %482 = vmatpush.msra.mxu0 %v99
    %483 = vmatmul.f32.gmra.mxu0 %v405
    %v484 = vpop.f32.mrf.mxu0
    %v485 = vadd.f32 %v401, %v484
    %486 = vdwg.mxu0
    %v488 = vperm.slane %v192, 0
    %v489 = vperm.slane %v192, 1
    %v490 = vperm.slane %v192, 2
    %v491 = vperm.slane %v192, 3
    %v496 = vadd.f32 %v425, %v488
    %v497 = vadd.f32 %v445, %v489
    %v498 = vadd.f32 %v465, %v490
    %v499 = vadd.f32 %v485, %v491
    %v500 = vxor.u32 %v496, 2147483648
    %v501 = vmul.f32 %v500, 1.442695
    %v502 = vpow.pop %v501
    %v503 = vadd.f32 %v502, 1.0
    %v504 = vrcp.pop %v503
    %v505 = vmul.f32 %v503, %v504
    %v506 = vsub.f32 1.0, %v505
    %v507 = vmul.f32 %v504, %v506
    %v508 = vadd.f32 %v504, %v507
    %vm509 = vweird.f32 %v503
    %vm510 = vweird.f32 %v504
    %vm511 = vmor %vm509, %vm510
    %v512 = vsel %vm511, %v504, %v508
    %v513 = vand.u32 2147483647, %v503
    %vm514 = vcmp.eq.f32.partialorder %v513, 8.507059e+37
    %v515 = vand.u32 %v503, 2147483648
    %v516 = vor.u32 1.1754944e-38, %v515
    %v517 = vsel %vm514, %v516, %v512
    %v518 = vmul.f32 1.0, %v517
    %v519 = vxor.u32 %v497, 2147483648
    %v520 = vmul.f32 %v519, 1.442695
    %v521 = vpow.pop %v520
    %v522 = vadd.f32 %v521, 1.0
    %v523 = vrcp.pop %v522
    %v524 = vmul.f32 %v522, %v523
    %v525 = vsub.f32 1.0, %v524
    %v526 = vmul.f32 %v523, %v525
    %v527 = vadd.f32 %v523, %v526
    %vm528 = vweird.f32 %v522
    %vm529 = vweird.f32 %v523
    %vm530 = vmor %vm528, %vm529
    %v531 = vsel %vm530, %v523, %v527
    %v532 = vand.u32 2147483647, %v522
    %vm533 = vcmp.eq.f32.partialorder %v532, 8.507059e+37
    %v534 = vand.u32 %v522, 2147483648
    %v535 = vor.u32 1.1754944e-38, %v534
    %v536 = vsel %vm533, %v535, %v531
    %v537 = vmul.f32 1.0, %v536
    %v538 = vtanh.pop %v498
    %v539 = vxor.u32 %v499, 2147483648
    %v540 = vmul.f32 %v539, 1.442695
    %v541 = vpow.pop %v540
    %v542 = vadd.f32 %v541, 1.0
    %v543 = vrcp.pop %v542
    %v544 = vmul.f32 %v542, %v543
    %v545 = vsub.f32 1.0, %v544
    %v546 = vmul.f32 %v543, %v545
    %v547 = vadd.f32 %v543, %v546
    %vm548 = vweird.f32 %v542
    %vm549 = vweird.f32 %v543
    %vm550 = vmor %vm548, %vm549
    %v551 = vsel %vm550, %v543, %v547
    %v552 = vand.u32 2147483647, %v542
    %vm553 = vcmp.eq.f32.partialorder %v552, 8.507059e+37
    %v554 = vand.u32 %v542, 2147483648
    %v555 = vor.u32 1.1754944e-38, %v554
    %v556 = vsel %vm553, %v555, %v551
    %v557 = vmul.f32 1.0, %v556
    %v558 = vmul.f32 %v537, 0.0
    %v559 = vmul.f32 %v518, %v538
    %v560 = vadd.f32 %v558, %v559
    %v561 = vtanh.pop %v560
    %v562 = vmul.f32 %v557, %v561
    %563 = vmatpush.msra.mxu0 %v317
    %564 = vmatpush.msra.mxu0 %v313
    %565 = vmatpush.msra.mxu0 %v309
    %566 = vmatpush.msra.mxu0 %v305
    %567 = vmatpush.msra.mxu0 %v301
    %568 = vmatpush.msra.mxu0 %v297
    %569 = vmatpush.msra.mxu0 %v293
    %570 = vmatpush.msra.mxu0 %v289
    %571 = vmatpush.msra.mxu0 %v285
    %572 = vmatpush.msra.mxu0 %v281
    %573 = vmatpush.msra.mxu0 %v277
    %574 = vmatpush.msra.mxu0 %v273
    %575 = vmatpush.msra.mxu0 %v269
    %576 = vmatpush.msra.mxu0 %v265
    %577 = vmatpush.msra.mxu0 %v261
    %578 = vmatpush.msra.mxu0 %v257
    %579 = vmatmul.f32.gmra.mxu0 0.0
    %v580 = vpop.f32.mrf.mxu0
    %v581 = vadd.f32 0.0, %v580
    %582 = vdwg.mxu0
    %583 = vmatpush.msra.mxu0 %v318
    %584 = vmatpush.msra.mxu0 %v314
    %585 = vmatpush.msra.mxu0 %v310
    %586 = vmatpush.msra.mxu0 %v306
    %587 = vmatpush.msra.mxu0 %v302
    %588 = vmatpush.msra.mxu0 %v298
    %589 = vmatpush.msra.mxu0 %v294
    %590 = vmatpush.msra.mxu0 %v290
    %591 = vmatpush.msra.mxu0 %v286
    %592 = vmatpush.msra.mxu0 %v282
    %593 = vmatpush.msra.mxu0 %v278
    %594 = vmatpush.msra.mxu0 %v274
    %595 = vmatpush.msra.mxu0 %v270
    %596 = vmatpush.msra.mxu0 %v266
    %597 = vmatpush.msra.mxu0 %v262
    %598 = vmatpush.msra.mxu0 %v258
    %599 = vmatmul.f32.gmra.mxu0 0.0
    %v600 = vpop.f32.mrf.mxu0
    %v601 = vadd.f32 0.0, %v600
    %602 = vdwg.mxu0
    %603 = vmatpush.msra.mxu0 %v319
    %604 = vmatpush.msra.mxu0 %v315
    %605 = vmatpush.msra.mxu0 %v311
    %606 = vmatpush.msra.mxu0 %v307
    %607 = vmatpush.msra.mxu0 %v303
    %608 = vmatpush.msra.mxu0 %v299
    %609 = vmatpush.msra.mxu0 %v295
    %610 = vmatpush.msra.mxu0 %v291
    %611 = vmatpush.msra.mxu0 %v287
    %612 = vmatpush.msra.mxu0 %v283
    %613 = vmatpush.msra.mxu0 %v279
    %614 = vmatpush.msra.mxu0 %v275
    %615 = vmatpush.msra.mxu0 %v271
    %616 = vmatpush.msra.mxu0 %v267
    %617 = vmatpush.msra.mxu0 %v263
    %618 = vmatpush.msra.mxu0 %v259
    %619 = vmatmul.f32.gmra.mxu0 0.0
    %v620 = vpop.f32.mrf.mxu0
    %v621 = vadd.f32 0.0, %v620
    %622 = vdwg.mxu0
    %623 = vmatpush.msra.mxu0 %v320
    %624 = vmatpush.msra.mxu0 %v316
    %625 = vmatpush.msra.mxu0 %v312
    %626 = vmatpush.msra.mxu0 %v308
    %627 = vmatpush.msra.mxu0 %v304
    %628 = vmatpush.msra.mxu0 %v300
    %629 = vmatpush.msra.mxu0 %v296
    %630 = vmatpush.msra.mxu0 %v292
    %631 = vmatpush.msra.mxu0 %v288
    %632 = vmatpush.msra.mxu0 %v284
    %633 = vmatpush.msra.mxu0 %v280
    %634 = vmatpush.msra.mxu0 %v276
    %635 = vmatpush.msra.mxu0 %v272
    %636 = vmatpush.msra.mxu0 %v268
    %637 = vmatpush.msra.mxu0 %v264
    %638 = vmatpush.msra.mxu0 %v260
    %639 = vmatmul.f32.gmra.mxu0 0.0
    %v640 = vpop.f32.mrf.mxu0
    %v641 = vadd.f32 0.0, %v640
    %642 = vdwg.mxu0
    %643 = vmatpush.msra.mxu0 %v253
    %644 = vmatpush.msra.mxu0 %v249
    %645 = vmatpush.msra.mxu0 %v245
    %646 = vmatpush.msra.mxu0 %v241
    %647 = vmatpush.msra.mxu0 %v237
    %648 = vmatpush.msra.mxu0 %v233
    %649 = vmatpush.msra.mxu0 %v229
    %650 = vmatpush.msra.mxu0 %v225
    %651 = vmatpush.msra.mxu0 %v221
    %652 = vmatpush.msra.mxu0 %v217
    %653 = vmatpush.msra.mxu0 %v213
    %654 = vmatpush.msra.mxu0 %v209
    %655 = vmatpush.msra.mxu0 %v205
    %656 = vmatpush.msra.mxu0 %v201
    %657 = vmatpush.msra.mxu0 %v197
    %658 = vmatpush.msra.mxu0 %v193
    %659 = vmatmul.f32.gmra.mxu0 %v562
    %v660 = vpop.f32.mrf.mxu0
    %v661 = vadd.f32 %v581, %v660
    %662 = vdwg.mxu0
    %663 = vmatpush.msra.mxu0 %v254
    %664 = vmatpush.msra.mxu0 %v250
    %665 = vmatpush.msra.mxu0 %v246
    %666 = vmatpush.msra.mxu0 %v242
    %667 = vmatpush.msra.mxu0 %v238
    %668 = vmatpush.msra.mxu0 %v234
    %669 = vmatpush.msra.mxu0 %v230
    %670 = vmatpush.msra.mxu0 %v226
    %671 = vmatpush.msra.mxu0 %v222
    %672 = vmatpush.msra.mxu0 %v218
    %673 = vmatpush.msra.mxu0 %v214
    %674 = vmatpush.msra.mxu0 %v210
    %675 = vmatpush.msra.mxu0 %v206
    %676 = vmatpush.msra.mxu0 %v202
    %677 = vmatpush.msra.mxu0 %v198
    %678 = vmatpush.msra.mxu0 %v194
    %679 = vmatmul.f32.gmra.mxu0 %v562
    %v680 = vpop.f32.mrf.mxu0
    %v681 = vadd.f32 %v601, %v680
    %682 = vdwg.mxu0
    %683 = vmatpush.msra.mxu0 %v255
    %684 = vmatpush.msra.mxu0 %v251
    %685 = vmatpush.msra.mxu0 %v247
    %686 = vmatpush.msra.mxu0 %v243
    %687 = vmatpush.msra.mxu0 %v239
    %688 = vmatpush.msra.mxu0 %v235
    %689 = vmatpush.msra.mxu0 %v231
    %690 = vmatpush.msra.mxu0 %v227
    %691 = vmatpush.msra.mxu0 %v223
    %692 = vmatpush.msra.mxu0 %v219
    %693 = vmatpush.msra.mxu0 %v215
    %694 = vmatpush.msra.mxu0 %v211
    %695 = vmatpush.msra.mxu0 %v207
    %696 = vmatpush.msra.mxu0 %v203
    %697 = vmatpush.msra.mxu0 %v199
    %698 = vmatpush.msra.mxu0 %v195
    %699 = vmatmul.f32.gmra.mxu0 %v562
    %v700 = vpop.f32.mrf.mxu0
    %v701 = vadd.f32 %v621, %v700
    %702 = vdwg.mxu0
    %703 = vmatpush.msra.mxu0 %v256
    %704 = vmatpush.msra.mxu0 %v252
    %705 = vmatpush.msra.mxu0 %v248
    %706 = vmatpush.msra.mxu0 %v244
    %707 = vmatpush.msra.mxu0 %v240
    %708 = vmatpush.msra.mxu0 %v236
    %709 = vmatpush.msra.mxu0 %v232
    %710 = vmatpush.msra.mxu0 %v228
    %711 = vmatpush.msra.mxu0 %v224
    %712 = vmatpush.msra.mxu0 %v220
    %713 = vmatpush.msra.mxu0 %v216
    %714 = vmatpush.msra.mxu0 %v212
    %715 = vmatpush.msra.mxu0 %v208
    %716 = vmatpush.msra.mxu0 %v204
    %717 = vmatpush.msra.mxu0 %v200
    %718 = vmatpush.msra.mxu0 %v196
    %719 = vmatmul.f32.gmra.mxu0 %v562
    %v720 = vpop.f32.mrf.mxu0
    %v721 = vadd.f32 %v641, %v720
    %722 = vdwg.mxu0
    %v724 = vperm.slane %v321, 0
    %v725 = vperm.slane %v321, 1
    %v726 = vperm.slane %v321, 2
    %v727 = vperm.slane %v321, 3
    %v732 = vadd.f32 %v661, %v724
    %v733 = vadd.f32 %v681, %v725
    %v734 = vadd.f32 %v701, %v726
    %v735 = vadd.f32 %v721, %v727
    %v736 = vxor.u32 %v732, 2147483648
    %v737 = vmul.f32 %v736, 1.442695
    %v738 = vpow.pop %v737
    %v739 = vadd.f32 %v738, 1.0
    %v740 = vrcp.pop %v739
    %v741 = vmul.f32 %v739, %v740
    %v742 = vsub.f32 1.0, %v741
    %v743 = vmul.f32 %v740, %v742
    %v744 = vadd.f32 %v740, %v743
    %vm745 = vweird.f32 %v739
    %vm746 = vweird.f32 %v740
    %vm747 = vmor %vm745, %vm746
    %v748 = vsel %vm747, %v740, %v744
    %v749 = vand.u32 2147483647, %v739
    %vm750 = vcmp.eq.f32.partialorder %v749, 8.507059e+37
    %v751 = vand.u32 %v739, 2147483648
    %v752 = vor.u32 1.1754944e-38, %v751
    %v753 = vsel %vm750, %v752, %v748
    %v754 = vmul.f32 1.0, %v753
    %v755 = vxor.u32 %v733, 2147483648
    %v756 = vmul.f32 %v755, 1.442695
    %v757 = vpow.pop %v756
    %v758 = vadd.f32 %v757, 1.0
    %v759 = vrcp.pop %v758
    %v760 = vmul.f32 %v758, %v759
    %v761 = vsub.f32 1.0, %v760
    %v762 = vmul.f32 %v759, %v761
    %v763 = vadd.f32 %v759, %v762
    %vm764 = vweird.f32 %v758
    %vm765 = vweird.f32 %v759
    %vm766 = vmor %vm764, %vm765
    %v767 = vsel %vm766, %v759, %v763
    %v768 = vand.u32 2147483647, %v758
    %vm769 = vcmp.eq.f32.partialorder %v768, 8.507059e+37
    %v770 = vand.u32 %v758, 2147483648
    %v771 = vor.u32 1.1754944e-38, %v770
    %v772 = vsel %vm769, %v771, %v767
    %v773 = vmul.f32 1.0, %v772
    %v774 = vtanh.pop %v734
    %v775 = vxor.u32 %v735, 2147483648
    %v776 = vmul.f32 %v775, 1.442695
    %v777 = vpow.pop %v776
    %v778 = vadd.f32 %v777, 1.0
    %v779 = vrcp.pop %v778
    %v780 = vmul.f32 %v778, %v779
    %v781 = vsub.f32 1.0, %v780
    %v782 = vmul.f32 %v779, %v781
    %v783 = vadd.f32 %v779, %v782
    %vm784 = vweird.f32 %v778
    %vm785 = vweird.f32 %v779
    %vm786 = vmor %vm784, %vm785
    %v787 = vsel %vm786, %v779, %v783
    %v788 = vand.u32 2147483647, %v778
    %vm789 = vcmp.eq.f32.partialorder %v788, 8.507059e+37
    %v790 = vand.u32 %v778, 2147483648
    %v791 = vor.u32 1.1754944e-38, %v790
    %v792 = vsel %vm789, %v791, %v787
    %v793 = vmul.f32 1.0, %v792
    %v794 = vmul.f32 %v773, 0.0
    %v795 = vmul.f32 %v754, %v774
    %v796 = vadd.f32 %v794, %v795
    %v797 = vtanh.pop %v796
    %v798 = vmul.f32 %v793, %v797
    %s799 = scalar_lea.vmem %s0, 2
    %v800 = vld [vmem:[%s799] sm:$0x3]
    %801 = vmatpush.msra.mxu0 %v188
    %802 = vmatpush.msra.mxu0 %v184
    %803 = vmatpush.msra.mxu0 %v180
    %804 = vmatpush.msra.mxu0 %v176
    %805 = vmatpush.msra.mxu0 %v172
    %806 = vmatpush.msra.mxu0 %v168
    %807 = vmatpush.msra.mxu0 %v164
    %808 = vmatpush.msra.mxu0 %v160
    %809 = vmatpush.msra.mxu0 %v156
    %810 = vmatpush.msra.mxu0 %v152
    %811 = vmatpush.msra.mxu0 %v148
    %812 = vmatpush.msra.mxu0 %v144
    %813 = vmatpush.msra.mxu0 %v140
    %814 = vmatpush.msra.mxu0 %v136
    %815 = vmatpush.msra.mxu0 %v132
    %816 = vmatpush.msra.mxu0 %v128
    %817 = vmatmul.f32.gmra.mxu0 %v562
    %v818 = vpop.f32.mrf.mxu0
    %v819 = vadd.f32 0.0, %v818
    %820 = vdwg.mxu0
    %821 = vmatpush.msra.mxu0 %v189
    %822 = vmatpush.msra.mxu0 %v185
    %823 = vmatpush.msra.mxu0 %v181
    %824 = vmatpush.msra.mxu0 %v177
    %825 = vmatpush.msra.mxu0 %v173
    %826 = vmatpush.msra.mxu0 %v169
    %827 = vmatpush.msra.mxu0 %v165
    %828 = vmatpush.msra.mxu0 %v161
    %829 = vmatpush.msra.mxu0 %v157
    %830 = vmatpush.msra.mxu0 %v153
    %831 = vmatpush.msra.mxu0 %v149
    %832 = vmatpush.msra.mxu0 %v145
    %833 = vmatpush.msra.mxu0 %v141
    %834 = vmatpush.msra.mxu0 %v137
    %835 = vmatpush.msra.mxu0 %v133
    %836 = vmatpush.msra.mxu0 %v129
    %837 = vmatmul.f32.gmra.mxu0 %v562
    %v838 = vpop.f32.mrf.mxu0
    %v839 = vadd.f32 0.0, %v838
    %840 = vdwg.mxu0
    %841 = vmatpush.msra.mxu0 %v190
    %842 = vmatpush.msra.mxu0 %v186
    %843 = vmatpush.msra.mxu0 %v182
    %844 = vmatpush.msra.mxu0 %v178
    %845 = vmatpush.msra.mxu0 %v174
    %846 = vmatpush.msra.mxu0 %v170
    %847 = vmatpush.msra.mxu0 %v166
    %848 = vmatpush.msra.mxu0 %v162
    %849 = vmatpush.msra.mxu0 %v158
    %850 = vmatpush.msra.mxu0 %v154
    %851 = vmatpush.msra.mxu0 %v150
    %852 = vmatpush.msra.mxu0 %v146
    %853 = vmatpush.msra.mxu0 %v142
    %854 = vmatpush.msra.mxu0 %v138
    %855 = vmatpush.msra.mxu0 %v134
    %856 = vmatpush.msra.mxu0 %v130
    %857 = vmatmul.f32.gmra.mxu0 %v562
    %v858 = vpop.f32.mrf.mxu0
    %v859 = vadd.f32 0.0, %v858
    %860 = vdwg.mxu0
    %861 = vmatpush.msra.mxu0 %v191
    %862 = vmatpush.msra.mxu0 %v187
    %863 = vmatpush.msra.mxu0 %v183
    %864 = vmatpush.msra.mxu0 %v179
    %865 = vmatpush.msra.mxu0 %v175
    %866 = vmatpush.msra.mxu0 %v171
    %867 = vmatpush.msra.mxu0 %v167
    %868 = vmatpush.msra.mxu0 %v163
    %869 = vmatpush.msra.mxu0 %v159
    %870 = vmatpush.msra.mxu0 %v155
    %871 = vmatpush.msra.mxu0 %v151
    %872 = vmatpush.msra.mxu0 %v147
    %873 = vmatpush.msra.mxu0 %v143
    %874 = vmatpush.msra.mxu0 %v139
    %875 = vmatpush.msra.mxu0 %v135
    %876 = vmatpush.msra.mxu0 %v131
    %877 = vmatmul.f32.gmra.mxu0 %v562
    %v878 = vpop.f32.mrf.mxu0
    %v879 = vadd.f32 0.0, %v878
    %880 = vdwg.mxu0
    %v882 = vsel %vm403, %v800, 0
    %884 = vmatpush.msra.mxu0 0.0
    %885 = vmatpush.msra.mxu0 0.0
    %886 = vmatpush.msra.mxu0 0.0
    %887 = vmatpush.msra.mxu0 0.0
    %888 = vmatpush.msra.mxu0 0.0
    %889 = vmatpush.msra.mxu0 0.0
    %890 = vmatpush.msra.mxu0 0.0
    %891 = vmatpush.msra.mxu0 0.0
    %892 = vmatpush.msra.mxu0 %v124
    %893 = vmatpush.msra.mxu0 %v120
    %894 = vmatpush.msra.mxu0 %v116
    %895 = vmatpush.msra.mxu0 %v112
    %896 = vmatpush.msra.mxu0 %v108
    %897 = vmatpush.msra.mxu0 %v104
    %898 = vmatpush.msra.mxu0 %v100
    %899 = vmatpush.msra.mxu0 %v96
    %900 = vmatmul.f32.gmra.mxu0 %v882
    %v901 = vpop.f32.mrf.mxu0
    %v902 = vadd.f32 %v819, %v901
    %903 = vdwg.mxu0
    %904 = vmatpush.msra.mxu0 0.0
    %905 = vmatpush.msra.mxu0 0.0
    %906 = vmatpush.msra.mxu0 0.0
    %907 = vmatpush.msra.mxu0 0.0
    %908 = vmatpush.msra.mxu0 0.0
    %909 = vmatpush.msra.mxu0 0.0
    %910 = vmatpush.msra.mxu0 0.0
    %911 = vmatpush.msra.mxu0 0.0
    %912 = vmatpush.msra.mxu0 %v125
    %913 = vmatpush.msra.mxu0 %v121
    %914 = vmatpush.msra.mxu0 %v117
    %915 = vmatpush.msra.mxu0 %v113
    %916 = vmatpush.msra.mxu0 %v109
    %917 = vmatpush.msra.mxu0 %v105
    %918 = vmatpush.msra.mxu0 %v101
    %919 = vmatpush.msra.mxu0 %v97
    %920 = vmatmul.f32.gmra.mxu0 %v882
    %v921 = vpop.f32.mrf.mxu0
    %v922 = vadd.f32 %v839, %v921
    %923 = vdwg.mxu0
    %924 = vmatpush.msra.mxu0 0.0
    %925 = vmatpush.msra.mxu0 0.0
    %926 = vmatpush.msra.mxu0 0.0
    %927 = vmatpush.msra.mxu0 0.0
    %928 = vmatpush.msra.mxu0 0.0
    %929 = vmatpush.msra.mxu0 0.0
    %930 = vmatpush.msra.mxu0 0.0
    %931 = vmatpush.msra.mxu0 0.0
    %932 = vmatpush.msra.mxu0 %v126
    %933 = vmatpush.msra.mxu0 %v122
    %934 = vmatpush.msra.mxu0 %v118
    %935 = vmatpush.msra.mxu0 %v114
    %936 = vmatpush.msra.mxu0 %v110
    %937 = vmatpush.msra.mxu0 %v106
    %938 = vmatpush.msra.mxu0 %v102
    %939 = vmatpush.msra.mxu0 %v98
    %940 = vmatmul.f32.gmra.mxu0 %v882
    %v941 = vpop.f32.mrf.mxu0
    %v942 = vadd.f32 %v859, %v941
    %943 = vdwg.mxu0
    %944 = vmatpush.msra.mxu0 0.0
    %945 = vmatpush.msra.mxu0 0.0
    %946 = vmatpush.msra.mxu0 0.0
    %947 = vmatpush.msra.mxu0 0.0
    %948 = vmatpush.msra.mxu0 0.0
    %949 = vmatpush.msra.mxu0 0.0
    %950 = vmatpush.msra.mxu0 0.0
    %951 = vmatpush.msra.mxu0 0.0
    %952 = vmatpush.msra.mxu0 %v127
    %953 = vmatpush.msra.mxu0 %v123
    %954 = vmatpush.msra.mxu0 %v119
    %955 = vmatpush.msra.mxu0 %v115
    %956 = vmatpush.msra.mxu0 %v111
    %957 = vmatpush.msra.mxu0 %v107
    %958 = vmatpush.msra.mxu0 %v103
    %959 = vmatpush.msra.mxu0 %v99
    %960 = vmatmul.f32.gmra.mxu0 %v882
    %v961 = vpop.f32.mrf.mxu0
    %v962 = vadd.f32 %v879, %v961
    %963 = vdwg.mxu0
    %v964 = vadd.f32 %v902, %v488
    %v965 = vadd.f32 %v922, %v489
    %v966 = vadd.f32 %v942, %v490
    %v967 = vadd.f32 %v962, %v491
    %v968 = vxor.u32 %v964, 2147483648
    %v969 = vmul.f32 %v968, 1.442695
    %v970 = vpow.pop %v969
    %v971 = vadd.f32 %v970, 1.0
    %v972 = vrcp.pop %v971
    %v973 = vmul.f32 %v971, %v972
    %v974 = vsub.f32 1.0, %v973
    %v975 = vmul.f32 %v972, %v974
    %v976 = vadd.f32 %v972, %v975
    %vm977 = vweird.f32 %v971
    %vm978 = vweird.f32 %v972
    %vm979 = vmor %vm977, %vm978
    %v980 = vsel %vm979, %v972, %v976
    %v981 = vand.u32 2147483647, %v971
    %vm982 = vcmp.eq.f32.partialorder %v981, 8.507059e+37
    %v983 = vand.u32 %v971, 2147483648
    %v984 = vor.u32 1.1754944e-38, %v983
    %v985 = vsel %vm982, %v984, %v980
    %v986 = vmul.f32 1.0, %v985
    %v987 = vxor.u32 %v965, 2147483648
    %v988 = vmul.f32 %v987, 1.442695
    %v989 = vpow.pop %v988
    %v990 = vadd.f32 %v989, 1.0
    %v991 = vrcp.pop %v990
    %v992 = vmul.f32 %v990, %v991
    %v993 = vsub.f32 1.0, %v992
    %v994 = vmul.f32 %v991, %v993
    %v995 = vadd.f32 %v991, %v994
    %vm996 = vweird.f32 %v990
    %vm997 = vweird.f32 %v991
    %vm998 = vmor %vm996, %vm997
    %v999 = vsel %vm998, %v991, %v995
    %v1000 = vand.u32 2147483647, %v990
    %vm1001 = vcmp.eq.f32.partialorder %v1000, 8.507059e+37
    %v1002 = vand.u32 %v990, 2147483648
    %v1003 = vor.u32 1.1754944e-38, %v1002
    %v1004 = vsel %vm1001, %v1003, %v999
    %v1005 = vmul.f32 1.0, %v1004
    %v1006 = vtanh.pop %v966
    %v1007 = vxor.u32 %v967, 2147483648
    %v1008 = vmul.f32 %v1007, 1.442695
    %v1009 = vpow.pop %v1008
    %v1010 = vadd.f32 %v1009, 1.0
    %v1011 = vrcp.pop %v1010
    %v1012 = vmul.f32 %v1010, %v1011
    %v1013 = vsub.f32 1.0, %v1012
    %v1014 = vmul.f32 %v1011, %v1013
    %v1015 = vadd.f32 %v1011, %v1014
    %vm1016 = vweird.f32 %v1010
    %vm1017 = vweird.f32 %v1011
    %vm1018 = vmor %vm1016, %vm1017
    %v1019 = vsel %vm1018, %v1011, %v1015
    %v1020 = vand.u32 2147483647, %v1010
    %vm1021 = vcmp.eq.f32.partialorder %v1020, 8.507059e+37
    %v1022 = vand.u32 %v1010, 2147483648
    %v1023 = vor.u32 1.1754944e-38, %v1022
    %v1024 = vsel %vm1021, %v1023, %v1019
    %v1025 = vmul.f32 1.0, %v1024
    %v1026 = vmul.f32 %v1005, %v560
    %v1027 = vmul.f32 %v986, %v1006
    %v1028 = vadd.f32 %v1026, %v1027
    %v1029 = vtanh.pop %v1028
    %v1030 = vmul.f32 %v1025, %v1029
    %1031 = vmatpush.msra.mxu0 %v317
    %1032 = vmatpush.msra.mxu0 %v313
    %1033 = vmatpush.msra.mxu0 %v309
    %1034 = vmatpush.msra.mxu0 %v305
    %1035 = vmatpush.msra.mxu0 %v301
    %1036 = vmatpush.msra.mxu0 %v297
    %1037 = vmatpush.msra.mxu0 %v293
    %1038 = vmatpush.msra.mxu0 %v289
    %1039 = vmatpush.msra.mxu0 %v285
    %1040 = vmatpush.msra.mxu0 %v281
    %1041 = vmatpush.msra.mxu0 %v277
    %1042 = vmatpush.msra.mxu0 %v273
    %1043 = vmatpush.msra.mxu0 %v269
    %1044 = vmatpush.msra.mxu0 %v265
    %1045 = vmatpush.msra.mxu0 %v261
    %1046 = vmatpush.msra.mxu0 %v257
    %1047 = vmatmul.f32.gmra.mxu0 %v798
    %v1048 = vpop.f32.mrf.mxu0
    %v1049 = vadd.f32 0.0, %v1048
    %1050 = vdwg.mxu0
    %1051 = vmatpush.msra.mxu0 %v318
    %1052 = vmatpush.msra.mxu0 %v314
    %1053 = vmatpush.msra.mxu0 %v310
    %1054 = vmatpush.msra.mxu0 %v306
    %1055 = vmatpush.msra.mxu0 %v302
    %1056 = vmatpush.msra.mxu0 %v298
    %1057 = vmatpush.msra.mxu0 %v294
    %1058 = vmatpush.msra.mxu0 %v290
    %1059 = vmatpush.msra.mxu0 %v286
    %1060 = vmatpush.msra.mxu0 %v282
    %1061 = vmatpush.msra.mxu0 %v278
    %1062 = vmatpush.msra.mxu0 %v274
    %1063 = vmatpush.msra.mxu0 %v270
    %1064 = vmatpush.msra.mxu0 %v266
    %1065 = vmatpush.msra.mxu0 %v262
    %1066 = vmatpush.msra.mxu0 %v258
    %1067 = vmatmul.f32.gmra.mxu0 %v798
    %v1068 = vpop.f32.mrf.mxu0
    %v1069 = vadd.f32 0.0, %v1068
    %1070 = vdwg.mxu0
    %1071 = vmatpush.msra.mxu0 %v319
    %1072 = vmatpush.msra.mxu0 %v315
    %1073 = vmatpush.msra.mxu0 %v311
    %1074 = vmatpush.msra.mxu0 %v307
    %1075 = vmatpush.msra.mxu0 %v303
    %1076 = vmatpush.msra.mxu0 %v299
    %1077 = vmatpush.msra.mxu0 %v295
    %1078 = vmatpush.msra.mxu0 %v291
    %1079 = vmatpush.msra.mxu0 %v287
    %1080 = vmatpush.msra.mxu0 %v283
    %1081 = vmatpush.msra.mxu0 %v279
    %1082 = vmatpush.msra.mxu0 %v275
    %1083 = vmatpush.msra.mxu0 %v271
    %1084 = vmatpush.msra.mxu0 %v267
    %1085 = vmatpush.msra.mxu0 %v263
    %1086 = vmatpush.msra.mxu0 %v259
    %1087 = vmatmul.f32.gmra.mxu0 %v798
    %v1088 = vpop.f32.mrf.mxu0
    %v1089 = vadd.f32 0.0, %v1088
    %1090 = vdwg.mxu0
    %1091 = vmatpush.msra.mxu0 %v320
    %1092 = vmatpush.msra.mxu0 %v316
    %1093 = vmatpush.msra.mxu0 %v312
    %1094 = vmatpush.msra.mxu0 %v308
    %1095 = vmatpush.msra.mxu0 %v304
    %1096 = vmatpush.msra.mxu0 %v300
    %1097 = vmatpush.msra.mxu0 %v296
    %1098 = vmatpush.msra.mxu0 %v292
    %1099 = vmatpush.msra.mxu0 %v288
    %1100 = vmatpush.msra.mxu0 %v284
    %1101 = vmatpush.msra.mxu0 %v280
    %1102 = vmatpush.msra.mxu0 %v276
    %1103 = vmatpush.msra.mxu0 %v272
    %1104 = vmatpush.msra.mxu0 %v268
    %1105 = vmatpush.msra.mxu0 %v264
    %1106 = vmatpush.msra.mxu0 %v260
    %1107 = vmatmul.f32.gmra.mxu0 %v798
    %v1108 = vpop.f32.mrf.mxu0
    %v1109 = vadd.f32 0.0, %v1108
    %1110 = vdwg.mxu0
    %1111 = vmatpush.msra.mxu0 %v253
    %1112 = vmatpush.msra.mxu0 %v249
    %1113 = vmatpush.msra.mxu0 %v245
    %1114 = vmatpush.msra.mxu0 %v241
    %1115 = vmatpush.msra.mxu0 %v237
    %1116 = vmatpush.msra.mxu0 %v233
    %1117 = vmatpush.msra.mxu0 %v229
    %1118 = vmatpush.msra.mxu0 %v225
    %1119 = vmatpush.msra.mxu0 %v221
    %1120 = vmatpush.msra.mxu0 %v217
    %1121 = vmatpush.msra.mxu0 %v213
    %1122 = vmatpush.msra.mxu0 %v209
    %1123 = vmatpush.msra.mxu0 %v205
    %1124 = vmatpush.msra.mxu0 %v201
    %1125 = vmatpush.msra.mxu0 %v197
    %1126 = vmatpush.msra.mxu0 %v193
    %1127 = vmatmul.f32.gmra.mxu0 %v1030
    %v1128 = vpop.f32.mrf.mxu0
    %v1129 = vadd.f32 %v1049, %v1128
    %1130 = vdwg.mxu0
    %1131 = vmatpush.msra.mxu0 %v254
    %1132 = vmatpush.msra.mxu0 %v250
    %1133 = vmatpush.msra.mxu0 %v246
    %1134 = vmatpush.msra.mxu0 %v242
    %1135 = vmatpush.msra.mxu0 %v238
    %1136 = vmatpush.msra.mxu0 %v234
    %1137 = vmatpush.msra.mxu0 %v230
    %1138 = vmatpush.msra.mxu0 %v226
    %1139 = vmatpush.msra.mxu0 %v222
    %1140 = vmatpush.msra.mxu0 %v218
    %1141 = vmatpush.msra.mxu0 %v214
    %1142 = vmatpush.msra.mxu0 %v210
    %1143 = vmatpush.msra.mxu0 %v206
    %1144 = vmatpush.msra.mxu0 %v202
    %1145 = vmatpush.msra.mxu0 %v198
    %1146 = vmatpush.msra.mxu0 %v194
    %1147 = vmatmul.f32.gmra.mxu0 %v1030
    %v1148 = vpop.f32.mrf.mxu0
    %v1149 = vadd.f32 %v1069, %v1148
    %1150 = vdwg.mxu0
    %1151 = vmatpush.msra.mxu0 %v255
    %1152 = vmatpush.msra.mxu0 %v251
    %1153 = vmatpush.msra.mxu0 %v247
    %1154 = vmatpush.msra.mxu0 %v243
    %1155 = vmatpush.msra.mxu0 %v239
    %1156 = vmatpush.msra.mxu0 %v235
    %1157 = vmatpush.msra.mxu0 %v231
    %1158 = vmatpush.msra.mxu0 %v227
    %1159 = vmatpush.msra.mxu0 %v223
    %1160 = vmatpush.msra.mxu0 %v219
    %1161 = vmatpush.msra.mxu0 %v215
    %1162 = vmatpush.msra.mxu0 %v211
    %1163 = vmatpush.msra.mxu0 %v207
    %1164 = vmatpush.msra.mxu0 %v203
    %1165 = vmatpush.msra.mxu0 %v199
    %1166 = vmatpush.msra.mxu0 %v195
    %1167 = vmatmul.f32.gmra.mxu0 %v1030
    %v1168 = vpop.f32.mrf.mxu0
    %v1169 = vadd.f32 %v1089, %v1168
    %1170 = vdwg.mxu0
    %1171 = vmatpush.msra.mxu0 %v256
    %1172 = vmatpush.msra.mxu0 %v252
    %1173 = vmatpush.msra.mxu0 %v248
    %1174 = vmatpush.msra.mxu0 %v244
    %1175 = vmatpush.msra.mxu0 %v240
    %1176 = vmatpush.msra.mxu0 %v236
    %1177 = vmatpush.msra.mxu0 %v232
    %1178 = vmatpush.msra.mxu0 %v228
    %1179 = vmatpush.msra.mxu0 %v224
    %1180 = vmatpush.msra.mxu0 %v220
    %1181 = vmatpush.msra.mxu0 %v216
    %1182 = vmatpush.msra.mxu0 %v212
    %1183 = vmatpush.msra.mxu0 %v208
    %1184 = vmatpush.msra.mxu0 %v204
    %1185 = vmatpush.msra.mxu0 %v200
    %1186 = vmatpush.msra.mxu0 %v196
    %1187 = vmatmul.f32.gmra.mxu0 %v1030
    %v1188 = vpop.f32.mrf.mxu0
    %v1189 = vadd.f32 %v1109, %v1188
    %1190 = vdwg.mxu0
    %v1191 = vadd.f32 %v1129, %v724
    %v1192 = vadd.f32 %v1149, %v725
    %v1193 = vadd.f32 %v1169, %v726
    %v1194 = vadd.f32 %v1189, %v727
    %v1195 = vxor.u32 %v1191, 2147483648
    %v1196 = vmul.f32 %v1195, 1.442695
    %v1197 = vpow.pop %v1196
    %v1198 = vadd.f32 %v1197, 1.0
    %v1199 = vrcp.pop %v1198
    %v1200 = vmul.f32 %v1198, %v1199
    %v1201 = vsub.f32 1.0, %v1200
    %v1202 = vmul.f32 %v1199, %v1201
    %v1203 = vadd.f32 %v1199, %v1202
    %vm1204 = vweird.f32 %v1198
    %vm1205 = vweird.f32 %v1199
    %vm1206 = vmor %vm1204, %vm1205
    %v1207 = vsel %vm1206, %v1199, %v1203
    %v1208 = vand.u32 2147483647, %v1198
    %vm1209 = vcmp.eq.f32.partialorder %v1208, 8.507059e+37
    %v1210 = vand.u32 %v1198, 2147483648
    %v1211 = vor.u32 1.1754944e-38, %v1210
    %v1212 = vsel %vm1209, %v1211, %v1207
    %v1213 = vmul.f32 1.0, %v1212
    %v1214 = vxor.u32 %v1192, 2147483648
    %v1215 = vmul.f32 %v1214, 1.442695
    %v1216 = vpow.pop %v1215
    %v1217 = vadd.f32 %v1216, 1.0
    %v1218 = vrcp.pop %v1217
    %v1219 = vmul.f32 %v1217, %v1218
    %v1220 = vsub.f32 1.0, %v1219
    %v1221 = vmul.f32 %v1218, %v1220
    %v1222 = vadd.f32 %v1218, %v1221
    %vm1223 = vweird.f32 %v1217
    %vm1224 = vweird.f32 %v1218
    %vm1225 = vmor %vm1223, %vm1224
    %v1226 = vsel %vm1225, %v1218, %v1222
    %v1227 = vand.u32 2147483647, %v1217
    %vm1228 = vcmp.eq.f32.partialorder %v1227, 8.507059e+37
    %v1229 = vand.u32 %v1217, 2147483648
    %v1230 = vor.u32 1.1754944e-38, %v1229
    %v1231 = vsel %vm1228, %v1230, %v1226
    %v1232 = vmul.f32 1.0, %v1231
    %v1233 = vtanh.pop %v1193
    %v1234 = vxor.u32 %v1194, 2147483648
    %v1235 = vmul.f32 %v1234, 1.442695
    %v1236 = vpow.pop %v1235
    %v1237 = vadd.f32 %v1236, 1.0
    %v1238 = vrcp.pop %v1237
    %v1239 = vmul.f32 %v1237, %v1238
    %v1240 = vsub.f32 1.0, %v1239
    %v1241 = vmul.f32 %v1238, %v1240
    %v1242 = vadd.f32 %v1238, %v1241
    %vm1243 = vweird.f32 %v1237
    %vm1244 = vweird.f32 %v1238
    %vm1245 = vmor %vm1243, %vm1244
    %v1246 = vsel %vm1245, %v1238, %v1242
    %v1247 = vand.u32 2147483647, %v1237
    %vm1248 = vcmp.eq.f32.partialorder %v1247, 8.507059e+37
    %v1249 = vand.u32 %v1237, 2147483648
    %v1250 = vor.u32 1.1754944e-38, %v1249
    %v1251 = vsel %vm1248, %v1250, %v1246
    %v1252 = vmul.f32 1.0, %v1251
    %v1253 = vmul.f32 %v1232, %v796
    %v1254 = vmul.f32 %v1213, %v1233
    %v1255 = vadd.f32 %v1253, %v1254
    %v1256 = vtanh.pop %v1255
    %v1257 = vmul.f32 %v1252, %v1256
    %s1258 = scalar_lea.vmem %s0, 4
    %v1259 = vld [vmem:[%s1258] sm:$0x3]
    %1260 = vmatpush.msra.mxu0 %v188
    %1261 = vmatpush.msra.mxu0 %v184
    %1262 = vmatpush.msra.mxu0 %v180
    %1263 = vmatpush.msra.mxu0 %v176
    %1264 = vmatpush.msra.mxu0 %v172
    %1265 = vmatpush.msra.mxu0 %v168
    %1266 = vmatpush.msra.mxu0 %v164
    %1267 = vmatpush.msra.mxu0 %v160
    %1268 = vmatpush.msra.mxu0 %v156
    %1269 = vmatpush.msra.mxu0 %v152
    %1270 = vmatpush.msra.mxu0 %v148
    %1271 = vmatpush.msra.mxu0 %v144
    %1272 = vmatpush.msra.mxu0 %v140
    %1273 = vmatpush.msra.mxu0 %v136
    %1274 = vmatpush.msra.mxu0 %v132
    %1275 = vmatpush.msra.mxu0 %v128
    %1276 = vmatmul.f32.gmra.mxu0 %v1030
    %v1277 = vpop.f32.mrf.mxu0
    %v1278 = vadd.f32 0.0, %v1277
    %1279 = vdwg.mxu0
    %1280 = vmatpush.msra.mxu0 %v189
    %1281 = vmatpush.msra.mxu0 %v185
    %1282 = vmatpush.msra.mxu0 %v181
    %1283 = vmatpush.msra.mxu0 %v177
    %1284 = vmatpush.msra.mxu0 %v173
    %1285 = vmatpush.msra.mxu0 %v169
    %1286 = vmatpush.msra.mxu0 %v165
    %1287 = vmatpush.msra.mxu0 %v161
    %1288 = vmatpush.msra.mxu0 %v157
    %1289 = vmatpush.msra.mxu0 %v153
    %1290 = vmatpush.msra.mxu0 %v149
    %1291 = vmatpush.msra.mxu0 %v145
    %1292 = vmatpush.msra.mxu0 %v141
    %1293 = vmatpush.msra.mxu0 %v137
    %1294 = vmatpush.msra.mxu0 %v133
    %1295 = vmatpush.msra.mxu0 %v129
    %1296 = vmatmul.f32.gmra.mxu0 %v1030
    %v1297 = vpop.f32.mrf.mxu0
    %v1298 = vadd.f32 0.0, %v1297
    %1299 = vdwg.mxu0
    %1300 = vmatpush.msra.mxu0 %v190
    %1301 = vmatpush.msra.mxu0 %v186
    %1302 = vmatpush.msra.mxu0 %v182
    %1303 = vmatpush.msra.mxu0 %v178
    %1304 = vmatpush.msra.mxu0 %v174
    %1305 = vmatpush.msra.mxu0 %v170
    %1306 = vmatpush.msra.mxu0 %v166
    %1307 = vmatpush.msra.mxu0 %v162
    %1308 = vmatpush.msra.mxu0 %v158
    %1309 = vmatpush.msra.mxu0 %v154
    %1310 = vmatpush.msra.mxu0 %v150
    %1311 = vmatpush.msra.mxu0 %v146
    %1312 = vmatpush.msra.mxu0 %v142
    %1313 = vmatpush.msra.mxu0 %v138
    %1314 = vmatpush.msra.mxu0 %v134
    %1315 = vmatpush.msra.mxu0 %v130
    %1316 = vmatmul.f32.gmra.mxu0 %v1030
    %v1317 = vpop.f32.mrf.mxu0
    %v1318 = vadd.f32 0.0, %v1317
    %1319 = vdwg.mxu0
    %1320 = vmatpush.msra.mxu0 %v191
    %1321 = vmatpush.msra.mxu0 %v187
    %1322 = vmatpush.msra.mxu0 %v183
    %1323 = vmatpush.msra.mxu0 %v179
    %1324 = vmatpush.msra.mxu0 %v175
    %1325 = vmatpush.msra.mxu0 %v171
    %1326 = vmatpush.msra.mxu0 %v167
    %1327 = vmatpush.msra.mxu0 %v163
    %1328 = vmatpush.msra.mxu0 %v159
    %1329 = vmatpush.msra.mxu0 %v155
    %1330 = vmatpush.msra.mxu0 %v151
    %1331 = vmatpush.msra.mxu0 %v147
    %1332 = vmatpush.msra.mxu0 %v143
    %1333 = vmatpush.msra.mxu0 %v139
    %1334 = vmatpush.msra.mxu0 %v135
    %1335 = vmatpush.msra.mxu0 %v131
    %1336 = vmatmul.f32.gmra.mxu0 %v1030
    %v1337 = vpop.f32.mrf.mxu0
    %v1338 = vadd.f32 0.0, %v1337
    %1339 = vdwg.mxu0
    %v1341 = vsel %vm403, %v1259, 0
    %1343 = vmatpush.msra.mxu0 0.0
    %1344 = vmatpush.msra.mxu0 0.0
    %1345 = vmatpush.msra.mxu0 0.0
    %1346 = vmatpush.msra.mxu0 0.0
    %1347 = vmatpush.msra.mxu0 0.0
    %1348 = vmatpush.msra.mxu0 0.0
    %1349 = vmatpush.msra.mxu0 0.0
    %1350 = vmatpush.msra.mxu0 0.0
    %1351 = vmatpush.msra.mxu0 %v124
    %1352 = vmatpush.msra.mxu0 %v120
    %1353 = vmatpush.msra.mxu0 %v116
    %1354 = vmatpush.msra.mxu0 %v112
    %1355 = vmatpush.msra.mxu0 %v108
    %1356 = vmatpush.msra.mxu0 %v104
    %1357 = vmatpush.msra.mxu0 %v100
    %1358 = vmatpush.msra.mxu0 %v96
    %1359 = vmatmul.f32.gmra.mxu0 %v1341
    %v1360 = vpop.f32.mrf.mxu0
    %v1361 = vadd.f32 %v1278, %v1360
    %1362 = vdwg.mxu0
    %1363 = vmatpush.msra.mxu0 0.0
    %1364 = vmatpush.msra.mxu0 0.0
    %1365 = vmatpush.msra.mxu0 0.0
    %1366 = vmatpush.msra.mxu0 0.0
    %1367 = vmatpush.msra.mxu0 0.0
    %1368 = vmatpush.msra.mxu0 0.0
    %1369 = vmatpush.msra.mxu0 0.0
    %1370 = vmatpush.msra.mxu0 0.0
    %1371 = vmatpush.msra.mxu0 %v125
    %1372 = vmatpush.msra.mxu0 %v121
    %1373 = vmatpush.msra.mxu0 %v117
    %1374 = vmatpush.msra.mxu0 %v113
    %1375 = vmatpush.msra.mxu0 %v109
    %1376 = vmatpush.msra.mxu0 %v105
    %1377 = vmatpush.msra.mxu0 %v101
    %1378 = vmatpush.msra.mxu0 %v97
    %1379 = vmatmul.f32.gmra.mxu0 %v1341
    %v1380 = vpop.f32.mrf.mxu0
    %v1381 = vadd.f32 %v1298, %v1380
    %1382 = vdwg.mxu0
    %1383 = vmatpush.msra.mxu0 0.0
    %1384 = vmatpush.msra.mxu0 0.0
    %1385 = vmatpush.msra.mxu0 0.0
    %1386 = vmatpush.msra.mxu0 0.0
    %1387 = vmatpush.msra.mxu0 0.0
    %1388 = vmatpush.msra.mxu0 0.0
    %1389 = vmatpush.msra.mxu0 0.0
    %1390 = vmatpush.msra.mxu0 0.0
    %1391 = vmatpush.msra.mxu0 %v126
    %1392 = vmatpush.msra.mxu0 %v122
    %1393 = vmatpush.msra.mxu0 %v118
    %1394 = vmatpush.msra.mxu0 %v114
    %1395 = vmatpush.msra.mxu0 %v110
    %1396 = vmatpush.msra.mxu0 %v106
    %1397 = vmatpush.msra.mxu0 %v102
    %1398 = vmatpush.msra.mxu0 %v98
    %1399 = vmatmul.f32.gmra.mxu0 %v1341
    %v1400 = vpop.f32.mrf.mxu0
    %v1401 = vadd.f32 %v1318, %v1400
    %1402 = vdwg.mxu0
    %1403 = vmatpush.msra.mxu0 0.0
    %1404 = vmatpush.msra.mxu0 0.0
    %1405 = vmatpush.msra.mxu0 0.0
    %1406 = vmatpush.msra.mxu0 0.0
    %1407 = vmatpush.msra.mxu0 0.0
    %1408 = vmatpush.msra.mxu0 0.0
    %1409 = vmatpush.msra.mxu0 0.0
    %1410 = vmatpush.msra.mxu0 0.0
    %1411 = vmatpush.msra.mxu0 %v127
    %1412 = vmatpush.msra.mxu0 %v123
    %1413 = vmatpush.msra.mxu0 %v119
    %1414 = vmatpush.msra.mxu0 %v115
    %1415 = vmatpush.msra.mxu0 %v111
    %1416 = vmatpush.msra.mxu0 %v107
    %1417 = vmatpush.msra.mxu0 %v103
    %1418 = vmatpush.msra.mxu0 %v99
    %1419 = vmatmul.f32.gmra.mxu0 %v1341
    %v1420 = vpop.f32.mrf.mxu0
    %v1421 = vadd.f32 %v1338, %v1420
    %1422 = vdwg.mxu0
    %v1423 = vadd.f32 %v1361, %v488
    %v1424 = vadd.f32 %v1381, %v489
    %v1425 = vadd.f32 %v1401, %v490
    %v1426 = vadd.f32 %v1421, %v491
    %v1427 = vxor.u32 %v1423, 2147483648
    %v1428 = vmul.f32 %v1427, 1.442695
    %v1429 = vpow.pop %v1428
    %v1430 = vadd.f32 %v1429, 1.0
    %v1431 = vrcp.pop %v1430
    %v1432 = vmul.f32 %v1430, %v1431
    %v1433 = vsub.f32 1.0, %v1432
    %v1434 = vmul.f32 %v1431, %v1433
    %v1435 = vadd.f32 %v1431, %v1434
    %vm1436 = vweird.f32 %v1430
    %vm1437 = vweird.f32 %v1431
    %vm1438 = vmor %vm1436, %vm1437
    %v1439 = vsel %vm1438, %v1431, %v1435
    %v1440 = vand.u32 2147483647, %v1430
    %vm1441 = vcmp.eq.f32.partialorder %v1440, 8.507059e+37
    %v1442 = vand.u32 %v1430, 2147483648
    %v1443 = vor.u32 1.1754944e-38, %v1442
    %v1444 = vsel %vm1441, %v1443, %v1439
    %v1445 = vmul.f32 1.0, %v1444
    %v1446 = vxor.u32 %v1424, 2147483648
    %v1447 = vmul.f32 %v1446, 1.442695
    %v1448 = vpow.pop %v1447
    %v1449 = vadd.f32 %v1448, 1.0
    %v1450 = vrcp.pop %v1449
    %v1451 = vmul.f32 %v1449, %v1450
    %v1452 = vsub.f32 1.0, %v1451
    %v1453 = vmul.f32 %v1450, %v1452
    %v1454 = vadd.f32 %v1450, %v1453
    %vm1455 = vweird.f32 %v1449
    %vm1456 = vweird.f32 %v1450
    %vm1457 = vmor %vm1455, %vm1456
    %v1458 = vsel %vm1457, %v1450, %v1454
    %v1459 = vand.u32 2147483647, %v1449
    %vm1460 = vcmp.eq.f32.partialorder %v1459, 8.507059e+37
    %v1461 = vand.u32 %v1449, 2147483648
    %v1462 = vor.u32 1.1754944e-38, %v1461
    %v1463 = vsel %vm1460, %v1462, %v1458
    %v1464 = vmul.f32 1.0, %v1463
    %v1465 = vtanh.pop %v1425
    %v1466 = vxor.u32 %v1426, 2147483648
    %v1467 = vmul.f32 %v1466, 1.442695
    %v1468 = vpow.pop %v1467
    %v1469 = vadd.f32 %v1468, 1.0
    %v1470 = vrcp.pop %v1469
    %v1471 = vmul.f32 %v1469, %v1470
    %v1472 = vsub.f32 1.0, %v1471
    %v1473 = vmul.f32 %v1470, %v1472
    %v1474 = vadd.f32 %v1470, %v1473
    %vm1475 = vweird.f32 %v1469
    %vm1476 = vweird.f32 %v1470
    %vm1477 = vmor %vm1475, %vm1476
    %v1478 = vsel %vm1477, %v1470, %v1474
    %v1479 = vand.u32 2147483647, %v1469
    %vm1480 = vcmp.eq.f32.partialorder %v1479, 8.507059e+37
    %v1481 = vand.u32 %v1469, 2147483648
    %v1482 = vor.u32 1.1754944e-38, %v1481
    %v1483 = vsel %vm1480, %v1482, %v1478
    %v1484 = vmul.f32 1.0, %v1483
    %v1485 = vmul.f32 %v1464, %v1028
    %v1486 = vmul.f32 %v1445, %v1465
    %v1487 = vadd.f32 %v1485, %v1486
    %v1488 = vtanh.pop %v1487
    %v1489 = vmul.f32 %v1484, %v1488
    %1490 = vmatpush.msra.mxu0 %v317
    %1491 = vmatpush.msra.mxu0 %v313
    %1492 = vmatpush.msra.mxu0 %v309
    %1493 = vmatpush.msra.mxu0 %v305
    %1494 = vmatpush.msra.mxu0 %v301
    %1495 = vmatpush.msra.mxu0 %v297
    %1496 = vmatpush.msra.mxu0 %v293
    %1497 = vmatpush.msra.mxu0 %v289
    %1498 = vmatpush.msra.mxu0 %v285
    %1499 = vmatpush.msra.mxu0 %v281
    %1500 = vmatpush.msra.mxu0 %v277
    %1501 = vmatpush.msra.mxu0 %v273
    %1502 = vmatpush.msra.mxu0 %v269
    %1503 = vmatpush.msra.mxu0 %v265
    %1504 = vmatpush.msra.mxu0 %v261
    %1505 = vmatpush.msra.mxu0 %v257
    %1506 = vmatmul.f32.gmra.mxu0 %v1257
    %v1507 = vpop.f32.mrf.mxu0
    %v1508 = vadd.f32 0.0, %v1507
    %1509 = vdwg.mxu0
    %1510 = vmatpush.msra.mxu0 %v318
    %1511 = vmatpush.msra.mxu0 %v314
    %1512 = vmatpush.msra.mxu0 %v310
    %1513 = vmatpush.msra.mxu0 %v306
    %1514 = vmatpush.msra.mxu0 %v302
    %1515 = vmatpush.msra.mxu0 %v298
    %1516 = vmatpush.msra.mxu0 %v294
    %1517 = vmatpush.msra.mxu0 %v290
    %1518 = vmatpush.msra.mxu0 %v286
    %1519 = vmatpush.msra.mxu0 %v282
    %1520 = vmatpush.msra.mxu0 %v278
    %1521 = vmatpush.msra.mxu0 %v274
    %1522 = vmatpush.msra.mxu0 %v270
    %1523 = vmatpush.msra.mxu0 %v266
    %1524 = vmatpush.msra.mxu0 %v262
    %1525 = vmatpush.msra.mxu0 %v258
    %1526 = vmatmul.f32.gmra.mxu0 %v1257
    %v1527 = vpop.f32.mrf.mxu0
    %v1528 = vadd.f32 0.0, %v1527
    %1529 = vdwg.mxu0
    %1530 = vmatpush.msra.mxu0 %v319
    %1531 = vmatpush.msra.mxu0 %v315
    %1532 = vmatpush.msra.mxu0 %v311
    %1533 = vmatpush.msra.mxu0 %v307
    %1534 = vmatpush.msra.mxu0 %v303
    %1535 = vmatpush.msra.mxu0 %v299
    %1536 = vmatpush.msra.mxu0 %v295
    %1537 = vmatpush.msra.mxu0 %v291
    %1538 = vmatpush.msra.mxu0 %v287
    %1539 = vmatpush.msra.mxu0 %v283
    %1540 = vmatpush.msra.mxu0 %v279
    %1541 = vmatpush.msra.mxu0 %v275
    %1542 = vmatpush.msra.mxu0 %v271
    %1543 = vmatpush.msra.mxu0 %v267
    %1544 = vmatpush.msra.mxu0 %v263
    %1545 = vmatpush.msra.mxu0 %v259
    %1546 = vmatmul.f32.gmra.mxu0 %v1257
    %v1547 = vpop.f32.mrf.mxu0
    %v1548 = vadd.f32 0.0, %v1547
    %1549 = vdwg.mxu0
    %1550 = vmatpush.msra.mxu0 %v320
    %1551 = vmatpush.msra.mxu0 %v316
    %1552 = vmatpush.msra.mxu0 %v312
    %1553 = vmatpush.msra.mxu0 %v308
    %1554 = vmatpush.msra.mxu0 %v304
    %1555 = vmatpush.msra.mxu0 %v300
    %1556 = vmatpush.msra.mxu0 %v296
    %1557 = vmatpush.msra.mxu0 %v292
    %1558 = vmatpush.msra.mxu0 %v288
    %1559 = vmatpush.msra.mxu0 %v284
    %1560 = vmatpush.msra.mxu0 %v280
    %1561 = vmatpush.msra.mxu0 %v276
    %1562 = vmatpush.msra.mxu0 %v272
    %1563 = vmatpush.msra.mxu0 %v268
    %1564 = vmatpush.msra.mxu0 %v264
    %1565 = vmatpush.msra.mxu0 %v260
    %1566 = vmatmul.f32.gmra.mxu0 %v1257
    %v1567 = vpop.f32.mrf.mxu0
    %v1568 = vadd.f32 0.0, %v1567
    %1569 = vdwg.mxu0
    %1570 = vmatpush.msra.mxu0 %v253
    %1571 = vmatpush.msra.mxu0 %v249
    %1572 = vmatpush.msra.mxu0 %v245
    %1573 = vmatpush.msra.mxu0 %v241
    %1574 = vmatpush.msra.mxu0 %v237
    %1575 = vmatpush.msra.mxu0 %v233
    %1576 = vmatpush.msra.mxu0 %v229
    %1577 = vmatpush.msra.mxu0 %v225
    %1578 = vmatpush.msra.mxu0 %v221
    %1579 = vmatpush.msra.mxu0 %v217
    %1580 = vmatpush.msra.mxu0 %v213
    %1581 = vmatpush.msra.mxu0 %v209
    %1582 = vmatpush.msra.mxu0 %v205
    %1583 = vmatpush.msra.mxu0 %v201
    %1584 = vmatpush.msra.mxu0 %v197
    %1585 = vmatpush.msra.mxu0 %v193
    %1586 = vmatmul.f32.gmra.mxu0 %v1489
    %v1587 = vpop.f32.mrf.mxu0
    %v1588 = vadd.f32 %v1508, %v1587
    %1589 = vdwg.mxu0
    %1590 = vmatpush.msra.mxu0 %v254
    %1591 = vmatpush.msra.mxu0 %v250
    %1592 = vmatpush.msra.mxu0 %v246
    %1593 = vmatpush.msra.mxu0 %v242
    %1594 = vmatpush.msra.mxu0 %v238
    %1595 = vmatpush.msra.mxu0 %v234
    %1596 = vmatpush.msra.mxu0 %v230
    %1597 = vmatpush.msra.mxu0 %v226
    %1598 = vmatpush.msra.mxu0 %v222
    %1599 = vmatpush.msra.mxu0 %v218
    %1600 = vmatpush.msra.mxu0 %v214
    %1601 = vmatpush.msra.mxu0 %v210
    %1602 = vmatpush.msra.mxu0 %v206
    %1603 = vmatpush.msra.mxu0 %v202
    %1604 = vmatpush.msra.mxu0 %v198
    %1605 = vmatpush.msra.mxu0 %v194
    %1606 = vmatmul.f32.gmra.mxu0 %v1489
    %v1607 = vpop.f32.mrf.mxu0
    %v1608 = vadd.f32 %v1528, %v1607
    %1609 = vdwg.mxu0
    %1610 = vmatpush.msra.mxu0 %v255
    %1611 = vmatpush.msra.mxu0 %v251
    %1612 = vmatpush.msra.mxu0 %v247
    %1613 = vmatpush.msra.mxu0 %v243
    %1614 = vmatpush.msra.mxu0 %v239
    %1615 = vmatpush.msra.mxu0 %v235
    %1616 = vmatpush.msra.mxu0 %v231
    %1617 = vmatpush.msra.mxu0 %v227
    %1618 = vmatpush.msra.mxu0 %v223
    %1619 = vmatpush.msra.mxu0 %v219
    %1620 = vmatpush.msra.mxu0 %v215
    %1621 = vmatpush.msra.mxu0 %v211
    %1622 = vmatpush.msra.mxu0 %v207
    %1623 = vmatpush.msra.mxu0 %v203
    %1624 = vmatpush.msra.mxu0 %v199
    %1625 = vmatpush.msra.mxu0 %v195
    %1626 = vmatmul.f32.gmra.mxu0 %v1489
    %v1627 = vpop.f32.mrf.mxu0
    %v1628 = vadd.f32 %v1548, %v1627
    %1629 = vdwg.mxu0
    %1630 = vmatpush.msra.mxu0 %v256
    %1631 = vmatpush.msra.mxu0 %v252
    %1632 = vmatpush.msra.mxu0 %v248
    %1633 = vmatpush.msra.mxu0 %v244
    %1634 = vmatpush.msra.mxu0 %v240
    %1635 = vmatpush.msra.mxu0 %v236
    %1636 = vmatpush.msra.mxu0 %v232
    %1637 = vmatpush.msra.mxu0 %v228
    %1638 = vmatpush.msra.mxu0 %v224
    %1639 = vmatpush.msra.mxu0 %v220
    %1640 = vmatpush.msra.mxu0 %v216
    %1641 = vmatpush.msra.mxu0 %v212
    %1642 = vmatpush.msra.mxu0 %v208
    %1643 = vmatpush.msra.mxu0 %v204
    %1644 = vmatpush.msra.mxu0 %v200
    %1645 = vmatpush.msra.mxu0 %v196
    %1646 = vmatmul.f32.gmra.mxu0 %v1489
    %v1647 = vpop.f32.mrf.mxu0
    %v1648 = vadd.f32 %v1568, %v1647
    %1649 = vdwg.mxu0
    %v1650 = vadd.f32 %v1588, %v724
    %v1651 = vadd.f32 %v1608, %v725
    %v1652 = vadd.f32 %v1628, %v726
    %v1653 = vadd.f32 %v1648, %v727
    %v1654 = vxor.u32 %v1650, 2147483648
    %v1655 = vmul.f32 %v1654, 1.442695
    %v1656 = vpow.pop %v1655
    %v1657 = vadd.f32 %v1656, 1.0
    %v1658 = vrcp.pop %v1657
    %v1659 = vmul.f32 %v1657, %v1658
    %v1660 = vsub.f32 1.0, %v1659
    %v1661 = vmul.f32 %v1658, %v1660
    %v1662 = vadd.f32 %v1658, %v1661
    %vm1663 = vweird.f32 %v1657
    %vm1664 = vweird.f32 %v1658
    %vm1665 = vmor %vm1663, %vm1664
    %v1666 = vsel %vm1665, %v1658, %v1662
    %v1667 = vand.u32 2147483647, %v1657
    %vm1668 = vcmp.eq.f32.partialorder %v1667, 8.507059e+37
    %v1669 = vand.u32 %v1657, 2147483648
    %v1670 = vor.u32 1.1754944e-38, %v1669
    %v1671 = vsel %vm1668, %v1670, %v1666
    %v1672 = vmul.f32 1.0, %v1671
    %v1673 = vxor.u32 %v1651, 2147483648
    %v1674 = vmul.f32 %v1673, 1.442695
    %v1675 = vpow.pop %v1674
    %v1676 = vadd.f32 %v1675, 1.0
    %v1677 = vrcp.pop %v1676
    %v1678 = vmul.f32 %v1676, %v1677
    %v1679 = vsub.f32 1.0, %v1678
    %v1680 = vmul.f32 %v1677, %v1679
    %v1681 = vadd.f32 %v1677, %v1680
    %vm1682 = vweird.f32 %v1676
    %vm1683 = vweird.f32 %v1677
    %vm1684 = vmor %vm1682, %vm1683
    %v1685 = vsel %vm1684, %v1677, %v1681
    %v1686 = vand.u32 2147483647, %v1676
    %vm1687 = vcmp.eq.f32.partialorder %v1686, 8.507059e+37
    %v1688 = vand.u32 %v1676, 2147483648
    %v1689 = vor.u32 1.1754944e-38, %v1688
    %v1690 = vsel %vm1687, %v1689, %v1685
    %v1691 = vmul.f32 1.0, %v1690
    %v1692 = vtanh.pop %v1652
    %v1693 = vxor.u32 %v1653, 2147483648
    %v1694 = vmul.f32 %v1693, 1.442695
    %v1695 = vpow.pop %v1694
    %v1696 = vadd.f32 %v1695, 1.0
    %v1697 = vrcp.pop %v1696
    %v1698 = vmul.f32 %v1696, %v1697
    %v1699 = vsub.f32 1.0, %v1698
    %v1700 = vmul.f32 %v1697, %v1699
    %v1701 = vadd.f32 %v1697, %v1700
    %vm1702 = vweird.f32 %v1696
    %vm1703 = vweird.f32 %v1697
    %vm1704 = vmor %vm1702, %vm1703
    %v1705 = vsel %vm1704, %v1697, %v1701
    %v1706 = vand.u32 2147483647, %v1696
    %vm1707 = vcmp.eq.f32.partialorder %v1706, 8.507059e+37
    %v1708 = vand.u32 %v1696, 2147483648
    %v1709 = vor.u32 1.1754944e-38, %v1708
    %v1710 = vsel %vm1707, %v1709, %v1705
    %v1711 = vmul.f32 1.0, %v1710
    %v1712 = vmul.f32 %v1691, %v1255
    %v1713 = vmul.f32 %v1672, %v1692
    %v1714 = vadd.f32 %v1712, %v1713
    %v1715 = vtanh.pop %v1714
    %v1716 = vmul.f32 %v1711, %v1715
    %s1717 = scalar_lea.vmem %s0, 6
    %v1718 = vld [vmem:[%s1717] sm:$0x3]
    %1719 = vmatpush.msra.mxu0 %v188
    %1720 = vmatpush.msra.mxu0 %v184
    %1721 = vmatpush.msra.mxu0 %v180
    %1722 = vmatpush.msra.mxu0 %v176
    %1723 = vmatpush.msra.mxu0 %v172
    %1724 = vmatpush.msra.mxu0 %v168
    %1725 = vmatpush.msra.mxu0 %v164
    %1726 = vmatpush.msra.mxu0 %v160
    %1727 = vmatpush.msra.mxu0 %v156
    %1728 = vmatpush.msra.mxu0 %v152
    %1729 = vmatpush.msra.mxu0 %v148
    %1730 = vmatpush.msra.mxu0 %v144
    %1731 = vmatpush.msra.mxu0 %v140
    %1732 = vmatpush.msra.mxu0 %v136
    %1733 = vmatpush.msra.mxu0 %v132
    %1734 = vmatpush.msra.mxu0 %v128
    %1735 = vmatmul.f32.gmra.mxu0 %v1489
    %v1736 = vpop.f32.mrf.mxu0
    %v1737 = vadd.f32 0.0, %v1736
    %1738 = vdwg.mxu0
    %1739 = vmatpush.msra.mxu0 %v189
    %1740 = vmatpush.msra.mxu0 %v185
    %1741 = vmatpush.msra.mxu0 %v181
    %1742 = vmatpush.msra.mxu0 %v177
    %1743 = vmatpush.msra.mxu0 %v173
    %1744 = vmatpush.msra.mxu0 %v169
    %1745 = vmatpush.msra.mxu0 %v165
    %1746 = vmatpush.msra.mxu0 %v161
    %1747 = vmatpush.msra.mxu0 %v157
    %1748 = vmatpush.msra.mxu0 %v153
    %1749 = vmatpush.msra.mxu0 %v149
    %1750 = vmatpush.msra.mxu0 %v145
    %1751 = vmatpush.msra.mxu0 %v141
    %1752 = vmatpush.msra.mxu0 %v137
    %1753 = vmatpush.msra.mxu0 %v133
    %1754 = vmatpush.msra.mxu0 %v129
    %1755 = vmatmul.f32.gmra.mxu0 %v1489
    %v1756 = vpop.f32.mrf.mxu0
    %v1757 = vadd.f32 0.0, %v1756
    %1758 = vdwg.mxu0
    %1759 = vmatpush.msra.mxu0 %v190
    %1760 = vmatpush.msra.mxu0 %v186
    %1761 = vmatpush.msra.mxu0 %v182
    %1762 = vmatpush.msra.mxu0 %v178
    %1763 = vmatpush.msra.mxu0 %v174
    %1764 = vmatpush.msra.mxu0 %v170
    %1765 = vmatpush.msra.mxu0 %v166
    %1766 = vmatpush.msra.mxu0 %v162
    %1767 = vmatpush.msra.mxu0 %v158
    %1768 = vmatpush.msra.mxu0 %v154
    %1769 = vmatpush.msra.mxu0 %v150
    %1770 = vmatpush.msra.mxu0 %v146
    %1771 = vmatpush.msra.mxu0 %v142
    %1772 = vmatpush.msra.mxu0 %v138
    %1773 = vmatpush.msra.mxu0 %v134
    %1774 = vmatpush.msra.mxu0 %v130
    %1775 = vmatmul.f32.gmra.mxu0 %v1489
    %v1776 = vpop.f32.mrf.mxu0
    %v1777 = vadd.f32 0.0, %v1776
    %1778 = vdwg.mxu0
    %1779 = vmatpush.msra.mxu0 %v191
    %1780 = vmatpush.msra.mxu0 %v187
    %1781 = vmatpush.msra.mxu0 %v183
    %1782 = vmatpush.msra.mxu0 %v179
    %1783 = vmatpush.msra.mxu0 %v175
    %1784 = vmatpush.msra.mxu0 %v171
    %1785 = vmatpush.msra.mxu0 %v167
    %1786 = vmatpush.msra.mxu0 %v163
    %1787 = vmatpush.msra.mxu0 %v159
    %1788 = vmatpush.msra.mxu0 %v155
    %1789 = vmatpush.msra.mxu0 %v151
    %1790 = vmatpush.msra.mxu0 %v147
    %1791 = vmatpush.msra.mxu0 %v143
    %1792 = vmatpush.msra.mxu0 %v139
    %1793 = vmatpush.msra.mxu0 %v135
    %1794 = vmatpush.msra.mxu0 %v131
    %1795 = vmatmul.f32.gmra.mxu0 %v1489
    %v1796 = vpop.f32.mrf.mxu0
    %v1797 = vadd.f32 0.0, %v1796
    %1798 = vdwg.mxu0
    %v1800 = vsel %vm403, %v1718, 0
    %1802 = vmatpush.msra.mxu0 0.0
    %1803 = vmatpush.msra.mxu0 0.0
    %1804 = vmatpush.msra.mxu0 0.0
    %1805 = vmatpush.msra.mxu0 0.0
    %1806 = vmatpush.msra.mxu0 0.0
    %1807 = vmatpush.msra.mxu0 0.0
    %1808 = vmatpush.msra.mxu0 0.0
    %1809 = vmatpush.msra.mxu0 0.0
    %1810 = vmatpush.msra.mxu0 %v124
    %1811 = vmatpush.msra.mxu0 %v120
    %1812 = vmatpush.msra.mxu0 %v116
    %1813 = vmatpush.msra.mxu0 %v112
    %1814 = vmatpush.msra.mxu0 %v108
    %1815 = vmatpush.msra.mxu0 %v104
    %1816 = vmatpush.msra.mxu0 %v100
    %1817 = vmatpush.msra.mxu0 %v96
    %1818 = vmatmul.f32.gmra.mxu0 %v1800
    %v1819 = vpop.f32.mrf.mxu0
    %v1820 = vadd.f32 %v1737, %v1819
    %1821 = vdwg.mxu0
    %1822 = vmatpush.msra.mxu0 0.0
    %1823 = vmatpush.msra.mxu0 0.0
    %1824 = vmatpush.msra.mxu0 0.0
    %1825 = vmatpush.msra.mxu0 0.0
    %1826 = vmatpush.msra.mxu0 0.0
    %1827 = vmatpush.msra.mxu0 0.0
    %1828 = vmatpush.msra.mxu0 0.0
    %1829 = vmatpush.msra.mxu0 0.0
    %1830 = vmatpush.msra.mxu0 %v125
    %1831 = vmatpush.msra.mxu0 %v121
    %1832 = vmatpush.msra.mxu0 %v117
    %1833 = vmatpush.msra.mxu0 %v113
    %1834 = vmatpush.msra.mxu0 %v109
    %1835 = vmatpush.msra.mxu0 %v105
    %1836 = vmatpush.msra.mxu0 %v101
    %1837 = vmatpush.msra.mxu0 %v97
    %1838 = vmatmul.f32.gmra.mxu0 %v1800
    %v1839 = vpop.f32.mrf.mxu0
    %v1840 = vadd.f32 %v1757, %v1839
    %1841 = vdwg.mxu0
    %1842 = vmatpush.msra.mxu0 0.0
    %1843 = vmatpush.msra.mxu0 0.0
    %1844 = vmatpush.msra.mxu0 0.0
    %1845 = vmatpush.msra.mxu0 0.0
    %1846 = vmatpush.msra.mxu0 0.0
    %1847 = vmatpush.msra.mxu0 0.0
    %1848 = vmatpush.msra.mxu0 0.0
    %1849 = vmatpush.msra.mxu0 0.0
    %1850 = vmatpush.msra.mxu0 %v126
    %1851 = vmatpush.msra.mxu0 %v122
    %1852 = vmatpush.msra.mxu0 %v118
    %1853 = vmatpush.msra.mxu0 %v114
    %1854 = vmatpush.msra.mxu0 %v110
    %1855 = vmatpush.msra.mxu0 %v106
    %1856 = vmatpush.msra.mxu0 %v102
    %1857 = vmatpush.msra.mxu0 %v98
    %1858 = vmatmul.f32.gmra.mxu0 %v1800
    %v1859 = vpop.f32.mrf.mxu0
    %v1860 = vadd.f32 %v1777, %v1859
    %1861 = vdwg.mxu0
    %1862 = vmatpush.msra.mxu0 0.0
    %1863 = vmatpush.msra.mxu0 0.0
    %1864 = vmatpush.msra.mxu0 0.0
    %1865 = vmatpush.msra.mxu0 0.0
    %1866 = vmatpush.msra.mxu0 0.0
    %1867 = vmatpush.msra.mxu0 0.0
    %1868 = vmatpush.msra.mxu0 0.0
    %1869 = vmatpush.msra.mxu0 0.0
    %1870 = vmatpush.msra.mxu0 %v127
    %1871 = vmatpush.msra.mxu0 %v123
    %1872 = vmatpush.msra.mxu0 %v119
    %1873 = vmatpush.msra.mxu0 %v115
    %1874 = vmatpush.msra.mxu0 %v111
    %1875 = vmatpush.msra.mxu0 %v107
    %1876 = vmatpush.msra.mxu0 %v103
    %1877 = vmatpush.msra.mxu0 %v99
    %1878 = vmatmul.f32.gmra.mxu0 %v1800
    %v1879 = vpop.f32.mrf.mxu0
    %v1880 = vadd.f32 %v1797, %v1879
    %1881 = vdwg.mxu0
    %v1882 = vadd.f32 %v1820, %v488
    %v1883 = vadd.f32 %v1840, %v489
    %v1884 = vadd.f32 %v1860, %v490
    %v1885 = vadd.f32 %v1880, %v491
    %v1886 = vxor.u32 %v1882, 2147483648
    %v1887 = vmul.f32 %v1886, 1.442695
    %v1888 = vpow.pop %v1887
    %v1889 = vadd.f32 %v1888, 1.0
    %v1890 = vrcp.pop %v1889
    %v1891 = vmul.f32 %v1889, %v1890
    %v1892 = vsub.f32 1.0, %v1891
    %v1893 = vmul.f32 %v1890, %v1892
    %v1894 = vadd.f32 %v1890, %v1893
    %vm1895 = vweird.f32 %v1889
    %vm1896 = vweird.f32 %v1890
    %vm1897 = vmor %vm1895, %vm1896
    %v1898 = vsel %vm1897, %v1890, %v1894
    %v1899 = vand.u32 2147483647, %v1889
    %vm1900 = vcmp.eq.f32.partialorder %v1899, 8.507059e+37
    %v1901 = vand.u32 %v1889, 2147483648
    %v1902 = vor.u32 1.1754944e-38, %v1901
    %v1903 = vsel %vm1900, %v1902, %v1898
    %v1904 = vmul.f32 1.0, %v1903
    %v1905 = vxor.u32 %v1883, 2147483648
    %v1906 = vmul.f32 %v1905, 1.442695
    %v1907 = vpow.pop %v1906
    %v1908 = vadd.f32 %v1907, 1.0
    %v1909 = vrcp.pop %v1908
    %v1910 = vmul.f32 %v1908, %v1909
    %v1911 = vsub.f32 1.0, %v1910
    %v1912 = vmul.f32 %v1909, %v1911
    %v1913 = vadd.f32 %v1909, %v1912
    %vm1914 = vweird.f32 %v1908
    %vm1915 = vweird.f32 %v1909
    %vm1916 = vmor %vm1914, %vm1915
    %v1917 = vsel %vm1916, %v1909, %v1913
    %v1918 = vand.u32 2147483647, %v1908
    %vm1919 = vcmp.eq.f32.partialorder %v1918, 8.507059e+37
    %v1920 = vand.u32 %v1908, 2147483648
    %v1921 = vor.u32 1.1754944e-38, %v1920
    %v1922 = vsel %vm1919, %v1921, %v1917
    %v1923 = vmul.f32 1.0, %v1922
    %v1924 = vtanh.pop %v1884
    %v1925 = vxor.u32 %v1885, 2147483648
    %v1926 = vmul.f32 %v1925, 1.442695
    %v1927 = vpow.pop %v1926
    %v1928 = vadd.f32 %v1927, 1.0
    %v1929 = vrcp.pop %v1928
    %v1930 = vmul.f32 %v1928, %v1929
    %v1931 = vsub.f32 1.0, %v1930
    %v1932 = vmul.f32 %v1929, %v1931
    %v1933 = vadd.f32 %v1929, %v1932
    %vm1934 = vweird.f32 %v1928
    %vm1935 = vweird.f32 %v1929
    %vm1936 = vmor %vm1934, %vm1935
    %v1937 = vsel %vm1936, %v1929, %v1933
    %v1938 = vand.u32 2147483647, %v1928
    %vm1939 = vcmp.eq.f32.partialorder %v1938, 8.507059e+37
    %v1940 = vand.u32 %v1928, 2147483648
    %v1941 = vor.u32 1.1754944e-38, %v1940
    %v1942 = vsel %vm1939, %v1941, %v1937
    %v1943 = vmul.f32 1.0, %v1942
    %v1944 = vmul.f32 %v1923, %v1487
    %v1945 = vmul.f32 %v1904, %v1924
    %v1946 = vadd.f32 %v1944, %v1945
    %v1947 = vtanh.pop %v1946
    %v1948 = vmul.f32 %v1943, %v1947
    %1949 = vmatpush.msra.mxu0 %v317
    %1950 = vmatpush.msra.mxu0 %v313
    %1951 = vmatpush.msra.mxu0 %v309
    %1952 = vmatpush.msra.mxu0 %v305
    %1953 = vmatpush.msra.mxu0 %v301
    %1954 = vmatpush.msra.mxu0 %v297
    %1955 = vmatpush.msra.mxu0 %v293
    %1956 = vmatpush.msra.mxu0 %v289
    %1957 = vmatpush.msra.mxu0 %v285
    %1958 = vmatpush.msra.mxu0 %v281
    %1959 = vmatpush.msra.mxu0 %v277
    %1960 = vmatpush.msra.mxu0 %v273
    %1961 = vmatpush.msra.mxu0 %v269
    %1962 = vmatpush.msra.mxu0 %v265
    %1963 = vmatpush.msra.mxu0 %v261
    %1964 = vmatpush.msra.mxu0 %v257
    %1965 = vmatmul.f32.gmra.mxu0 %v1716
    %v1966 = vpop.f32.mrf.mxu0
    %v1967 = vadd.f32 0.0, %v1966
    %1968 = vdwg.mxu0
    %1969 = vmatpush.msra.mxu0 %v318
    %1970 = vmatpush.msra.mxu0 %v314
    %1971 = vmatpush.msra.mxu0 %v310
    %1972 = vmatpush.msra.mxu0 %v306
    %1973 = vmatpush.msra.mxu0 %v302
    %1974 = vmatpush.msra.mxu0 %v298
    %1975 = vmatpush.msra.mxu0 %v294
    %1976 = vmatpush.msra.mxu0 %v290
    %1977 = vmatpush.msra.mxu0 %v286
    %1978 = vmatpush.msra.mxu0 %v282
    %1979 = vmatpush.msra.mxu0 %v278
    %1980 = vmatpush.msra.mxu0 %v274
    %1981 = vmatpush.msra.mxu0 %v270
    %1982 = vmatpush.msra.mxu0 %v266
    %1983 = vmatpush.msra.mxu0 %v262
    %1984 = vmatpush.msra.mxu0 %v258
    %1985 = vmatmul.f32.gmra.mxu0 %v1716
    %v1986 = vpop.f32.mrf.mxu0
    %v1987 = vadd.f32 0.0, %v1986
    %1988 = vdwg.mxu0
    %1989 = vmatpush.msra.mxu0 %v319
    %1990 = vmatpush.msra.mxu0 %v315
    %1991 = vmatpush.msra.mxu0 %v311
    %1992 = vmatpush.msra.mxu0 %v307
    %1993 = vmatpush.msra.mxu0 %v303
    %1994 = vmatpush.msra.mxu0 %v299
    %1995 = vmatpush.msra.mxu0 %v295
    %1996 = vmatpush.msra.mxu0 %v291
    %1997 = vmatpush.msra.mxu0 %v287
    %1998 = vmatpush.msra.mxu0 %v283
    %1999 = vmatpush.msra.mxu0 %v279
    %2000 = vmatpush.msra.mxu0 %v275
    %2001 = vmatpush.msra.mxu0 %v271
    %2002 = vmatpush.msra.mxu0 %v267
    %2003 = vmatpush.msra.mxu0 %v263
    %2004 = vmatpush.msra.mxu0 %v259
    %2005 = vmatmul.f32.gmra.mxu0 %v1716
    %v2006 = vpop.f32.mrf.mxu0
    %v2007 = vadd.f32 0.0, %v2006
    %2008 = vdwg.mxu0
    %2009 = vmatpush.msra.mxu0 %v320
    %2010 = vmatpush.msra.mxu0 %v316
    %2011 = vmatpush.msra.mxu0 %v312
    %2012 = vmatpush.msra.mxu0 %v308
    %2013 = vmatpush.msra.mxu0 %v304
    %2014 = vmatpush.msra.mxu0 %v300
    %2015 = vmatpush.msra.mxu0 %v296
    %2016 = vmatpush.msra.mxu0 %v292
    %2017 = vmatpush.msra.mxu0 %v288
    %2018 = vmatpush.msra.mxu0 %v284
    %2019 = vmatpush.msra.mxu0 %v280
    %2020 = vmatpush.msra.mxu0 %v276
    %2021 = vmatpush.msra.mxu0 %v272
    %2022 = vmatpush.msra.mxu0 %v268
    %2023 = vmatpush.msra.mxu0 %v264
    %2024 = vmatpush.msra.mxu0 %v260
    %2025 = vmatmul.f32.gmra.mxu0 %v1716
    %v2026 = vpop.f32.mrf.mxu0
    %v2027 = vadd.f32 0.0, %v2026
    %2028 = vdwg.mxu0
    %2029 = vmatpush.msra.mxu0 %v253
    %2030 = vmatpush.msra.mxu0 %v249
    %2031 = vmatpush.msra.mxu0 %v245
    %2032 = vmatpush.msra.mxu0 %v241
    %2033 = vmatpush.msra.mxu0 %v237
    %2034 = vmatpush.msra.mxu0 %v233
    %2035 = vmatpush.msra.mxu0 %v229
    %2036 = vmatpush.msra.mxu0 %v225
    %2037 = vmatpush.msra.mxu0 %v221
    %2038 = vmatpush.msra.mxu0 %v217
    %2039 = vmatpush.msra.mxu0 %v213
    %2040 = vmatpush.msra.mxu0 %v209
    %2041 = vmatpush.msra.mxu0 %v205
    %2042 = vmatpush.msra.mxu0 %v201
    %2043 = vmatpush.msra.mxu0 %v197
    %2044 = vmatpush.msra.mxu0 %v193
    %2045 = vmatmul.f32.gmra.mxu0 %v1948
    %v2046 = vpop.f32.mrf.mxu0
    %v2047 = vadd.f32 %v1967, %v2046
    %2048 = vdwg.mxu0
    %2049 = vmatpush.msra.mxu0 %v254
    %2050 = vmatpush.msra.mxu0 %v250
    %2051 = vmatpush.msra.mxu0 %v246
    %2052 = vmatpush.msra.mxu0 %v242
    %2053 = vmatpush.msra.mxu0 %v238
    %2054 = vmatpush.msra.mxu0 %v234
    %2055 = vmatpush.msra.mxu0 %v230
    %2056 = vmatpush.msra.mxu0 %v226
    %2057 = vmatpush.msra.mxu0 %v222
    %2058 = vmatpush.msra.mxu0 %v218
    %2059 = vmatpush.msra.mxu0 %v214
    %2060 = vmatpush.msra.mxu0 %v210
    %2061 = vmatpush.msra.mxu0 %v206
    %2062 = vmatpush.msra.mxu0 %v202
    %2063 = vmatpush.msra.mxu0 %v198
    %2064 = vmatpush.msra.mxu0 %v194
    %2065 = vmatmul.f32.gmra.mxu0 %v1948
    %v2066 = vpop.f32.mrf.mxu0
    %v2067 = vadd.f32 %v1987, %v2066
    %2068 = vdwg.mxu0
    %2069 = vmatpush.msra.mxu0 %v255
    %2070 = vmatpush.msra.mxu0 %v251
    %2071 = vmatpush.msra.mxu0 %v247
    %2072 = vmatpush.msra.mxu0 %v243
    %2073 = vmatpush.msra.mxu0 %v239
    %2074 = vmatpush.msra.mxu0 %v235
    %2075 = vmatpush.msra.mxu0 %v231
    %2076 = vmatpush.msra.mxu0 %v227
    %2077 = vmatpush.msra.mxu0 %v223
    %2078 = vmatpush.msra.mxu0 %v219
    %2079 = vmatpush.msra.mxu0 %v215
    %2080 = vmatpush.msra.mxu0 %v211
    %2081 = vmatpush.msra.mxu0 %v207
    %2082 = vmatpush.msra.mxu0 %v203
    %2083 = vmatpush.msra.mxu0 %v199
    %2084 = vmatpush.msra.mxu0 %v195
    %2085 = vmatmul.f32.gmra.mxu0 %v1948
    %v2086 = vpop.f32.mrf.mxu0
    %v2087 = vadd.f32 %v2007, %v2086
    %2088 = vdwg.mxu0
    %2089 = vmatpush.msra.mxu0 %v256
    %2090 = vmatpush.msra.mxu0 %v252
    %2091 = vmatpush.msra.mxu0 %v248
    %2092 = vmatpush.msra.mxu0 %v244
    %2093 = vmatpush.msra.mxu0 %v240
    %2094 = vmatpush.msra.mxu0 %v236
    %2095 = vmatpush.msra.mxu0 %v232
    %2096 = vmatpush.msra.mxu0 %v228
    %2097 = vmatpush.msra.mxu0 %v224
    %2098 = vmatpush.msra.mxu0 %v220
    %2099 = vmatpush.msra.mxu0 %v216
    %2100 = vmatpush.msra.mxu0 %v212
    %2101 = vmatpush.msra.mxu0 %v208
    %2102 = vmatpush.msra.mxu0 %v204
    %2103 = vmatpush.msra.mxu0 %v200
    %2104 = vmatpush.msra.mxu0 %v196
    %2105 = vmatmul.f32.gmra.mxu0 %v1948
    %v2106 = vpop.f32.mrf.mxu0
    %v2107 = vadd.f32 %v2027, %v2106
    %2108 = vdwg.mxu0
    %v2109 = vadd.f32 %v2047, %v724
    %v2110 = vadd.f32 %v2067, %v725
    %v2111 = vadd.f32 %v2087, %v726
    %v2112 = vadd.f32 %v2107, %v727
    %v2113 = vxor.u32 %v2109, 2147483648
    %v2114 = vmul.f32 %v2113, 1.442695
    %v2115 = vpow.pop %v2114
    %v2116 = vadd.f32 %v2115, 1.0
    %v2117 = vrcp.pop %v2116
    %v2118 = vmul.f32 %v2116, %v2117
    %v2119 = vsub.f32 1.0, %v2118
    %v2120 = vmul.f32 %v2117, %v2119
    %v2121 = vadd.f32 %v2117, %v2120
    %vm2122 = vweird.f32 %v2116
    %vm2123 = vweird.f32 %v2117
    %vm2124 = vmor %vm2122, %vm2123
    %v2125 = vsel %vm2124, %v2117, %v2121
    %v2126 = vand.u32 2147483647, %v2116
    %vm2127 = vcmp.eq.f32.partialorder %v2126, 8.507059e+37
    %v2128 = vand.u32 %v2116, 2147483648
    %v2129 = vor.u32 1.1754944e-38, %v2128
    %v2130 = vsel %vm2127, %v2129, %v2125
    %v2131 = vmul.f32 1.0, %v2130
    %v2132 = vxor.u32 %v2110, 2147483648
    %v2133 = vmul.f32 %v2132, 1.442695
    %v2134 = vpow.pop %v2133
    %v2135 = vadd.f32 %v2134, 1.0
    %v2136 = vrcp.pop %v2135
    %v2137 = vmul.f32 %v2135, %v2136
    %v2138 = vsub.f32 1.0, %v2137
    %v2139 = vmul.f32 %v2136, %v2138
    %v2140 = vadd.f32 %v2136, %v2139
    %vm2141 = vweird.f32 %v2135
    %vm2142 = vweird.f32 %v2136
    %vm2143 = vmor %vm2141, %vm2142
    %v2144 = vsel %vm2143, %v2136, %v2140
    %v2145 = vand.u32 2147483647, %v2135
    %vm2146 = vcmp.eq.f32.partialorder %v2145, 8.507059e+37
    %v2147 = vand.u32 %v2135, 2147483648
    %v2148 = vor.u32 1.1754944e-38, %v2147
    %v2149 = vsel %vm2146, %v2148, %v2144
    %v2150 = vmul.f32 1.0, %v2149
    %v2151 = vtanh.pop %v2111
    %v2152 = vxor.u32 %v2112, 2147483648
    %v2153 = vmul.f32 %v2152, 1.442695
    %v2154 = vpow.pop %v2153
    %v2155 = vadd.f32 %v2154, 1.0
    %v2156 = vrcp.pop %v2155
    %v2157 = vmul.f32 %v2155, %v2156
    %v2158 = vsub.f32 1.0, %v2157
    %v2159 = vmul.f32 %v2156, %v2158
    %v2160 = vadd.f32 %v2156, %v2159
    %vm2161 = vweird.f32 %v2155
    %vm2162 = vweird.f32 %v2156
    %vm2163 = vmor %vm2161, %vm2162
    %v2164 = vsel %vm2163, %v2156, %v2160
    %v2165 = vand.u32 2147483647, %v2155
    %vm2166 = vcmp.eq.f32.partialorder %v2165, 8.507059e+37
    %v2167 = vand.u32 %v2155, 2147483648
    %v2168 = vor.u32 1.1754944e-38, %v2167
    %v2169 = vsel %vm2166, %v2168, %v2164
    %v2170 = vmul.f32 1.0, %v2169
    %v2171 = vmul.f32 %v2150, %v1714
    %v2172 = vmul.f32 %v2131, %v2151
    %v2173 = vadd.f32 %v2171, %v2172
    %v2174 = vtanh.pop %v2173
    %v2175 = vmul.f32 %v2170, %v2174
    %s2176 = scalar_lea.vmem %s0, 8
    %v2177 = vld [vmem:[%s2176] sm:$0x3]
    %2178 = vmatpush.msra.mxu0 %v188
    %2179 = vmatpush.msra.mxu0 %v184
    %2180 = vmatpush.msra.mxu0 %v180
    %2181 = vmatpush.msra.mxu0 %v176
    %2182 = vmatpush.msra.mxu0 %v172
    %2183 = vmatpush.msra.mxu0 %v168
    %2184 = vmatpush.msra.mxu0 %v164
    %2185 = vmatpush.msra.mxu0 %v160
    %2186 = vmatpush.msra.mxu0 %v156
    %2187 = vmatpush.msra.mxu0 %v152
    %2188 = vmatpush.msra.mxu0 %v148
    %2189 = vmatpush.msra.mxu0 %v144
    %2190 = vmatpush.msra.mxu0 %v140
    %2191 = vmatpush.msra.mxu0 %v136
    %2192 = vmatpush.msra.mxu0 %v132
    %2193 = vmatpush.msra.mxu0 %v128
    %2194 = vmatmul.f32.gmra.mxu0 %v1948
    %v2195 = vpop.f32.mrf.mxu0
    %v2196 = vadd.f32 0.0, %v2195
    %2197 = vdwg.mxu0
    %2198 = vmatpush.msra.mxu0 %v189
    %2199 = vmatpush.msra.mxu0 %v185
    %2200 = vmatpush.msra.mxu0 %v181
    %2201 = vmatpush.msra.mxu0 %v177
    %2202 = vmatpush.msra.mxu0 %v173
    %2203 = vmatpush.msra.mxu0 %v169
    %2204 = vmatpush.msra.mxu0 %v165
    %2205 = vmatpush.msra.mxu0 %v161
    %2206 = vmatpush.msra.mxu0 %v157
    %2207 = vmatpush.msra.mxu0 %v153
    %2208 = vmatpush.msra.mxu0 %v149
    %2209 = vmatpush.msra.mxu0 %v145
    %2210 = vmatpush.msra.mxu0 %v141
    %2211 = vmatpush.msra.mxu0 %v137
    %2212 = vmatpush.msra.mxu0 %v133
    %2213 = vmatpush.msra.mxu0 %v129
    %2214 = vmatmul.f32.gmra.mxu0 %v1948
    %v2215 = vpop.f32.mrf.mxu0
    %v2216 = vadd.f32 0.0, %v2215
    %2217 = vdwg.mxu0
    %2218 = vmatpush.msra.mxu0 %v190
    %2219 = vmatpush.msra.mxu0 %v186
    %2220 = vmatpush.msra.mxu0 %v182
    %2221 = vmatpush.msra.mxu0 %v178
    %2222 = vmatpush.msra.mxu0 %v174
    %2223 = vmatpush.msra.mxu0 %v170
    %2224 = vmatpush.msra.mxu0 %v166
    %2225 = vmatpush.msra.mxu0 %v162
    %2226 = vmatpush.msra.mxu0 %v158
    %2227 = vmatpush.msra.mxu0 %v154
    %2228 = vmatpush.msra.mxu0 %v150
    %2229 = vmatpush.msra.mxu0 %v146
    %2230 = vmatpush.msra.mxu0 %v142
    %2231 = vmatpush.msra.mxu0 %v138
    %2232 = vmatpush.msra.mxu0 %v134
    %2233 = vmatpush.msra.mxu0 %v130
    %2234 = vmatmul.f32.gmra.mxu0 %v1948
    %v2235 = vpop.f32.mrf.mxu0
    %v2236 = vadd.f32 0.0, %v2235
    %2237 = vdwg.mxu0
    %2238 = vmatpush.msra.mxu0 %v191
    %2239 = vmatpush.msra.mxu0 %v187
    %2240 = vmatpush.msra.mxu0 %v183
    %2241 = vmatpush.msra.mxu0 %v179
    %2242 = vmatpush.msra.mxu0 %v175
    %2243 = vmatpush.msra.mxu0 %v171
    %2244 = vmatpush.msra.mxu0 %v167
    %2245 = vmatpush.msra.mxu0 %v163
    %2246 = vmatpush.msra.mxu0 %v159
    %2247 = vmatpush.msra.mxu0 %v155
    %2248 = vmatpush.msra.mxu0 %v151
    %2249 = vmatpush.msra.mxu0 %v147
    %2250 = vmatpush.msra.mxu0 %v143
    %2251 = vmatpush.msra.mxu0 %v139
    %2252 = vmatpush.msra.mxu0 %v135
    %2253 = vmatpush.msra.mxu0 %v131
    %2254 = vmatmul.f32.gmra.mxu0 %v1948
    %v2255 = vpop.f32.mrf.mxu0
    %v2256 = vadd.f32 0.0, %v2255
    %2257 = vdwg.mxu0
    %v2259 = vsel %vm403, %v2177, 0
    %2261 = vmatpush.msra.mxu0 0.0
    %2262 = vmatpush.msra.mxu0 0.0
    %2263 = vmatpush.msra.mxu0 0.0
    %2264 = vmatpush.msra.mxu0 0.0
    %2265 = vmatpush.msra.mxu0 0.0
    %2266 = vmatpush.msra.mxu0 0.0
    %2267 = vmatpush.msra.mxu0 0.0
    %2268 = vmatpush.msra.mxu0 0.0
    %2269 = vmatpush.msra.mxu0 %v124
    %2270 = vmatpush.msra.mxu0 %v120
    %2271 = vmatpush.msra.mxu0 %v116
    %2272 = vmatpush.msra.mxu0 %v112
    %2273 = vmatpush.msra.mxu0 %v108
    %2274 = vmatpush.msra.mxu0 %v104
    %2275 = vmatpush.msra.mxu0 %v100
    %2276 = vmatpush.msra.mxu0 %v96
    %2277 = vmatmul.f32.gmra.mxu0 %v2259
    %v2278 = vpop.f32.mrf.mxu0
    %v2279 = vadd.f32 %v2196, %v2278
    %2280 = vdwg.mxu0
    %2281 = vmatpush.msra.mxu0 0.0
    %2282 = vmatpush.msra.mxu0 0.0
    %2283 = vmatpush.msra.mxu0 0.0
    %2284 = vmatpush.msra.mxu0 0.0
    %2285 = vmatpush.msra.mxu0 0.0
    %2286 = vmatpush.msra.mxu0 0.0
    %2287 = vmatpush.msra.mxu0 0.0
    %2288 = vmatpush.msra.mxu0 0.0
    %2289 = vmatpush.msra.mxu0 %v125
    %2290 = vmatpush.msra.mxu0 %v121
    %2291 = vmatpush.msra.mxu0 %v117
    %2292 = vmatpush.msra.mxu0 %v113
    %2293 = vmatpush.msra.mxu0 %v109
    %2294 = vmatpush.msra.mxu0 %v105
    %2295 = vmatpush.msra.mxu0 %v101
    %2296 = vmatpush.msra.mxu0 %v97
    %2297 = vmatmul.f32.gmra.mxu0 %v2259
    %v2298 = vpop.f32.mrf.mxu0
    %v2299 = vadd.f32 %v2216, %v2298
    %2300 = vdwg.mxu0
    %2301 = vmatpush.msra.mxu0 0.0
    %2302 = vmatpush.msra.mxu0 0.0
    %2303 = vmatpush.msra.mxu0 0.0
    %2304 = vmatpush.msra.mxu0 0.0
    %2305 = vmatpush.msra.mxu0 0.0
    %2306 = vmatpush.msra.mxu0 0.0
    %2307 = vmatpush.msra.mxu0 0.0
    %2308 = vmatpush.msra.mxu0 0.0
    %2309 = vmatpush.msra.mxu0 %v126
    %2310 = vmatpush.msra.mxu0 %v122
    %2311 = vmatpush.msra.mxu0 %v118
    %2312 = vmatpush.msra.mxu0 %v114
    %2313 = vmatpush.msra.mxu0 %v110
    %2314 = vmatpush.msra.mxu0 %v106
    %2315 = vmatpush.msra.mxu0 %v102
    %2316 = vmatpush.msra.mxu0 %v98
    %2317 = vmatmul.f32.gmra.mxu0 %v2259
    %v2318 = vpop.f32.mrf.mxu0
    %v2319 = vadd.f32 %v2236, %v2318
    %2320 = vdwg.mxu0
    %2321 = vmatpush.msra.mxu0 0.0
    %2322 = vmatpush.msra.mxu0 0.0
    %2323 = vmatpush.msra.mxu0 0.0
    %2324 = vmatpush.msra.mxu0 0.0
    %2325 = vmatpush.msra.mxu0 0.0
    %2326 = vmatpush.msra.mxu0 0.0
    %2327 = vmatpush.msra.mxu0 0.0
    %2328 = vmatpush.msra.mxu0 0.0
    %2329 = vmatpush.msra.mxu0 %v127
    %2330 = vmatpush.msra.mxu0 %v123
    %2331 = vmatpush.msra.mxu0 %v119
    %2332 = vmatpush.msra.mxu0 %v115
    %2333 = vmatpush.msra.mxu0 %v111
    %2334 = vmatpush.msra.mxu0 %v107
    %2335 = vmatpush.msra.mxu0 %v103
    %2336 = vmatpush.msra.mxu0 %v99
    %2337 = vmatmul.f32.gmra.mxu0 %v2259
    %v2338 = vpop.f32.mrf.mxu0
    %v2339 = vadd.f32 %v2256, %v2338
    %2340 = vdwg.mxu0
    %v2341 = vadd.f32 %v2279, %v488
    %v2342 = vadd.f32 %v2299, %v489
    %v2343 = vadd.f32 %v2319, %v490
    %v2344 = vadd.f32 %v2339, %v491
    %v2345 = vxor.u32 %v2341, 2147483648
    %v2346 = vmul.f32 %v2345, 1.442695
    %v2347 = vpow.pop %v2346
    %v2348 = vadd.f32 %v2347, 1.0
    %v2349 = vrcp.pop %v2348
    %v2350 = vmul.f32 %v2348, %v2349
    %v2351 = vsub.f32 1.0, %v2350
    %v2352 = vmul.f32 %v2349, %v2351
    %v2353 = vadd.f32 %v2349, %v2352
    %vm2354 = vweird.f32 %v2348
    %vm2355 = vweird.f32 %v2349
    %vm2356 = vmor %vm2354, %vm2355
    %v2357 = vsel %vm2356, %v2349, %v2353
    %v2358 = vand.u32 2147483647, %v2348
    %vm2359 = vcmp.eq.f32.partialorder %v2358, 8.507059e+37
    %v2360 = vand.u32 %v2348, 2147483648
    %v2361 = vor.u32 1.1754944e-38, %v2360
    %v2362 = vsel %vm2359, %v2361, %v2357
    %v2363 = vmul.f32 1.0, %v2362
    %v2364 = vxor.u32 %v2342, 2147483648
    %v2365 = vmul.f32 %v2364, 1.442695
    %v2366 = vpow.pop %v2365
    %v2367 = vadd.f32 %v2366, 1.0
    %v2368 = vrcp.pop %v2367
    %v2369 = vmul.f32 %v2367, %v2368
    %v2370 = vsub.f32 1.0, %v2369
    %v2371 = vmul.f32 %v2368, %v2370
    %v2372 = vadd.f32 %v2368, %v2371
    %vm2373 = vweird.f32 %v2367
    %vm2374 = vweird.f32 %v2368
    %vm2375 = vmor %vm2373, %vm2374
    %v2376 = vsel %vm2375, %v2368, %v2372
    %v2377 = vand.u32 2147483647, %v2367
    %vm2378 = vcmp.eq.f32.partialorder %v2377, 8.507059e+37
    %v2379 = vand.u32 %v2367, 2147483648
    %v2380 = vor.u32 1.1754944e-38, %v2379
    %v2381 = vsel %vm2378, %v2380, %v2376
    %v2382 = vmul.f32 1.0, %v2381
    %v2383 = vtanh.pop %v2343
    %v2384 = vxor.u32 %v2344, 2147483648
    %v2385 = vmul.f32 %v2384, 1.442695
    %v2386 = vpow.pop %v2385
    %v2387 = vadd.f32 %v2386, 1.0
    %v2388 = vrcp.pop %v2387
    %v2389 = vmul.f32 %v2387, %v2388
    %v2390 = vsub.f32 1.0, %v2389
    %v2391 = vmul.f32 %v2388, %v2390
    %v2392 = vadd.f32 %v2388, %v2391
    %vm2393 = vweird.f32 %v2387
    %vm2394 = vweird.f32 %v2388
    %vm2395 = vmor %vm2393, %vm2394
    %v2396 = vsel %vm2395, %v2388, %v2392
    %v2397 = vand.u32 2147483647, %v2387
    %vm2398 = vcmp.eq.f32.partialorder %v2397, 8.507059e+37
    %v2399 = vand.u32 %v2387, 2147483648
    %v2400 = vor.u32 1.1754944e-38, %v2399
    %v2401 = vsel %vm2398, %v2400, %v2396
    %v2402 = vmul.f32 1.0, %v2401
    %v2403 = vmul.f32 %v2382, %v1946
    %v2404 = vmul.f32 %v2363, %v2383
    %v2405 = vadd.f32 %v2403, %v2404
    %v2406 = vtanh.pop %v2405
    %v2407 = vmul.f32 %v2402, %v2406
    %2408 = vmatpush.msra.mxu0 %v317
    %2409 = vmatpush.msra.mxu0 %v313
    %2410 = vmatpush.msra.mxu0 %v309
    %2411 = vmatpush.msra.mxu0 %v305
    %2412 = vmatpush.msra.mxu0 %v301
    %2413 = vmatpush.msra.mxu0 %v297
    %2414 = vmatpush.msra.mxu0 %v293
    %2415 = vmatpush.msra.mxu0 %v289
    %2416 = vmatpush.msra.mxu0 %v285
    %2417 = vmatpush.msra.mxu0 %v281
    %2418 = vmatpush.msra.mxu0 %v277
    %2419 = vmatpush.msra.mxu0 %v273
    %2420 = vmatpush.msra.mxu0 %v269
    %2421 = vmatpush.msra.mxu0 %v265
    %2422 = vmatpush.msra.mxu0 %v261
    %2423 = vmatpush.msra.mxu0 %v257
    %2424 = vmatmul.f32.gmra.mxu0 %v2175
    %v2425 = vpop.f32.mrf.mxu0
    %v2426 = vadd.f32 0.0, %v2425
    %2427 = vdwg.mxu0
    %2428 = vmatpush.msra.mxu0 %v318
    %2429 = vmatpush.msra.mxu0 %v314
    %2430 = vmatpush.msra.mxu0 %v310
    %2431 = vmatpush.msra.mxu0 %v306
    %2432 = vmatpush.msra.mxu0 %v302
    %2433 = vmatpush.msra.mxu0 %v298
    %2434 = vmatpush.msra.mxu0 %v294
    %2435 = vmatpush.msra.mxu0 %v290
    %2436 = vmatpush.msra.mxu0 %v286
    %2437 = vmatpush.msra.mxu0 %v282
    %2438 = vmatpush.msra.mxu0 %v278
    %2439 = vmatpush.msra.mxu0 %v274
    %2440 = vmatpush.msra.mxu0 %v270
    %2441 = vmatpush.msra.mxu0 %v266
    %2442 = vmatpush.msra.mxu0 %v262
    %2443 = vmatpush.msra.mxu0 %v258
    %2444 = vmatmul.f32.gmra.mxu0 %v2175
    %v2445 = vpop.f32.mrf.mxu0
    %v2446 = vadd.f32 0.0, %v2445
    %2447 = vdwg.mxu0
    %2448 = vmatpush.msra.mxu0 %v319
    %2449 = vmatpush.msra.mxu0 %v315
    %2450 = vmatpush.msra.mxu0 %v311
    %2451 = vmatpush.msra.mxu0 %v307
    %2452 = vmatpush.msra.mxu0 %v303
    %2453 = vmatpush.msra.mxu0 %v299
    %2454 = vmatpush.msra.mxu0 %v295
    %2455 = vmatpush.msra.mxu0 %v291
    %2456 = vmatpush.msra.mxu0 %v287
    %2457 = vmatpush.msra.mxu0 %v283
    %2458 = vmatpush.msra.mxu0 %v279
    %2459 = vmatpush.msra.mxu0 %v275
    %2460 = vmatpush.msra.mxu0 %v271
    %2461 = vmatpush.msra.mxu0 %v267
    %2462 = vmatpush.msra.mxu0 %v263
    %2463 = vmatpush.msra.mxu0 %v259
    %2464 = vmatmul.f32.gmra.mxu0 %v2175
    %v2465 = vpop.f32.mrf.mxu0
    %v2466 = vadd.f32 0.0, %v2465
    %2467 = vdwg.mxu0
    %2468 = vmatpush.msra.mxu0 %v320
    %2469 = vmatpush.msra.mxu0 %v316
    %2470 = vmatpush.msra.mxu0 %v312
    %2471 = vmatpush.msra.mxu0 %v308
    %2472 = vmatpush.msra.mxu0 %v304
    %2473 = vmatpush.msra.mxu0 %v300
    %2474 = vmatpush.msra.mxu0 %v296
    %2475 = vmatpush.msra.mxu0 %v292
    %2476 = vmatpush.msra.mxu0 %v288
    %2477 = vmatpush.msra.mxu0 %v284
    %2478 = vmatpush.msra.mxu0 %v280
    %2479 = vmatpush.msra.mxu0 %v276
    %2480 = vmatpush.msra.mxu0 %v272
    %2481 = vmatpush.msra.mxu0 %v268
    %2482 = vmatpush.msra.mxu0 %v264
    %2483 = vmatpush.msra.mxu0 %v260
    %2484 = vmatmul.f32.gmra.mxu0 %v2175
    %v2485 = vpop.f32.mrf.mxu0
    %v2486 = vadd.f32 0.0, %v2485
    %2487 = vdwg.mxu0
    %2488 = vmatpush.msra.mxu0 %v253
    %2489 = vmatpush.msra.mxu0 %v249
    %2490 = vmatpush.msra.mxu0 %v245
    %2491 = vmatpush.msra.mxu0 %v241
    %2492 = vmatpush.msra.mxu0 %v237
    %2493 = vmatpush.msra.mxu0 %v233
    %2494 = vmatpush.msra.mxu0 %v229
    %2495 = vmatpush.msra.mxu0 %v225
    %2496 = vmatpush.msra.mxu0 %v221
    %2497 = vmatpush.msra.mxu0 %v217
    %2498 = vmatpush.msra.mxu0 %v213
    %2499 = vmatpush.msra.mxu0 %v209
    %2500 = vmatpush.msra.mxu0 %v205
    %2501 = vmatpush.msra.mxu0 %v201
    %2502 = vmatpush.msra.mxu0 %v197
    %2503 = vmatpush.msra.mxu0 %v193
    %2504 = vmatmul.f32.gmra.mxu0 %v2407
    %v2505 = vpop.f32.mrf.mxu0
    %v2506 = vadd.f32 %v2426, %v2505
    %2507 = vdwg.mxu0
    %2508 = vmatpush.msra.mxu0 %v254
    %2509 = vmatpush.msra.mxu0 %v250
    %2510 = vmatpush.msra.mxu0 %v246
    %2511 = vmatpush.msra.mxu0 %v242
    %2512 = vmatpush.msra.mxu0 %v238
    %2513 = vmatpush.msra.mxu0 %v234
    %2514 = vmatpush.msra.mxu0 %v230
    %2515 = vmatpush.msra.mxu0 %v226
    %2516 = vmatpush.msra.mxu0 %v222
    %2517 = vmatpush.msra.mxu0 %v218
    %2518 = vmatpush.msra.mxu0 %v214
    %2519 = vmatpush.msra.mxu0 %v210
    %2520 = vmatpush.msra.mxu0 %v206
    %2521 = vmatpush.msra.mxu0 %v202
    %2522 = vmatpush.msra.mxu0 %v198
    %2523 = vmatpush.msra.mxu0 %v194
    %2524 = vmatmul.f32.gmra.mxu0 %v2407
    %v2525 = vpop.f32.mrf.mxu0
    %v2526 = vadd.f32 %v2446, %v2525
    %2527 = vdwg.mxu0
    %2528 = vmatpush.msra.mxu0 %v255
    %2529 = vmatpush.msra.mxu0 %v251
    %2530 = vmatpush.msra.mxu0 %v247
    %2531 = vmatpush.msra.mxu0 %v243
    %2532 = vmatpush.msra.mxu0 %v239
    %2533 = vmatpush.msra.mxu0 %v235
    %2534 = vmatpush.msra.mxu0 %v231
    %2535 = vmatpush.msra.mxu0 %v227
    %2536 = vmatpush.msra.mxu0 %v223
    %2537 = vmatpush.msra.mxu0 %v219
    %2538 = vmatpush.msra.mxu0 %v215
    %2539 = vmatpush.msra.mxu0 %v211
    %2540 = vmatpush.msra.mxu0 %v207
    %2541 = vmatpush.msra.mxu0 %v203
    %2542 = vmatpush.msra.mxu0 %v199
    %2543 = vmatpush.msra.mxu0 %v195
    %2544 = vmatmul.f32.gmra.mxu0 %v2407
    %v2545 = vpop.f32.mrf.mxu0
    %v2546 = vadd.f32 %v2466, %v2545
    %2547 = vdwg.mxu0
    %2548 = vmatpush.msra.mxu0 %v256
    %2549 = vmatpush.msra.mxu0 %v252
    %2550 = vmatpush.msra.mxu0 %v248
    %2551 = vmatpush.msra.mxu0 %v244
    %2552 = vmatpush.msra.mxu0 %v240
    %2553 = vmatpush.msra.mxu0 %v236
    %2554 = vmatpush.msra.mxu0 %v232
    %2555 = vmatpush.msra.mxu0 %v228
    %2556 = vmatpush.msra.mxu0 %v224
    %2557 = vmatpush.msra.mxu0 %v220
    %2558 = vmatpush.msra.mxu0 %v216
    %2559 = vmatpush.msra.mxu0 %v212
    %2560 = vmatpush.msra.mxu0 %v208
    %2561 = vmatpush.msra.mxu0 %v204
    %2562 = vmatpush.msra.mxu0 %v200
    %2563 = vmatpush.msra.mxu0 %v196
    %2564 = vmatmul.f32.gmra.mxu0 %v2407
    %v2565 = vpop.f32.mrf.mxu0
    %v2566 = vadd.f32 %v2486, %v2565
    %2567 = vdwg.mxu0
    %v2568 = vadd.f32 %v2506, %v724
    %v2569 = vadd.f32 %v2526, %v725
    %v2570 = vadd.f32 %v2546, %v726
    %v2571 = vadd.f32 %v2566, %v727
    %v2572 = vxor.u32 %v2568, 2147483648
    %v2573 = vmul.f32 %v2572, 1.442695
    %v2574 = vpow.pop %v2573
    %v2575 = vadd.f32 %v2574, 1.0
    %v2576 = vrcp.pop %v2575
    %v2577 = vmul.f32 %v2575, %v2576
    %v2578 = vsub.f32 1.0, %v2577
    %v2579 = vmul.f32 %v2576, %v2578
    %v2580 = vadd.f32 %v2576, %v2579
    %vm2581 = vweird.f32 %v2575
    %vm2582 = vweird.f32 %v2576
    %vm2583 = vmor %vm2581, %vm2582
    %v2584 = vsel %vm2583, %v2576, %v2580
    %v2585 = vand.u32 2147483647, %v2575
    %vm2586 = vcmp.eq.f32.partialorder %v2585, 8.507059e+37
    %v2587 = vand.u32 %v2575, 2147483648
    %v2588 = vor.u32 1.1754944e-38, %v2587
    %v2589 = vsel %vm2586, %v2588, %v2584
    %v2590 = vmul.f32 1.0, %v2589
    %v2591 = vxor.u32 %v2569, 2147483648
    %v2592 = vmul.f32 %v2591, 1.442695
    %v2593 = vpow.pop %v2592
    %v2594 = vadd.f32 %v2593, 1.0
    %v2595 = vrcp.pop %v2594
    %v2596 = vmul.f32 %v2594, %v2595
    %v2597 = vsub.f32 1.0, %v2596
    %v2598 = vmul.f32 %v2595, %v2597
    %v2599 = vadd.f32 %v2595, %v2598
    %vm2600 = vweird.f32 %v2594
    %vm2601 = vweird.f32 %v2595
    %vm2602 = vmor %vm2600, %vm2601
    %v2603 = vsel %vm2602, %v2595, %v2599
    %v2604 = vand.u32 2147483647, %v2594
    %vm2605 = vcmp.eq.f32.partialorder %v2604, 8.507059e+37
    %v2606 = vand.u32 %v2594, 2147483648
    %v2607 = vor.u32 1.1754944e-38, %v2606
    %v2608 = vsel %vm2605, %v2607, %v2603
    %v2609 = vmul.f32 1.0, %v2608
    %v2610 = vtanh.pop %v2570
    %v2611 = vxor.u32 %v2571, 2147483648
    %v2612 = vmul.f32 %v2611, 1.442695
    %v2613 = vpow.pop %v2612
    %v2614 = vadd.f32 %v2613, 1.0
    %v2615 = vrcp.pop %v2614
    %v2616 = vmul.f32 %v2614, %v2615
    %v2617 = vsub.f32 1.0, %v2616
    %v2618 = vmul.f32 %v2615, %v2617
    %v2619 = vadd.f32 %v2615, %v2618
    %vm2620 = vweird.f32 %v2614
    %vm2621 = vweird.f32 %v2615
    %vm2622 = vmor %vm2620, %vm2621
    %v2623 = vsel %vm2622, %v2615, %v2619
    %v2624 = vand.u32 2147483647, %v2614
    %vm2625 = vcmp.eq.f32.partialorder %v2624, 8.507059e+37
    %v2626 = vand.u32 %v2614, 2147483648
    %v2627 = vor.u32 1.1754944e-38, %v2626
    %v2628 = vsel %vm2625, %v2627, %v2623
    %v2629 = vmul.f32 1.0, %v2628
    %v2630 = vmul.f32 %v2609, %v2173
    %v2631 = vmul.f32 %v2590, %v2610
    %v2632 = vadd.f32 %v2630, %v2631
    %v2633 = vtanh.pop %v2632
    %v2634 = vmul.f32 %v2629, %v2633
    %s2635 = scalar_lea.vmem %s0, 10
    %v2636 = vld [vmem:[%s2635] sm:$0x3]
    %2637 = vmatpush.msra.mxu0 %v188
    %2638 = vmatpush.msra.mxu0 %v184
    %2639 = vmatpush.msra.mxu0 %v180
    %2640 = vmatpush.msra.mxu0 %v176
    %2641 = vmatpush.msra.mxu0 %v172
    %2642 = vmatpush.msra.mxu0 %v168
    %2643 = vmatpush.msra.mxu0 %v164
    %2644 = vmatpush.msra.mxu0 %v160
    %2645 = vmatpush.msra.mxu0 %v156
    %2646 = vmatpush.msra.mxu0 %v152
    %2647 = vmatpush.msra.mxu0 %v148
    %2648 = vmatpush.msra.mxu0 %v144
    %2649 = vmatpush.msra.mxu0 %v140
    %2650 = vmatpush.msra.mxu0 %v136
    %2651 = vmatpush.msra.mxu0 %v132
    %2652 = vmatpush.msra.mxu0 %v128
    %2653 = vmatmul.f32.gmra.mxu0 %v2407
    %v2654 = vpop.f32.mrf.mxu0
    %v2655 = vadd.f32 0.0, %v2654
    %2656 = vdwg.mxu0
    %2657 = vmatpush.msra.mxu0 %v189
    %2658 = vmatpush.msra.mxu0 %v185
    %2659 = vmatpush.msra.mxu0 %v181
    %2660 = vmatpush.msra.mxu0 %v177
    %2661 = vmatpush.msra.mxu0 %v173
    %2662 = vmatpush.msra.mxu0 %v169
    %2663 = vmatpush.msra.mxu0 %v165
    %2664 = vmatpush.msra.mxu0 %v161
    %2665 = vmatpush.msra.mxu0 %v157
    %2666 = vmatpush.msra.mxu0 %v153
    %2667 = vmatpush.msra.mxu0 %v149
    %2668 = vmatpush.msra.mxu0 %v145
    %2669 = vmatpush.msra.mxu0 %v141
    %2670 = vmatpush.msra.mxu0 %v137
    %2671 = vmatpush.msra.mxu0 %v133
    %2672 = vmatpush.msra.mxu0 %v129
    %2673 = vmatmul.f32.gmra.mxu0 %v2407
    %v2674 = vpop.f32.mrf.mxu0
    %v2675 = vadd.f32 0.0, %v2674
    %2676 = vdwg.mxu0
    %2677 = vmatpush.msra.mxu0 %v190
    %2678 = vmatpush.msra.mxu0 %v186
    %2679 = vmatpush.msra.mxu0 %v182
    %2680 = vmatpush.msra.mxu0 %v178
    %2681 = vmatpush.msra.mxu0 %v174
    %2682 = vmatpush.msra.mxu0 %v170
    %2683 = vmatpush.msra.mxu0 %v166
    %2684 = vmatpush.msra.mxu0 %v162
    %2685 = vmatpush.msra.mxu0 %v158
    %2686 = vmatpush.msra.mxu0 %v154
    %2687 = vmatpush.msra.mxu0 %v150
    %2688 = vmatpush.msra.mxu0 %v146
    %2689 = vmatpush.msra.mxu0 %v142
    %2690 = vmatpush.msra.mxu0 %v138
    %2691 = vmatpush.msra.mxu0 %v134
    %2692 = vmatpush.msra.mxu0 %v130
    %2693 = vmatmul.f32.gmra.mxu0 %v2407
    %v2694 = vpop.f32.mrf.mxu0
    %v2695 = vadd.f32 0.0, %v2694
    %2696 = vdwg.mxu0
    %2697 = vmatpush.msra.mxu0 %v191
    %2698 = vmatpush.msra.mxu0 %v187
    %2699 = vmatpush.msra.mxu0 %v183
    %2700 = vmatpush.msra.mxu0 %v179
    %2701 = vmatpush.msra.mxu0 %v175
    %2702 = vmatpush.msra.mxu0 %v171
    %2703 = vmatpush.msra.mxu0 %v167
    %2704 = vmatpush.msra.mxu0 %v163
    %2705 = vmatpush.msra.mxu0 %v159
    %2706 = vmatpush.msra.mxu0 %v155
    %2707 = vmatpush.msra.mxu0 %v151
    %2708 = vmatpush.msra.mxu0 %v147
    %2709 = vmatpush.msra.mxu0 %v143
    %2710 = vmatpush.msra.mxu0 %v139
    %2711 = vmatpush.msra.mxu0 %v135
    %2712 = vmatpush.msra.mxu0 %v131
    %2713 = vmatmul.f32.gmra.mxu0 %v2407
    %v2714 = vpop.f32.mrf.mxu0
    %v2715 = vadd.f32 0.0, %v2714
    %2716 = vdwg.mxu0
    %v2718 = vsel %vm403, %v2636, 0
    %2720 = vmatpush.msra.mxu0 0.0
    %2721 = vmatpush.msra.mxu0 0.0
    %2722 = vmatpush.msra.mxu0 0.0
    %2723 = vmatpush.msra.mxu0 0.0
    %2724 = vmatpush.msra.mxu0 0.0
    %2725 = vmatpush.msra.mxu0 0.0
    %2726 = vmatpush.msra.mxu0 0.0
    %2727 = vmatpush.msra.mxu0 0.0
    %2728 = vmatpush.msra.mxu0 %v124
    %2729 = vmatpush.msra.mxu0 %v120
    %2730 = vmatpush.msra.mxu0 %v116
    %2731 = vmatpush.msra.mxu0 %v112
    %2732 = vmatpush.msra.mxu0 %v108
    %2733 = vmatpush.msra.mxu0 %v104
    %2734 = vmatpush.msra.mxu0 %v100
    %2735 = vmatpush.msra.mxu0 %v96
    %2736 = vmatmul.f32.gmra.mxu0 %v2718
    %v2737 = vpop.f32.mrf.mxu0
    %v2738 = vadd.f32 %v2655, %v2737
    %2739 = vdwg.mxu0
    %2740 = vmatpush.msra.mxu0 0.0
    %2741 = vmatpush.msra.mxu0 0.0
    %2742 = vmatpush.msra.mxu0 0.0
    %2743 = vmatpush.msra.mxu0 0.0
    %2744 = vmatpush.msra.mxu0 0.0
    %2745 = vmatpush.msra.mxu0 0.0
    %2746 = vmatpush.msra.mxu0 0.0
    %2747 = vmatpush.msra.mxu0 0.0
    %2748 = vmatpush.msra.mxu0 %v125
    %2749 = vmatpush.msra.mxu0 %v121
    %2750 = vmatpush.msra.mxu0 %v117
    %2751 = vmatpush.msra.mxu0 %v113
    %2752 = vmatpush.msra.mxu0 %v109
    %2753 = vmatpush.msra.mxu0 %v105
    %2754 = vmatpush.msra.mxu0 %v101
    %2755 = vmatpush.msra.mxu0 %v97
    %2756 = vmatmul.f32.gmra.mxu0 %v2718
    %v2757 = vpop.f32.mrf.mxu0
    %v2758 = vadd.f32 %v2675, %v2757
    %2759 = vdwg.mxu0
    %2760 = vmatpush.msra.mxu0 0.0
    %2761 = vmatpush.msra.mxu0 0.0
    %2762 = vmatpush.msra.mxu0 0.0
    %2763 = vmatpush.msra.mxu0 0.0
    %2764 = vmatpush.msra.mxu0 0.0
    %2765 = vmatpush.msra.mxu0 0.0
    %2766 = vmatpush.msra.mxu0 0.0
    %2767 = vmatpush.msra.mxu0 0.0
    %2768 = vmatpush.msra.mxu0 %v126
    %2769 = vmatpush.msra.mxu0 %v122
    %2770 = vmatpush.msra.mxu0 %v118
    %2771 = vmatpush.msra.mxu0 %v114
    %2772 = vmatpush.msra.mxu0 %v110
    %2773 = vmatpush.msra.mxu0 %v106
    %2774 = vmatpush.msra.mxu0 %v102
    %2775 = vmatpush.msra.mxu0 %v98
    %2776 = vmatmul.f32.gmra.mxu0 %v2718
    %v2777 = vpop.f32.mrf.mxu0
    %v2778 = vadd.f32 %v2695, %v2777
    %2779 = vdwg.mxu0
    %2780 = vmatpush.msra.mxu0 0.0
    %2781 = vmatpush.msra.mxu0 0.0
    %2782 = vmatpush.msra.mxu0 0.0
    %2783 = vmatpush.msra.mxu0 0.0
    %2784 = vmatpush.msra.mxu0 0.0
    %2785 = vmatpush.msra.mxu0 0.0
    %2786 = vmatpush.msra.mxu0 0.0
    %2787 = vmatpush.msra.mxu0 0.0
    %2788 = vmatpush.msra.mxu0 %v127
    %2789 = vmatpush.msra.mxu0 %v123
    %2790 = vmatpush.msra.mxu0 %v119
    %2791 = vmatpush.msra.mxu0 %v115
    %2792 = vmatpush.msra.mxu0 %v111
    %2793 = vmatpush.msra.mxu0 %v107
    %2794 = vmatpush.msra.mxu0 %v103
    %2795 = vmatpush.msra.mxu0 %v99
    %2796 = vmatmul.f32.gmra.mxu0 %v2718
    %v2797 = vpop.f32.mrf.mxu0
    %v2798 = vadd.f32 %v2715, %v2797
    %2799 = vdwg.mxu0
    %v2800 = vadd.f32 %v2738, %v488
    %v2801 = vadd.f32 %v2758, %v489
    %v2802 = vadd.f32 %v2778, %v490
    %v2803 = vadd.f32 %v2798, %v491
    %v2804 = vxor.u32 %v2800, 2147483648
    %v2805 = vmul.f32 %v2804, 1.442695
    %v2806 = vpow.pop %v2805
    %v2807 = vadd.f32 %v2806, 1.0
    %v2808 = vrcp.pop %v2807
    %v2809 = vmul.f32 %v2807, %v2808
    %v2810 = vsub.f32 1.0, %v2809
    %v2811 = vmul.f32 %v2808, %v2810
    %v2812 = vadd.f32 %v2808, %v2811
    %vm2813 = vweird.f32 %v2807
    %vm2814 = vweird.f32 %v2808
    %vm2815 = vmor %vm2813, %vm2814
    %v2816 = vsel %vm2815, %v2808, %v2812
    %v2817 = vand.u32 2147483647, %v2807
    %vm2818 = vcmp.eq.f32.partialorder %v2817, 8.507059e+37
    %v2819 = vand.u32 %v2807, 2147483648
    %v2820 = vor.u32 1.1754944e-38, %v2819
    %v2821 = vsel %vm2818, %v2820, %v2816
    %v2822 = vmul.f32 1.0, %v2821
    %v2823 = vxor.u32 %v2801, 2147483648
    %v2824 = vmul.f32 %v2823, 1.442695
    %v2825 = vpow.pop %v2824
    %v2826 = vadd.f32 %v2825, 1.0
    %v2827 = vrcp.pop %v2826
    %v2828 = vmul.f32 %v2826, %v2827
    %v2829 = vsub.f32 1.0, %v2828
    %v2830 = vmul.f32 %v2827, %v2829
    %v2831 = vadd.f32 %v2827, %v2830
    %vm2832 = vweird.f32 %v2826
    %vm2833 = vweird.f32 %v2827
    %vm2834 = vmor %vm2832, %vm2833
    %v2835 = vsel %vm2834, %v2827, %v2831
    %v2836 = vand.u32 2147483647, %v2826
    %vm2837 = vcmp.eq.f32.partialorder %v2836, 8.507059e+37
    %v2838 = vand.u32 %v2826, 2147483648
    %v2839 = vor.u32 1.1754944e-38, %v2838
    %v2840 = vsel %vm2837, %v2839, %v2835
    %v2841 = vmul.f32 1.0, %v2840
    %v2842 = vtanh.pop %v2802
    %v2843 = vxor.u32 %v2803, 2147483648
    %v2844 = vmul.f32 %v2843, 1.442695
    %v2845 = vpow.pop %v2844
    %v2846 = vadd.f32 %v2845, 1.0
    %v2847 = vrcp.pop %v2846
    %v2848 = vmul.f32 %v2846, %v2847
    %v2849 = vsub.f32 1.0, %v2848
    %v2850 = vmul.f32 %v2847, %v2849
    %v2851 = vadd.f32 %v2847, %v2850
    %vm2852 = vweird.f32 %v2846
    %vm2853 = vweird.f32 %v2847
    %vm2854 = vmor %vm2852, %vm2853
    %v2855 = vsel %vm2854, %v2847, %v2851
    %v2856 = vand.u32 2147483647, %v2846
    %vm2857 = vcmp.eq.f32.partialorder %v2856, 8.507059e+37
    %v2858 = vand.u32 %v2846, 2147483648
    %v2859 = vor.u32 1.1754944e-38, %v2858
    %v2860 = vsel %vm2857, %v2859, %v2855
    %v2861 = vmul.f32 1.0, %v2860
    %v2862 = vmul.f32 %v2841, %v2405
    %v2863 = vmul.f32 %v2822, %v2842
    %v2864 = vadd.f32 %v2862, %v2863
    %v2865 = vtanh.pop %v2864
    %v2866 = vmul.f32 %v2861, %v2865
    %2867 = vmatpush.msra.mxu0 %v317
    %2868 = vmatpush.msra.mxu0 %v313
    %2869 = vmatpush.msra.mxu0 %v309
    %2870 = vmatpush.msra.mxu0 %v305
    %2871 = vmatpush.msra.mxu0 %v301
    %2872 = vmatpush.msra.mxu0 %v297
    %2873 = vmatpush.msra.mxu0 %v293
    %2874 = vmatpush.msra.mxu0 %v289
    %2875 = vmatpush.msra.mxu0 %v285
    %2876 = vmatpush.msra.mxu0 %v281
    %2877 = vmatpush.msra.mxu0 %v277
    %2878 = vmatpush.msra.mxu0 %v273
    %2879 = vmatpush.msra.mxu0 %v269
    %2880 = vmatpush.msra.mxu0 %v265
    %2881 = vmatpush.msra.mxu0 %v261
    %2882 = vmatpush.msra.mxu0 %v257
    %2883 = vmatmul.f32.gmra.mxu0 %v2634
    %v2884 = vpop.f32.mrf.mxu0
    %v2885 = vadd.f32 0.0, %v2884
    %2886 = vdwg.mxu0
    %2887 = vmatpush.msra.mxu0 %v318
    %2888 = vmatpush.msra.mxu0 %v314
    %2889 = vmatpush.msra.mxu0 %v310
    %2890 = vmatpush.msra.mxu0 %v306
    %2891 = vmatpush.msra.mxu0 %v302
    %2892 = vmatpush.msra.mxu0 %v298
    %2893 = vmatpush.msra.mxu0 %v294
    %2894 = vmatpush.msra.mxu0 %v290
    %2895 = vmatpush.msra.mxu0 %v286
    %2896 = vmatpush.msra.mxu0 %v282
    %2897 = vmatpush.msra.mxu0 %v278
    %2898 = vmatpush.msra.mxu0 %v274
    %2899 = vmatpush.msra.mxu0 %v270
    %2900 = vmatpush.msra.mxu0 %v266
    %2901 = vmatpush.msra.mxu0 %v262
    %2902 = vmatpush.msra.mxu0 %v258
    %2903 = vmatmul.f32.gmra.mxu0 %v2634
    %v2904 = vpop.f32.mrf.mxu0
    %v2905 = vadd.f32 0.0, %v2904
    %2906 = vdwg.mxu0
    %2907 = vmatpush.msra.mxu0 %v319
    %2908 = vmatpush.msra.mxu0 %v315
    %2909 = vmatpush.msra.mxu0 %v311
    %2910 = vmatpush.msra.mxu0 %v307
    %2911 = vmatpush.msra.mxu0 %v303
    %2912 = vmatpush.msra.mxu0 %v299
    %2913 = vmatpush.msra.mxu0 %v295
    %2914 = vmatpush.msra.mxu0 %v291
    %2915 = vmatpush.msra.mxu0 %v287
    %2916 = vmatpush.msra.mxu0 %v283
    %2917 = vmatpush.msra.mxu0 %v279
    %2918 = vmatpush.msra.mxu0 %v275
    %2919 = vmatpush.msra.mxu0 %v271
    %2920 = vmatpush.msra.mxu0 %v267
    %2921 = vmatpush.msra.mxu0 %v263
    %2922 = vmatpush.msra.mxu0 %v259
    %2923 = vmatmul.f32.gmra.mxu0 %v2634
    %v2924 = vpop.f32.mrf.mxu0
    %v2925 = vadd.f32 0.0, %v2924
    %2926 = vdwg.mxu0
    %2927 = vmatpush.msra.mxu0 %v320
    %2928 = vmatpush.msra.mxu0 %v316
    %2929 = vmatpush.msra.mxu0 %v312
    %2930 = vmatpush.msra.mxu0 %v308
    %2931 = vmatpush.msra.mxu0 %v304
    %2932 = vmatpush.msra.mxu0 %v300
    %2933 = vmatpush.msra.mxu0 %v296
    %2934 = vmatpush.msra.mxu0 %v292
    %2935 = vmatpush.msra.mxu0 %v288
    %2936 = vmatpush.msra.mxu0 %v284
    %2937 = vmatpush.msra.mxu0 %v280
    %2938 = vmatpush.msra.mxu0 %v276
    %2939 = vmatpush.msra.mxu0 %v272
    %2940 = vmatpush.msra.mxu0 %v268
    %2941 = vmatpush.msra.mxu0 %v264
    %2942 = vmatpush.msra.mxu0 %v260
    %2943 = vmatmul.f32.gmra.mxu0 %v2634
    %v2944 = vpop.f32.mrf.mxu0
    %v2945 = vadd.f32 0.0, %v2944
    %2946 = vdwg.mxu0
    %2947 = vmatpush.msra.mxu0 %v253
    %2948 = vmatpush.msra.mxu0 %v249
    %2949 = vmatpush.msra.mxu0 %v245
    %2950 = vmatpush.msra.mxu0 %v241
    %2951 = vmatpush.msra.mxu0 %v237
    %2952 = vmatpush.msra.mxu0 %v233
    %2953 = vmatpush.msra.mxu0 %v229
    %2954 = vmatpush.msra.mxu0 %v225
    %2955 = vmatpush.msra.mxu0 %v221
    %2956 = vmatpush.msra.mxu0 %v217
    %2957 = vmatpush.msra.mxu0 %v213
    %2958 = vmatpush.msra.mxu0 %v209
    %2959 = vmatpush.msra.mxu0 %v205
    %2960 = vmatpush.msra.mxu0 %v201
    %2961 = vmatpush.msra.mxu0 %v197
    %2962 = vmatpush.msra.mxu0 %v193
    %2963 = vmatmul.f32.gmra.mxu0 %v2866
    %v2964 = vpop.f32.mrf.mxu0
    %v2965 = vadd.f32 %v2885, %v2964
    %2966 = vdwg.mxu0
    %2967 = vmatpush.msra.mxu0 %v254
    %2968 = vmatpush.msra.mxu0 %v250
    %2969 = vmatpush.msra.mxu0 %v246
    %2970 = vmatpush.msra.mxu0 %v242
    %2971 = vmatpush.msra.mxu0 %v238
    %2972 = vmatpush.msra.mxu0 %v234
    %2973 = vmatpush.msra.mxu0 %v230
    %2974 = vmatpush.msra.mxu0 %v226
    %2975 = vmatpush.msra.mxu0 %v222
    %2976 = vmatpush.msra.mxu0 %v218
    %2977 = vmatpush.msra.mxu0 %v214
    %2978 = vmatpush.msra.mxu0 %v210
    %2979 = vmatpush.msra.mxu0 %v206
    %2980 = vmatpush.msra.mxu0 %v202
    %2981 = vmatpush.msra.mxu0 %v198
    %2982 = vmatpush.msra.mxu0 %v194
    %2983 = vmatmul.f32.gmra.mxu0 %v2866
    %v2984 = vpop.f32.mrf.mxu0
    %v2985 = vadd.f32 %v2905, %v2984
    %2986 = vdwg.mxu0
    %2987 = vmatpush.msra.mxu0 %v255
    %2988 = vmatpush.msra.mxu0 %v251
    %2989 = vmatpush.msra.mxu0 %v247
    %2990 = vmatpush.msra.mxu0 %v243
    %2991 = vmatpush.msra.mxu0 %v239
    %2992 = vmatpush.msra.mxu0 %v235
    %2993 = vmatpush.msra.mxu0 %v231
    %2994 = vmatpush.msra.mxu0 %v227
    %2995 = vmatpush.msra.mxu0 %v223
    %2996 = vmatpush.msra.mxu0 %v219
    %2997 = vmatpush.msra.mxu0 %v215
    %2998 = vmatpush.msra.mxu0 %v211
    %2999 = vmatpush.msra.mxu0 %v207
    %3000 = vmatpush.msra.mxu0 %v203
    %3001 = vmatpush.msra.mxu0 %v199
    %3002 = vmatpush.msra.mxu0 %v195
    %3003 = vmatmul.f32.gmra.mxu0 %v2866
    %v3004 = vpop.f32.mrf.mxu0
    %v3005 = vadd.f32 %v2925, %v3004
    %3006 = vdwg.mxu0
    %3007 = vmatpush.msra.mxu0 %v256
    %3008 = vmatpush.msra.mxu0 %v252
    %3009 = vmatpush.msra.mxu0 %v248
    %3010 = vmatpush.msra.mxu0 %v244
    %3011 = vmatpush.msra.mxu0 %v240
    %3012 = vmatpush.msra.mxu0 %v236
    %3013 = vmatpush.msra.mxu0 %v232
    %3014 = vmatpush.msra.mxu0 %v228
    %3015 = vmatpush.msra.mxu0 %v224
    %3016 = vmatpush.msra.mxu0 %v220
    %3017 = vmatpush.msra.mxu0 %v216
    %3018 = vmatpush.msra.mxu0 %v212
    %3019 = vmatpush.msra.mxu0 %v208
    %3020 = vmatpush.msra.mxu0 %v204
    %3021 = vmatpush.msra.mxu0 %v200
    %3022 = vmatpush.msra.mxu0 %v196
    %3023 = vmatmul.f32.gmra.mxu0 %v2866
    %v3024 = vpop.f32.mrf.mxu0
    %v3025 = vadd.f32 %v2945, %v3024
    %3026 = vdwg.mxu0
    %v3027 = vadd.f32 %v2965, %v724
    %v3028 = vadd.f32 %v2985, %v725
    %v3029 = vadd.f32 %v3005, %v726
    %v3030 = vadd.f32 %v3025, %v727
    %v3031 = vxor.u32 %v3027, 2147483648
    %v3032 = vmul.f32 %v3031, 1.442695
    %v3033 = vpow.pop %v3032
    %v3034 = vadd.f32 %v3033, 1.0
    %v3035 = vrcp.pop %v3034
    %v3036 = vmul.f32 %v3034, %v3035
    %v3037 = vsub.f32 1.0, %v3036
    %v3038 = vmul.f32 %v3035, %v3037
    %v3039 = vadd.f32 %v3035, %v3038
    %vm3040 = vweird.f32 %v3034
    %vm3041 = vweird.f32 %v3035
    %vm3042 = vmor %vm3040, %vm3041
    %v3043 = vsel %vm3042, %v3035, %v3039
    %v3044 = vand.u32 2147483647, %v3034
    %vm3045 = vcmp.eq.f32.partialorder %v3044, 8.507059e+37
    %v3046 = vand.u32 %v3034, 2147483648
    %v3047 = vor.u32 1.1754944e-38, %v3046
    %v3048 = vsel %vm3045, %v3047, %v3043
    %v3049 = vmul.f32 1.0, %v3048
    %v3050 = vxor.u32 %v3028, 2147483648
    %v3051 = vmul.f32 %v3050, 1.442695
    %v3052 = vpow.pop %v3051
    %v3053 = vadd.f32 %v3052, 1.0
    %v3054 = vrcp.pop %v3053
    %v3055 = vmul.f32 %v3053, %v3054
    %v3056 = vsub.f32 1.0, %v3055
    %v3057 = vmul.f32 %v3054, %v3056
    %v3058 = vadd.f32 %v3054, %v3057
    %vm3059 = vweird.f32 %v3053
    %vm3060 = vweird.f32 %v3054
    %vm3061 = vmor %vm3059, %vm3060
    %v3062 = vsel %vm3061, %v3054, %v3058
    %v3063 = vand.u32 2147483647, %v3053
    %vm3064 = vcmp.eq.f32.partialorder %v3063, 8.507059e+37
    %v3065 = vand.u32 %v3053, 2147483648
    %v3066 = vor.u32 1.1754944e-38, %v3065
    %v3067 = vsel %vm3064, %v3066, %v3062
    %v3068 = vmul.f32 1.0, %v3067
    %v3069 = vtanh.pop %v3029
    %v3070 = vxor.u32 %v3030, 2147483648
    %v3071 = vmul.f32 %v3070, 1.442695
    %v3072 = vpow.pop %v3071
    %v3073 = vadd.f32 %v3072, 1.0
    %v3074 = vrcp.pop %v3073
    %v3075 = vmul.f32 %v3073, %v3074
    %v3076 = vsub.f32 1.0, %v3075
    %v3077 = vmul.f32 %v3074, %v3076
    %v3078 = vadd.f32 %v3074, %v3077
    %vm3079 = vweird.f32 %v3073
    %vm3080 = vweird.f32 %v3074
    %vm3081 = vmor %vm3079, %vm3080
    %v3082 = vsel %vm3081, %v3074, %v3078
    %v3083 = vand.u32 2147483647, %v3073
    %vm3084 = vcmp.eq.f32.partialorder %v3083, 8.507059e+37
    %v3085 = vand.u32 %v3073, 2147483648
    %v3086 = vor.u32 1.1754944e-38, %v3085
    %v3087 = vsel %vm3084, %v3086, %v3082
    %v3088 = vmul.f32 1.0, %v3087
    %v3089 = vmul.f32 %v3068, %v2632
    %v3090 = vmul.f32 %v3049, %v3069
    %v3091 = vadd.f32 %v3089, %v3090
    %v3092 = vtanh.pop %v3091
    %v3093 = vmul.f32 %v3088, %v3092
    %s3094 = scalar_lea.vmem %s0, 12
    %v3095 = vld [vmem:[%s3094] sm:$0x3]
    %3096 = vmatpush.msra.mxu0 %v188
    %3097 = vmatpush.msra.mxu0 %v184
    %3098 = vmatpush.msra.mxu0 %v180
    %3099 = vmatpush.msra.mxu0 %v176
    %3100 = vmatpush.msra.mxu0 %v172
    %3101 = vmatpush.msra.mxu0 %v168
    %3102 = vmatpush.msra.mxu0 %v164
    %3103 = vmatpush.msra.mxu0 %v160
    %3104 = vmatpush.msra.mxu0 %v156
    %3105 = vmatpush.msra.mxu0 %v152
    %3106 = vmatpush.msra.mxu0 %v148
    %3107 = vmatpush.msra.mxu0 %v144
    %3108 = vmatpush.msra.mxu0 %v140
    %3109 = vmatpush.msra.mxu0 %v136
    %3110 = vmatpush.msra.mxu0 %v132
    %3111 = vmatpush.msra.mxu0 %v128
    %3112 = vmatmul.f32.gmra.mxu0 %v2866
    %v3113 = vpop.f32.mrf.mxu0
    %v3114 = vadd.f32 0.0, %v3113
    %3115 = vdwg.mxu0
    %3116 = vmatpush.msra.mxu0 %v189
    %3117 = vmatpush.msra.mxu0 %v185
    %3118 = vmatpush.msra.mxu0 %v181
    %3119 = vmatpush.msra.mxu0 %v177
    %3120 = vmatpush.msra.mxu0 %v173
    %3121 = vmatpush.msra.mxu0 %v169
    %3122 = vmatpush.msra.mxu0 %v165
    %3123 = vmatpush.msra.mxu0 %v161
    %3124 = vmatpush.msra.mxu0 %v157
    %3125 = vmatpush.msra.mxu0 %v153
    %3126 = vmatpush.msra.mxu0 %v149
    %3127 = vmatpush.msra.mxu0 %v145
    %3128 = vmatpush.msra.mxu0 %v141
    %3129 = vmatpush.msra.mxu0 %v137
    %3130 = vmatpush.msra.mxu0 %v133
    %3131 = vmatpush.msra.mxu0 %v129
    %3132 = vmatmul.f32.gmra.mxu0 %v2866
    %v3133 = vpop.f32.mrf.mxu0
    %v3134 = vadd.f32 0.0, %v3133
    %3135 = vdwg.mxu0
    %3136 = vmatpush.msra.mxu0 %v190
    %3137 = vmatpush.msra.mxu0 %v186
    %3138 = vmatpush.msra.mxu0 %v182
    %3139 = vmatpush.msra.mxu0 %v178
    %3140 = vmatpush.msra.mxu0 %v174
    %3141 = vmatpush.msra.mxu0 %v170
    %3142 = vmatpush.msra.mxu0 %v166
    %3143 = vmatpush.msra.mxu0 %v162
    %3144 = vmatpush.msra.mxu0 %v158
    %3145 = vmatpush.msra.mxu0 %v154
    %3146 = vmatpush.msra.mxu0 %v150
    %3147 = vmatpush.msra.mxu0 %v146
    %3148 = vmatpush.msra.mxu0 %v142
    %3149 = vmatpush.msra.mxu0 %v138
    %3150 = vmatpush.msra.mxu0 %v134
    %3151 = vmatpush.msra.mxu0 %v130
    %3152 = vmatmul.f32.gmra.mxu0 %v2866
    %v3153 = vpop.f32.mrf.mxu0
    %v3154 = vadd.f32 0.0, %v3153
    %3155 = vdwg.mxu0
    %3156 = vmatpush.msra.mxu0 %v191
    %3157 = vmatpush.msra.mxu0 %v187
    %3158 = vmatpush.msra.mxu0 %v183
    %3159 = vmatpush.msra.mxu0 %v179
    %3160 = vmatpush.msra.mxu0 %v175
    %3161 = vmatpush.msra.mxu0 %v171
    %3162 = vmatpush.msra.mxu0 %v167
    %3163 = vmatpush.msra.mxu0 %v163
    %3164 = vmatpush.msra.mxu0 %v159
    %3165 = vmatpush.msra.mxu0 %v155
    %3166 = vmatpush.msra.mxu0 %v151
    %3167 = vmatpush.msra.mxu0 %v147
    %3168 = vmatpush.msra.mxu0 %v143
    %3169 = vmatpush.msra.mxu0 %v139
    %3170 = vmatpush.msra.mxu0 %v135
    %3171 = vmatpush.msra.mxu0 %v131
    %3172 = vmatmul.f32.gmra.mxu0 %v2866
    %v3173 = vpop.f32.mrf.mxu0
    %v3174 = vadd.f32 0.0, %v3173
    %3175 = vdwg.mxu0
    %v3177 = vsel %vm403, %v3095, 0
    %3179 = vmatpush.msra.mxu0 0.0
    %3180 = vmatpush.msra.mxu0 0.0
    %3181 = vmatpush.msra.mxu0 0.0
    %3182 = vmatpush.msra.mxu0 0.0
    %3183 = vmatpush.msra.mxu0 0.0
    %3184 = vmatpush.msra.mxu0 0.0
    %3185 = vmatpush.msra.mxu0 0.0
    %3186 = vmatpush.msra.mxu0 0.0
    %3187 = vmatpush.msra.mxu0 %v124
    %3188 = vmatpush.msra.mxu0 %v120
    %3189 = vmatpush.msra.mxu0 %v116
    %3190 = vmatpush.msra.mxu0 %v112
    %3191 = vmatpush.msra.mxu0 %v108
    %3192 = vmatpush.msra.mxu0 %v104
    %3193 = vmatpush.msra.mxu0 %v100
    %3194 = vmatpush.msra.mxu0 %v96
    %3195 = vmatmul.f32.gmra.mxu0 %v3177
    %v3196 = vpop.f32.mrf.mxu0
    %v3197 = vadd.f32 %v3114, %v3196
    %3198 = vdwg.mxu0
    %3199 = vmatpush.msra.mxu0 0.0
    %3200 = vmatpush.msra.mxu0 0.0
    %3201 = vmatpush.msra.mxu0 0.0
    %3202 = vmatpush.msra.mxu0 0.0
    %3203 = vmatpush.msra.mxu0 0.0
    %3204 = vmatpush.msra.mxu0 0.0
    %3205 = vmatpush.msra.mxu0 0.0
    %3206 = vmatpush.msra.mxu0 0.0
    %3207 = vmatpush.msra.mxu0 %v125
    %3208 = vmatpush.msra.mxu0 %v121
    %3209 = vmatpush.msra.mxu0 %v117
    %3210 = vmatpush.msra.mxu0 %v113
    %3211 = vmatpush.msra.mxu0 %v109
    %3212 = vmatpush.msra.mxu0 %v105
    %3213 = vmatpush.msra.mxu0 %v101
    %3214 = vmatpush.msra.mxu0 %v97
    %3215 = vmatmul.f32.gmra.mxu0 %v3177
    %v3216 = vpop.f32.mrf.mxu0
    %v3217 = vadd.f32 %v3134, %v3216
    %3218 = vdwg.mxu0
    %3219 = vmatpush.msra.mxu0 0.0
    %3220 = vmatpush.msra.mxu0 0.0
    %3221 = vmatpush.msra.mxu0 0.0
    %3222 = vmatpush.msra.mxu0 0.0
    %3223 = vmatpush.msra.mxu0 0.0
    %3224 = vmatpush.msra.mxu0 0.0
    %3225 = vmatpush.msra.mxu0 0.0
    %3226 = vmatpush.msra.mxu0 0.0
    %3227 = vmatpush.msra.mxu0 %v126
    %3228 = vmatpush.msra.mxu0 %v122
    %3229 = vmatpush.msra.mxu0 %v118
    %3230 = vmatpush.msra.mxu0 %v114
    %3231 = vmatpush.msra.mxu0 %v110
    %3232 = vmatpush.msra.mxu0 %v106
    %3233 = vmatpush.msra.mxu0 %v102
    %3234 = vmatpush.msra.mxu0 %v98
    %3235 = vmatmul.f32.gmra.mxu0 %v3177
    %v3236 = vpop.f32.mrf.mxu0
    %v3237 = vadd.f32 %v3154, %v3236
    %3238 = vdwg.mxu0
    %3239 = vmatpush.msra.mxu0 0.0
    %3240 = vmatpush.msra.mxu0 0.0
    %3241 = vmatpush.msra.mxu0 0.0
    %3242 = vmatpush.msra.mxu0 0.0
    %3243 = vmatpush.msra.mxu0 0.0
    %3244 = vmatpush.msra.mxu0 0.0
    %3245 = vmatpush.msra.mxu0 0.0
    %3246 = vmatpush.msra.mxu0 0.0
    %3247 = vmatpush.msra.mxu0 %v127
    %3248 = vmatpush.msra.mxu0 %v123
    %3249 = vmatpush.msra.mxu0 %v119
    %3250 = vmatpush.msra.mxu0 %v115
    %3251 = vmatpush.msra.mxu0 %v111
    %3252 = vmatpush.msra.mxu0 %v107
    %3253 = vmatpush.msra.mxu0 %v103
    %3254 = vmatpush.msra.mxu0 %v99
    %3255 = vmatmul.f32.gmra.mxu0 %v3177
    %v3256 = vpop.f32.mrf.mxu0
    %v3257 = vadd.f32 %v3174, %v3256
    %3258 = vdwg.mxu0
    %v3259 = vadd.f32 %v3197, %v488
    %v3260 = vadd.f32 %v3217, %v489
    %v3261 = vadd.f32 %v3237, %v490
    %v3262 = vadd.f32 %v3257, %v491
    %v3263 = vxor.u32 %v3259, 2147483648
    %v3264 = vmul.f32 %v3263, 1.442695
    %v3265 = vpow.pop %v3264
    %v3266 = vadd.f32 %v3265, 1.0
    %v3267 = vrcp.pop %v3266
    %v3268 = vmul.f32 %v3266, %v3267
    %v3269 = vsub.f32 1.0, %v3268
    %v3270 = vmul.f32 %v3267, %v3269
    %v3271 = vadd.f32 %v3267, %v3270
    %vm3272 = vweird.f32 %v3266
    %vm3273 = vweird.f32 %v3267
    %vm3274 = vmor %vm3272, %vm3273
    %v3275 = vsel %vm3274, %v3267, %v3271
    %v3276 = vand.u32 2147483647, %v3266
    %vm3277 = vcmp.eq.f32.partialorder %v3276, 8.507059e+37
    %v3278 = vand.u32 %v3266, 2147483648
    %v3279 = vor.u32 1.1754944e-38, %v3278
    %v3280 = vsel %vm3277, %v3279, %v3275
    %v3281 = vmul.f32 1.0, %v3280
    %v3282 = vxor.u32 %v3260, 2147483648
    %v3283 = vmul.f32 %v3282, 1.442695
    %v3284 = vpow.pop %v3283
    %v3285 = vadd.f32 %v3284, 1.0
    %v3286 = vrcp.pop %v3285
    %v3287 = vmul.f32 %v3285, %v3286
    %v3288 = vsub.f32 1.0, %v3287
    %v3289 = vmul.f32 %v3286, %v3288
    %v3290 = vadd.f32 %v3286, %v3289
    %vm3291 = vweird.f32 %v3285
    %vm3292 = vweird.f32 %v3286
    %vm3293 = vmor %vm3291, %vm3292
    %v3294 = vsel %vm3293, %v3286, %v3290
    %v3295 = vand.u32 2147483647, %v3285
    %vm3296 = vcmp.eq.f32.partialorder %v3295, 8.507059e+37
    %v3297 = vand.u32 %v3285, 2147483648
    %v3298 = vor.u32 1.1754944e-38, %v3297
    %v3299 = vsel %vm3296, %v3298, %v3294
    %v3300 = vmul.f32 1.0, %v3299
    %v3301 = vtanh.pop %v3261
    %v3302 = vxor.u32 %v3262, 2147483648
    %v3303 = vmul.f32 %v3302, 1.442695
    %v3304 = vpow.pop %v3303
    %v3305 = vadd.f32 %v3304, 1.0
    %v3306 = vrcp.pop %v3305
    %v3307 = vmul.f32 %v3305, %v3306
    %v3308 = vsub.f32 1.0, %v3307
    %v3309 = vmul.f32 %v3306, %v3308
    %v3310 = vadd.f32 %v3306, %v3309
    %vm3311 = vweird.f32 %v3305
    %vm3312 = vweird.f32 %v3306
    %vm3313 = vmor %vm3311, %vm3312
    %v3314 = vsel %vm3313, %v3306, %v3310
    %v3315 = vand.u32 2147483647, %v3305
    %vm3316 = vcmp.eq.f32.partialorder %v3315, 8.507059e+37
    %v3317 = vand.u32 %v3305, 2147483648
    %v3318 = vor.u32 1.1754944e-38, %v3317
    %v3319 = vsel %vm3316, %v3318, %v3314
    %v3320 = vmul.f32 1.0, %v3319
    %v3321 = vmul.f32 %v3300, %v2864
    %v3322 = vmul.f32 %v3281, %v3301
    %v3323 = vadd.f32 %v3321, %v3322
    %v3324 = vtanh.pop %v3323
    %v3325 = vmul.f32 %v3320, %v3324
    %3326 = vmatpush.msra.mxu0 %v317
    %3327 = vmatpush.msra.mxu0 %v313
    %3328 = vmatpush.msra.mxu0 %v309
    %3329 = vmatpush.msra.mxu0 %v305
    %3330 = vmatpush.msra.mxu0 %v301
    %3331 = vmatpush.msra.mxu0 %v297
    %3332 = vmatpush.msra.mxu0 %v293
    %3333 = vmatpush.msra.mxu0 %v289
    %3334 = vmatpush.msra.mxu0 %v285
    %3335 = vmatpush.msra.mxu0 %v281
    %3336 = vmatpush.msra.mxu0 %v277
    %3337 = vmatpush.msra.mxu0 %v273
    %3338 = vmatpush.msra.mxu0 %v269
    %3339 = vmatpush.msra.mxu0 %v265
    %3340 = vmatpush.msra.mxu0 %v261
    %3341 = vmatpush.msra.mxu0 %v257
    %3342 = vmatmul.f32.gmra.mxu0 %v3093
    %v3343 = vpop.f32.mrf.mxu0
    %v3344 = vadd.f32 0.0, %v3343
    %3345 = vdwg.mxu0
    %3346 = vmatpush.msra.mxu0 %v318
    %3347 = vmatpush.msra.mxu0 %v314
    %3348 = vmatpush.msra.mxu0 %v310
    %3349 = vmatpush.msra.mxu0 %v306
    %3350 = vmatpush.msra.mxu0 %v302
    %3351 = vmatpush.msra.mxu0 %v298
    %3352 = vmatpush.msra.mxu0 %v294
    %3353 = vmatpush.msra.mxu0 %v290
    %3354 = vmatpush.msra.mxu0 %v286
    %3355 = vmatpush.msra.mxu0 %v282
    %3356 = vmatpush.msra.mxu0 %v278
    %3357 = vmatpush.msra.mxu0 %v274
    %3358 = vmatpush.msra.mxu0 %v270
    %3359 = vmatpush.msra.mxu0 %v266
    %3360 = vmatpush.msra.mxu0 %v262
    %3361 = vmatpush.msra.mxu0 %v258
    %3362 = vmatmul.f32.gmra.mxu0 %v3093
    %v3363 = vpop.f32.mrf.mxu0
    %v3364 = vadd.f32 0.0, %v3363
    %3365 = vdwg.mxu0
    %3366 = vmatpush.msra.mxu0 %v319
    %3367 = vmatpush.msra.mxu0 %v315
    %3368 = vmatpush.msra.mxu0 %v311
    %3369 = vmatpush.msra.mxu0 %v307
    %3370 = vmatpush.msra.mxu0 %v303
    %3371 = vmatpush.msra.mxu0 %v299
    %3372 = vmatpush.msra.mxu0 %v295
    %3373 = vmatpush.msra.mxu0 %v291
    %3374 = vmatpush.msra.mxu0 %v287
    %3375 = vmatpush.msra.mxu0 %v283
    %3376 = vmatpush.msra.mxu0 %v279
    %3377 = vmatpush.msra.mxu0 %v275
    %3378 = vmatpush.msra.mxu0 %v271
    %3379 = vmatpush.msra.mxu0 %v267
    %3380 = vmatpush.msra.mxu0 %v263
    %3381 = vmatpush.msra.mxu0 %v259
    %3382 = vmatmul.f32.gmra.mxu0 %v3093
    %v3383 = vpop.f32.mrf.mxu0
    %v3384 = vadd.f32 0.0, %v3383
    %3385 = vdwg.mxu0
    %3386 = vmatpush.msra.mxu0 %v320
    %3387 = vmatpush.msra.mxu0 %v316
    %3388 = vmatpush.msra.mxu0 %v312
    %3389 = vmatpush.msra.mxu0 %v308
    %3390 = vmatpush.msra.mxu0 %v304
    %3391 = vmatpush.msra.mxu0 %v300
    %3392 = vmatpush.msra.mxu0 %v296
    %3393 = vmatpush.msra.mxu0 %v292
    %3394 = vmatpush.msra.mxu0 %v288
    %3395 = vmatpush.msra.mxu0 %v284
    %3396 = vmatpush.msra.mxu0 %v280
    %3397 = vmatpush.msra.mxu0 %v276
    %3398 = vmatpush.msra.mxu0 %v272
    %3399 = vmatpush.msra.mxu0 %v268
    %3400 = vmatpush.msra.mxu0 %v264
    %3401 = vmatpush.msra.mxu0 %v260
    %3402 = vmatmul.f32.gmra.mxu0 %v3093
    %v3403 = vpop.f32.mrf.mxu0
    %v3404 = vadd.f32 0.0, %v3403
    %3405 = vdwg.mxu0
    %3406 = vmatpush.msra.mxu0 %v253
    %3407 = vmatpush.msra.mxu0 %v249
    %3408 = vmatpush.msra.mxu0 %v245
    %3409 = vmatpush.msra.mxu0 %v241
    %3410 = vmatpush.msra.mxu0 %v237
    %3411 = vmatpush.msra.mxu0 %v233
    %3412 = vmatpush.msra.mxu0 %v229
    %3413 = vmatpush.msra.mxu0 %v225
    %3414 = vmatpush.msra.mxu0 %v221
    %3415 = vmatpush.msra.mxu0 %v217
    %3416 = vmatpush.msra.mxu0 %v213
    %3417 = vmatpush.msra.mxu0 %v209
    %3418 = vmatpush.msra.mxu0 %v205
    %3419 = vmatpush.msra.mxu0 %v201
    %3420 = vmatpush.msra.mxu0 %v197
    %3421 = vmatpush.msra.mxu0 %v193
    %3422 = vmatmul.f32.gmra.mxu0 %v3325
    %v3423 = vpop.f32.mrf.mxu0
    %v3424 = vadd.f32 %v3344, %v3423
    %3425 = vdwg.mxu0
    %3426 = vmatpush.msra.mxu0 %v254
    %3427 = vmatpush.msra.mxu0 %v250
    %3428 = vmatpush.msra.mxu0 %v246
    %3429 = vmatpush.msra.mxu0 %v242
    %3430 = vmatpush.msra.mxu0 %v238
    %3431 = vmatpush.msra.mxu0 %v234
    %3432 = vmatpush.msra.mxu0 %v230
    %3433 = vmatpush.msra.mxu0 %v226
    %3434 = vmatpush.msra.mxu0 %v222
    %3435 = vmatpush.msra.mxu0 %v218
    %3436 = vmatpush.msra.mxu0 %v214
    %3437 = vmatpush.msra.mxu0 %v210
    %3438 = vmatpush.msra.mxu0 %v206
    %3439 = vmatpush.msra.mxu0 %v202
    %3440 = vmatpush.msra.mxu0 %v198
    %3441 = vmatpush.msra.mxu0 %v194
    %3442 = vmatmul.f32.gmra.mxu0 %v3325
    %v3443 = vpop.f32.mrf.mxu0
    %v3444 = vadd.f32 %v3364, %v3443
    %3445 = vdwg.mxu0
    %3446 = vmatpush.msra.mxu0 %v255
    %3447 = vmatpush.msra.mxu0 %v251
    %3448 = vmatpush.msra.mxu0 %v247
    %3449 = vmatpush.msra.mxu0 %v243
    %3450 = vmatpush.msra.mxu0 %v239
    %3451 = vmatpush.msra.mxu0 %v235
    %3452 = vmatpush.msra.mxu0 %v231
    %3453 = vmatpush.msra.mxu0 %v227
    %3454 = vmatpush.msra.mxu0 %v223
    %3455 = vmatpush.msra.mxu0 %v219
    %3456 = vmatpush.msra.mxu0 %v215
    %3457 = vmatpush.msra.mxu0 %v211
    %3458 = vmatpush.msra.mxu0 %v207
    %3459 = vmatpush.msra.mxu0 %v203
    %3460 = vmatpush.msra.mxu0 %v199
    %3461 = vmatpush.msra.mxu0 %v195
    %3462 = vmatmul.f32.gmra.mxu0 %v3325
    %v3463 = vpop.f32.mrf.mxu0
    %v3464 = vadd.f32 %v3384, %v3463
    %3465 = vdwg.mxu0
    %3466 = vmatpush.msra.mxu0 %v256
    %3467 = vmatpush.msra.mxu0 %v252
    %3468 = vmatpush.msra.mxu0 %v248
    %3469 = vmatpush.msra.mxu0 %v244
    %3470 = vmatpush.msra.mxu0 %v240
    %3471 = vmatpush.msra.mxu0 %v236
    %3472 = vmatpush.msra.mxu0 %v232
    %3473 = vmatpush.msra.mxu0 %v228
    %3474 = vmatpush.msra.mxu0 %v224
    %3475 = vmatpush.msra.mxu0 %v220
    %3476 = vmatpush.msra.mxu0 %v216
    %3477 = vmatpush.msra.mxu0 %v212
    %3478 = vmatpush.msra.mxu0 %v208
    %3479 = vmatpush.msra.mxu0 %v204
    %3480 = vmatpush.msra.mxu0 %v200
    %3481 = vmatpush.msra.mxu0 %v196
    %3482 = vmatmul.f32.gmra.mxu0 %v3325
    %v3483 = vpop.f32.mrf.mxu0
    %v3484 = vadd.f32 %v3404, %v3483
    %3485 = vdwg.mxu0
    %v3486 = vadd.f32 %v3424, %v724
    %v3487 = vadd.f32 %v3444, %v725
    %v3488 = vadd.f32 %v3464, %v726
    %v3489 = vadd.f32 %v3484, %v727
    %v3490 = vxor.u32 %v3486, 2147483648
    %v3491 = vmul.f32 %v3490, 1.442695
    %v3492 = vpow.pop %v3491
    %v3493 = vadd.f32 %v3492, 1.0
    %v3494 = vrcp.pop %v3493
    %v3495 = vmul.f32 %v3493, %v3494
    %v3496 = vsub.f32 1.0, %v3495
    %v3497 = vmul.f32 %v3494, %v3496
    %v3498 = vadd.f32 %v3494, %v3497
    %vm3499 = vweird.f32 %v3493
    %vm3500 = vweird.f32 %v3494
    %vm3501 = vmor %vm3499, %vm3500
    %v3502 = vsel %vm3501, %v3494, %v3498
    %v3503 = vand.u32 2147483647, %v3493
    %vm3504 = vcmp.eq.f32.partialorder %v3503, 8.507059e+37
    %v3505 = vand.u32 %v3493, 2147483648
    %v3506 = vor.u32 1.1754944e-38, %v3505
    %v3507 = vsel %vm3504, %v3506, %v3502
    %v3508 = vmul.f32 1.0, %v3507
    %v3509 = vxor.u32 %v3487, 2147483648
    %v3510 = vmul.f32 %v3509, 1.442695
    %v3511 = vpow.pop %v3510
    %v3512 = vadd.f32 %v3511, 1.0
    %v3513 = vrcp.pop %v3512
    %v3514 = vmul.f32 %v3512, %v3513
    %v3515 = vsub.f32 1.0, %v3514
    %v3516 = vmul.f32 %v3513, %v3515
    %v3517 = vadd.f32 %v3513, %v3516
    %vm3518 = vweird.f32 %v3512
    %vm3519 = vweird.f32 %v3513
    %vm3520 = vmor %vm3518, %vm3519
    %v3521 = vsel %vm3520, %v3513, %v3517
    %v3522 = vand.u32 2147483647, %v3512
    %vm3523 = vcmp.eq.f32.partialorder %v3522, 8.507059e+37
    %v3524 = vand.u32 %v3512, 2147483648
    %v3525 = vor.u32 1.1754944e-38, %v3524
    %v3526 = vsel %vm3523, %v3525, %v3521
    %v3527 = vmul.f32 1.0, %v3526
    %v3528 = vtanh.pop %v3488
    %v3529 = vxor.u32 %v3489, 2147483648
    %v3530 = vmul.f32 %v3529, 1.442695
    %v3531 = vpow.pop %v3530
    %v3532 = vadd.f32 %v3531, 1.0
    %v3533 = vrcp.pop %v3532
    %v3534 = vmul.f32 %v3532, %v3533
    %v3535 = vsub.f32 1.0, %v3534
    %v3536 = vmul.f32 %v3533, %v3535
    %v3537 = vadd.f32 %v3533, %v3536
    %vm3538 = vweird.f32 %v3532
    %vm3539 = vweird.f32 %v3533
    %vm3540 = vmor %vm3538, %vm3539
    %v3541 = vsel %vm3540, %v3533, %v3537
    %v3542 = vand.u32 2147483647, %v3532
    %vm3543 = vcmp.eq.f32.partialorder %v3542, 8.507059e+37
    %v3544 = vand.u32 %v3532, 2147483648
    %v3545 = vor.u32 1.1754944e-38, %v3544
    %v3546 = vsel %vm3543, %v3545, %v3541
    %v3547 = vmul.f32 1.0, %v3546
    %v3548 = vmul.f32 %v3527, %v3091
    %v3549 = vmul.f32 %v3508, %v3528
    %v3550 = vadd.f32 %v3548, %v3549
    %v3551 = vtanh.pop %v3550
    %v3552 = vmul.f32 %v3547, %v3551
    %s3553 = scalar_lea.vmem %s0, 14
    %v3554 = vld [vmem:[%s3553] sm:$0x3]
    %3555 = vmatpush.msra.mxu0 %v188
    %3556 = vmatpush.msra.mxu0 %v184
    %3557 = vmatpush.msra.mxu0 %v180
    %3558 = vmatpush.msra.mxu0 %v176
    %3559 = vmatpush.msra.mxu0 %v172
    %3560 = vmatpush.msra.mxu0 %v168
    %3561 = vmatpush.msra.mxu0 %v164
    %3562 = vmatpush.msra.mxu0 %v160
    %3563 = vmatpush.msra.mxu0 %v156
    %3564 = vmatpush.msra.mxu0 %v152
    %3565 = vmatpush.msra.mxu0 %v148
    %3566 = vmatpush.msra.mxu0 %v144
    %3567 = vmatpush.msra.mxu0 %v140
    %3568 = vmatpush.msra.mxu0 %v136
    %3569 = vmatpush.msra.mxu0 %v132
    %3570 = vmatpush.msra.mxu0 %v128
    %3571 = vmatmul.f32.gmra.mxu0 %v3325
    %v3572 = vpop.f32.mrf.mxu0
    %v3573 = vadd.f32 0.0, %v3572
    %3574 = vdwg.mxu0
    %3575 = vmatpush.msra.mxu0 %v189
    %3576 = vmatpush.msra.mxu0 %v185
    %3577 = vmatpush.msra.mxu0 %v181
    %3578 = vmatpush.msra.mxu0 %v177
    %3579 = vmatpush.msra.mxu0 %v173
    %3580 = vmatpush.msra.mxu0 %v169
    %3581 = vmatpush.msra.mxu0 %v165
    %3582 = vmatpush.msra.mxu0 %v161
    %3583 = vmatpush.msra.mxu0 %v157
    %3584 = vmatpush.msra.mxu0 %v153
    %3585 = vmatpush.msra.mxu0 %v149
    %3586 = vmatpush.msra.mxu0 %v145
    %3587 = vmatpush.msra.mxu0 %v141
    %3588 = vmatpush.msra.mxu0 %v137
    %3589 = vmatpush.msra.mxu0 %v133
    %3590 = vmatpush.msra.mxu0 %v129
    %3591 = vmatmul.f32.gmra.mxu0 %v3325
    %v3592 = vpop.f32.mrf.mxu0
    %v3593 = vadd.f32 0.0, %v3592
    %3594 = vdwg.mxu0
    %3595 = vmatpush.msra.mxu0 %v190
    %3596 = vmatpush.msra.mxu0 %v186
    %3597 = vmatpush.msra.mxu0 %v182
    %3598 = vmatpush.msra.mxu0 %v178
    %3599 = vmatpush.msra.mxu0 %v174
    %3600 = vmatpush.msra.mxu0 %v170
    %3601 = vmatpush.msra.mxu0 %v166
    %3602 = vmatpush.msra.mxu0 %v162
    %3603 = vmatpush.msra.mxu0 %v158
    %3604 = vmatpush.msra.mxu0 %v154
    %3605 = vmatpush.msra.mxu0 %v150
    %3606 = vmatpush.msra.mxu0 %v146
    %3607 = vmatpush.msra.mxu0 %v142
    %3608 = vmatpush.msra.mxu0 %v138
    %3609 = vmatpush.msra.mxu0 %v134
    %3610 = vmatpush.msra.mxu0 %v130
    %3611 = vmatmul.f32.gmra.mxu0 %v3325
    %v3612 = vpop.f32.mrf.mxu0
    %v3613 = vadd.f32 0.0, %v3612
    %3614 = vdwg.mxu0
    %3615 = vmatpush.msra.mxu0 %v191
    %3616 = vmatpush.msra.mxu0 %v187
    %3617 = vmatpush.msra.mxu0 %v183
    %3618 = vmatpush.msra.mxu0 %v179
    %3619 = vmatpush.msra.mxu0 %v175
    %3620 = vmatpush.msra.mxu0 %v171
    %3621 = vmatpush.msra.mxu0 %v167
    %3622 = vmatpush.msra.mxu0 %v163
    %3623 = vmatpush.msra.mxu0 %v159
    %3624 = vmatpush.msra.mxu0 %v155
    %3625 = vmatpush.msra.mxu0 %v151
    %3626 = vmatpush.msra.mxu0 %v147
    %3627 = vmatpush.msra.mxu0 %v143
    %3628 = vmatpush.msra.mxu0 %v139
    %3629 = vmatpush.msra.mxu0 %v135
    %3630 = vmatpush.msra.mxu0 %v131
    %3631 = vmatmul.f32.gmra.mxu0 %v3325
    %v3632 = vpop.f32.mrf.mxu0
    %v3633 = vadd.f32 0.0, %v3632
    %3634 = vdwg.mxu0
    %v3636 = vsel %vm403, %v3554, 0
    %3638 = vmatpush.msra.mxu0 0.0
    %3639 = vmatpush.msra.mxu0 0.0
    %3640 = vmatpush.msra.mxu0 0.0
    %3641 = vmatpush.msra.mxu0 0.0
    %3642 = vmatpush.msra.mxu0 0.0
    %3643 = vmatpush.msra.mxu0 0.0
    %3644 = vmatpush.msra.mxu0 0.0
    %3645 = vmatpush.msra.mxu0 0.0
    %3646 = vmatpush.msra.mxu0 %v124
    %3647 = vmatpush.msra.mxu0 %v120
    %3648 = vmatpush.msra.mxu0 %v116
    %3649 = vmatpush.msra.mxu0 %v112
    %3650 = vmatpush.msra.mxu0 %v108
    %3651 = vmatpush.msra.mxu0 %v104
    %3652 = vmatpush.msra.mxu0 %v100
    %3653 = vmatpush.msra.mxu0 %v96
    %3654 = vmatmul.f32.gmra.mxu0 %v3636
    %v3655 = vpop.f32.mrf.mxu0
    %v3656 = vadd.f32 %v3573, %v3655
    %3657 = vdwg.mxu0
    %3658 = vmatpush.msra.mxu0 0.0
    %3659 = vmatpush.msra.mxu0 0.0
    %3660 = vmatpush.msra.mxu0 0.0
    %3661 = vmatpush.msra.mxu0 0.0
    %3662 = vmatpush.msra.mxu0 0.0
    %3663 = vmatpush.msra.mxu0 0.0
    %3664 = vmatpush.msra.mxu0 0.0
    %3665 = vmatpush.msra.mxu0 0.0
    %3666 = vmatpush.msra.mxu0 %v125
    %3667 = vmatpush.msra.mxu0 %v121
    %3668 = vmatpush.msra.mxu0 %v117
    %3669 = vmatpush.msra.mxu0 %v113
    %3670 = vmatpush.msra.mxu0 %v109
    %3671 = vmatpush.msra.mxu0 %v105
    %3672 = vmatpush.msra.mxu0 %v101
    %3673 = vmatpush.msra.mxu0 %v97
    %3674 = vmatmul.f32.gmra.mxu0 %v3636
    %v3675 = vpop.f32.mrf.mxu0
    %v3676 = vadd.f32 %v3593, %v3675
    %3677 = vdwg.mxu0
    %3678 = vmatpush.msra.mxu0 0.0
    %3679 = vmatpush.msra.mxu0 0.0
    %3680 = vmatpush.msra.mxu0 0.0
    %3681 = vmatpush.msra.mxu0 0.0
    %3682 = vmatpush.msra.mxu0 0.0
    %3683 = vmatpush.msra.mxu0 0.0
    %3684 = vmatpush.msra.mxu0 0.0
    %3685 = vmatpush.msra.mxu0 0.0
    %3686 = vmatpush.msra.mxu0 %v126
    %3687 = vmatpush.msra.mxu0 %v122
    %3688 = vmatpush.msra.mxu0 %v118
    %3689 = vmatpush.msra.mxu0 %v114
    %3690 = vmatpush.msra.mxu0 %v110
    %3691 = vmatpush.msra.mxu0 %v106
    %3692 = vmatpush.msra.mxu0 %v102
    %3693 = vmatpush.msra.mxu0 %v98
    %3694 = vmatmul.f32.gmra.mxu0 %v3636
    %v3695 = vpop.f32.mrf.mxu0
    %v3696 = vadd.f32 %v3613, %v3695
    %3697 = vdwg.mxu0
    %3698 = vmatpush.msra.mxu0 0.0
    %3699 = vmatpush.msra.mxu0 0.0
    %3700 = vmatpush.msra.mxu0 0.0
    %3701 = vmatpush.msra.mxu0 0.0
    %3702 = vmatpush.msra.mxu0 0.0
    %3703 = vmatpush.msra.mxu0 0.0
    %3704 = vmatpush.msra.mxu0 0.0
    %3705 = vmatpush.msra.mxu0 0.0
    %3706 = vmatpush.msra.mxu0 %v127
    %3707 = vmatpush.msra.mxu0 %v123
    %3708 = vmatpush.msra.mxu0 %v119
    %3709 = vmatpush.msra.mxu0 %v115
    %3710 = vmatpush.msra.mxu0 %v111
    %3711 = vmatpush.msra.mxu0 %v107
    %3712 = vmatpush.msra.mxu0 %v103
    %3713 = vmatpush.msra.mxu0 %v99
    %3714 = vmatmul.f32.gmra.mxu0 %v3636
    %v3715 = vpop.f32.mrf.mxu0
    %v3716 = vadd.f32 %v3633, %v3715
    %3717 = vdwg.mxu0
    %v3718 = vadd.f32 %v3656, %v488
    %v3719 = vadd.f32 %v3676, %v489
    %v3720 = vadd.f32 %v3696, %v490
    %v3721 = vadd.f32 %v3716, %v491
    %v3722 = vxor.u32 %v3718, 2147483648
    %v3723 = vmul.f32 %v3722, 1.442695
    %v3724 = vpow.pop %v3723
    %v3725 = vadd.f32 %v3724, 1.0
    %v3726 = vrcp.pop %v3725
    %v3727 = vmul.f32 %v3725, %v3726
    %v3728 = vsub.f32 1.0, %v3727
    %v3729 = vmul.f32 %v3726, %v3728
    %v3730 = vadd.f32 %v3726, %v3729
    %vm3731 = vweird.f32 %v3725
    %vm3732 = vweird.f32 %v3726
    %vm3733 = vmor %vm3731, %vm3732
    %v3734 = vsel %vm3733, %v3726, %v3730
    %v3735 = vand.u32 2147483647, %v3725
    %vm3736 = vcmp.eq.f32.partialorder %v3735, 8.507059e+37
    %v3737 = vand.u32 %v3725, 2147483648
    %v3738 = vor.u32 1.1754944e-38, %v3737
    %v3739 = vsel %vm3736, %v3738, %v3734
    %v3740 = vmul.f32 1.0, %v3739
    %v3741 = vxor.u32 %v3719, 2147483648
    %v3742 = vmul.f32 %v3741, 1.442695
    %v3743 = vpow.pop %v3742
    %v3744 = vadd.f32 %v3743, 1.0
    %v3745 = vrcp.pop %v3744
    %v3746 = vmul.f32 %v3744, %v3745
    %v3747 = vsub.f32 1.0, %v3746
    %v3748 = vmul.f32 %v3745, %v3747
    %v3749 = vadd.f32 %v3745, %v3748
    %vm3750 = vweird.f32 %v3744
    %vm3751 = vweird.f32 %v3745
    %vm3752 = vmor %vm3750, %vm3751
    %v3753 = vsel %vm3752, %v3745, %v3749
    %v3754 = vand.u32 2147483647, %v3744
    %vm3755 = vcmp.eq.f32.partialorder %v3754, 8.507059e+37
    %v3756 = vand.u32 %v3744, 2147483648
    %v3757 = vor.u32 1.1754944e-38, %v3756
    %v3758 = vsel %vm3755, %v3757, %v3753
    %v3759 = vmul.f32 1.0, %v3758
    %v3760 = vtanh.pop %v3720
    %v3761 = vxor.u32 %v3721, 2147483648
    %v3762 = vmul.f32 %v3761, 1.442695
    %v3763 = vpow.pop %v3762
    %v3764 = vadd.f32 %v3763, 1.0
    %v3765 = vrcp.pop %v3764
    %v3766 = vmul.f32 %v3764, %v3765
    %v3767 = vsub.f32 1.0, %v3766
    %v3768 = vmul.f32 %v3765, %v3767
    %v3769 = vadd.f32 %v3765, %v3768
    %vm3770 = vweird.f32 %v3764
    %vm3771 = vweird.f32 %v3765
    %vm3772 = vmor %vm3770, %vm3771
    %v3773 = vsel %vm3772, %v3765, %v3769
    %v3774 = vand.u32 2147483647, %v3764
    %vm3775 = vcmp.eq.f32.partialorder %v3774, 8.507059e+37
    %v3776 = vand.u32 %v3764, 2147483648
    %v3777 = vor.u32 1.1754944e-38, %v3776
    %v3778 = vsel %vm3775, %v3777, %v3773
    %v3779 = vmul.f32 1.0, %v3778
    %v3780 = vmul.f32 %v3759, %v3323
    %v3781 = vmul.f32 %v3740, %v3760
    %v3782 = vadd.f32 %v3780, %v3781
    %v3783 = vtanh.pop %v3782
    %v3784 = vmul.f32 %v3779, %v3783
    %3785 = vmatpush.msra.mxu0 %v317
    %3786 = vmatpush.msra.mxu0 %v313
    %3787 = vmatpush.msra.mxu0 %v309
    %3788 = vmatpush.msra.mxu0 %v305
    %3789 = vmatpush.msra.mxu0 %v301
    %3790 = vmatpush.msra.mxu0 %v297
    %3791 = vmatpush.msra.mxu0 %v293
    %3792 = vmatpush.msra.mxu0 %v289
    %3793 = vmatpush.msra.mxu0 %v285
    %3794 = vmatpush.msra.mxu0 %v281
    %3795 = vmatpush.msra.mxu0 %v277
    %3796 = vmatpush.msra.mxu0 %v273
    %3797 = vmatpush.msra.mxu0 %v269
    %3798 = vmatpush.msra.mxu0 %v265
    %3799 = vmatpush.msra.mxu0 %v261
    %3800 = vmatpush.msra.mxu0 %v257
    %3801 = vmatmul.f32.gmra.mxu0 %v3552
    %v3802 = vpop.f32.mrf.mxu0
    %v3803 = vadd.f32 0.0, %v3802
    %3804 = vdwg.mxu0
    %3805 = vmatpush.msra.mxu0 %v318
    %3806 = vmatpush.msra.mxu0 %v314
    %3807 = vmatpush.msra.mxu0 %v310
    %3808 = vmatpush.msra.mxu0 %v306
    %3809 = vmatpush.msra.mxu0 %v302
    %3810 = vmatpush.msra.mxu0 %v298
    %3811 = vmatpush.msra.mxu0 %v294
    %3812 = vmatpush.msra.mxu0 %v290
    %3813 = vmatpush.msra.mxu0 %v286
    %3814 = vmatpush.msra.mxu0 %v282
    %3815 = vmatpush.msra.mxu0 %v278
    %3816 = vmatpush.msra.mxu0 %v274
    %3817 = vmatpush.msra.mxu0 %v270
    %3818 = vmatpush.msra.mxu0 %v266
    %3819 = vmatpush.msra.mxu0 %v262
    %3820 = vmatpush.msra.mxu0 %v258
    %3821 = vmatmul.f32.gmra.mxu0 %v3552
    %v3822 = vpop.f32.mrf.mxu0
    %v3823 = vadd.f32 0.0, %v3822
    %3824 = vdwg.mxu0
    %3825 = vmatpush.msra.mxu0 %v319
    %3826 = vmatpush.msra.mxu0 %v315
    %3827 = vmatpush.msra.mxu0 %v311
    %3828 = vmatpush.msra.mxu0 %v307
    %3829 = vmatpush.msra.mxu0 %v303
    %3830 = vmatpush.msra.mxu0 %v299
    %3831 = vmatpush.msra.mxu0 %v295
    %3832 = vmatpush.msra.mxu0 %v291
    %3833 = vmatpush.msra.mxu0 %v287
    %3834 = vmatpush.msra.mxu0 %v283
    %3835 = vmatpush.msra.mxu0 %v279
    %3836 = vmatpush.msra.mxu0 %v275
    %3837 = vmatpush.msra.mxu0 %v271
    %3838 = vmatpush.msra.mxu0 %v267
    %3839 = vmatpush.msra.mxu0 %v263
    %3840 = vmatpush.msra.mxu0 %v259
    %3841 = vmatmul.f32.gmra.mxu0 %v3552
    %v3842 = vpop.f32.mrf.mxu0
    %v3843 = vadd.f32 0.0, %v3842
    %3844 = vdwg.mxu0
    %3845 = vmatpush.msra.mxu0 %v320
    %3846 = vmatpush.msra.mxu0 %v316
    %3847 = vmatpush.msra.mxu0 %v312
    %3848 = vmatpush.msra.mxu0 %v308
    %3849 = vmatpush.msra.mxu0 %v304
    %3850 = vmatpush.msra.mxu0 %v300
    %3851 = vmatpush.msra.mxu0 %v296
    %3852 = vmatpush.msra.mxu0 %v292
    %3853 = vmatpush.msra.mxu0 %v288
    %3854 = vmatpush.msra.mxu0 %v284
    %3855 = vmatpush.msra.mxu0 %v280
    %3856 = vmatpush.msra.mxu0 %v276
    %3857 = vmatpush.msra.mxu0 %v272
    %3858 = vmatpush.msra.mxu0 %v268
    %3859 = vmatpush.msra.mxu0 %v264
    %3860 = vmatpush.msra.mxu0 %v260
    %3861 = vmatmul.f32.gmra.mxu0 %v3552
    %v3862 = vpop.f32.mrf.mxu0
    %v3863 = vadd.f32 0.0, %v3862
    %3864 = vdwg.mxu0
    %3865 = vmatpush.msra.mxu0 %v253
    %3866 = vmatpush.msra.mxu0 %v249
    %3867 = vmatpush.msra.mxu0 %v245
    %3868 = vmatpush.msra.mxu0 %v241
    %3869 = vmatpush.msra.mxu0 %v237
    %3870 = vmatpush.msra.mxu0 %v233
    %3871 = vmatpush.msra.mxu0 %v229
    %3872 = vmatpush.msra.mxu0 %v225
    %3873 = vmatpush.msra.mxu0 %v221
    %3874 = vmatpush.msra.mxu0 %v217
    %3875 = vmatpush.msra.mxu0 %v213
    %3876 = vmatpush.msra.mxu0 %v209
    %3877 = vmatpush.msra.mxu0 %v205
    %3878 = vmatpush.msra.mxu0 %v201
    %3879 = vmatpush.msra.mxu0 %v197
    %3880 = vmatpush.msra.mxu0 %v193
    %3881 = vmatmul.f32.gmra.mxu0 %v3784
    %v3882 = vpop.f32.mrf.mxu0
    %v3883 = vadd.f32 %v3803, %v3882
    %3884 = vdwg.mxu0
    %3885 = vmatpush.msra.mxu0 %v254
    %3886 = vmatpush.msra.mxu0 %v250
    %3887 = vmatpush.msra.mxu0 %v246
    %3888 = vmatpush.msra.mxu0 %v242
    %3889 = vmatpush.msra.mxu0 %v238
    %3890 = vmatpush.msra.mxu0 %v234
    %3891 = vmatpush.msra.mxu0 %v230
    %3892 = vmatpush.msra.mxu0 %v226
    %3893 = vmatpush.msra.mxu0 %v222
    %3894 = vmatpush.msra.mxu0 %v218
    %3895 = vmatpush.msra.mxu0 %v214
    %3896 = vmatpush.msra.mxu0 %v210
    %3897 = vmatpush.msra.mxu0 %v206
    %3898 = vmatpush.msra.mxu0 %v202
    %3899 = vmatpush.msra.mxu0 %v198
    %3900 = vmatpush.msra.mxu0 %v194
    %3901 = vmatmul.f32.gmra.mxu0 %v3784
    %v3902 = vpop.f32.mrf.mxu0
    %v3903 = vadd.f32 %v3823, %v3902
    %3904 = vdwg.mxu0
    %3905 = vmatpush.msra.mxu0 %v255
    %3906 = vmatpush.msra.mxu0 %v251
    %3907 = vmatpush.msra.mxu0 %v247
    %3908 = vmatpush.msra.mxu0 %v243
    %3909 = vmatpush.msra.mxu0 %v239
    %3910 = vmatpush.msra.mxu0 %v235
    %3911 = vmatpush.msra.mxu0 %v231
    %3912 = vmatpush.msra.mxu0 %v227
    %3913 = vmatpush.msra.mxu0 %v223
    %3914 = vmatpush.msra.mxu0 %v219
    %3915 = vmatpush.msra.mxu0 %v215
    %3916 = vmatpush.msra.mxu0 %v211
    %3917 = vmatpush.msra.mxu0 %v207
    %3918 = vmatpush.msra.mxu0 %v203
    %3919 = vmatpush.msra.mxu0 %v199
    %3920 = vmatpush.msra.mxu0 %v195
    %3921 = vmatmul.f32.gmra.mxu0 %v3784
    %v3922 = vpop.f32.mrf.mxu0
    %v3923 = vadd.f32 %v3843, %v3922
    %3924 = vdwg.mxu0
    %3925 = vmatpush.msra.mxu0 %v256
    %3926 = vmatpush.msra.mxu0 %v252
    %3927 = vmatpush.msra.mxu0 %v248
    %3928 = vmatpush.msra.mxu0 %v244
    %3929 = vmatpush.msra.mxu0 %v240
    %3930 = vmatpush.msra.mxu0 %v236
    %3931 = vmatpush.msra.mxu0 %v232
    %3932 = vmatpush.msra.mxu0 %v228
    %3933 = vmatpush.msra.mxu0 %v224
    %3934 = vmatpush.msra.mxu0 %v220
    %3935 = vmatpush.msra.mxu0 %v216
    %3936 = vmatpush.msra.mxu0 %v212
    %3937 = vmatpush.msra.mxu0 %v208
    %3938 = vmatpush.msra.mxu0 %v204
    %3939 = vmatpush.msra.mxu0 %v200
    %3940 = vmatpush.msra.mxu0 %v196
    %3941 = vmatmul.f32.gmra.mxu0 %v3784
    %v3942 = vpop.f32.mrf.mxu0
    %v3943 = vadd.f32 %v3863, %v3942
    %3944 = vdwg.mxu0
    %v3945 = vadd.f32 %v3883, %v724
    %v3946 = vadd.f32 %v3903, %v725
    %v3947 = vadd.f32 %v3923, %v726
    %v3948 = vadd.f32 %v3943, %v727
    %v3949 = vxor.u32 %v3945, 2147483648
    %v3950 = vmul.f32 %v3949, 1.442695
    %v3951 = vpow.pop %v3950
    %v3952 = vadd.f32 %v3951, 1.0
    %v3953 = vrcp.pop %v3952
    %v3954 = vmul.f32 %v3952, %v3953
    %v3955 = vsub.f32 1.0, %v3954
    %v3956 = vmul.f32 %v3953, %v3955
    %v3957 = vadd.f32 %v3953, %v3956
    %vm3958 = vweird.f32 %v3952
    %vm3959 = vweird.f32 %v3953
    %vm3960 = vmor %vm3958, %vm3959
    %v3961 = vsel %vm3960, %v3953, %v3957
    %v3962 = vand.u32 2147483647, %v3952
    %vm3963 = vcmp.eq.f32.partialorder %v3962, 8.507059e+37
    %v3964 = vand.u32 %v3952, 2147483648
    %v3965 = vor.u32 1.1754944e-38, %v3964
    %v3966 = vsel %vm3963, %v3965, %v3961
    %v3967 = vmul.f32 1.0, %v3966
    %v3968 = vxor.u32 %v3946, 2147483648
    %v3969 = vmul.f32 %v3968, 1.442695
    %v3970 = vpow.pop %v3969
    %v3971 = vadd.f32 %v3970, 1.0
    %v3972 = vrcp.pop %v3971
    %v3973 = vmul.f32 %v3971, %v3972
    %v3974 = vsub.f32 1.0, %v3973
    %v3975 = vmul.f32 %v3972, %v3974
    %v3976 = vadd.f32 %v3972, %v3975
    %vm3977 = vweird.f32 %v3971
    %vm3978 = vweird.f32 %v3972
    %vm3979 = vmor %vm3977, %vm3978
    %v3980 = vsel %vm3979, %v3972, %v3976
    %v3981 = vand.u32 2147483647, %v3971
    %vm3982 = vcmp.eq.f32.partialorder %v3981, 8.507059e+37
    %v3983 = vand.u32 %v3971, 2147483648
    %v3984 = vor.u32 1.1754944e-38, %v3983
    %v3985 = vsel %vm3982, %v3984, %v3980
    %v3986 = vmul.f32 1.0, %v3985
    %v3987 = vtanh.pop %v3947
    %v3988 = vxor.u32 %v3948, 2147483648
    %v3989 = vmul.f32 %v3988, 1.442695
    %v3990 = vpow.pop %v3989
    %v3991 = vadd.f32 %v3990, 1.0
    %v3992 = vrcp.pop %v3991
    %v3993 = vmul.f32 %v3991, %v3992
    %v3994 = vsub.f32 1.0, %v3993
    %v3995 = vmul.f32 %v3992, %v3994
    %v3996 = vadd.f32 %v3992, %v3995
    %vm3997 = vweird.f32 %v3991
    %vm3998 = vweird.f32 %v3992
    %vm3999 = vmor %vm3997, %vm3998
    %v4000 = vsel %vm3999, %v3992, %v3996
    %v4001 = vand.u32 2147483647, %v3991
    %vm4002 = vcmp.eq.f32.partialorder %v4001, 8.507059e+37
    %v4003 = vand.u32 %v3991, 2147483648
    %v4004 = vor.u32 1.1754944e-38, %v4003
    %v4005 = vsel %vm4002, %v4004, %v4000
    %v4006 = vmul.f32 1.0, %v4005
    %v4007 = vmul.f32 %v3986, %v3550
    %v4008 = vmul.f32 %v3967, %v3987
    %v4009 = vadd.f32 %v4007, %v4008
    %v4010 = vtanh.pop %v4009
    %v4011 = vmul.f32 %v4006, %v4010
    %v4012 = vld [vmem:[%s7] sm:$0xff]
    %v4013 = vld [vmem:[%s7 + $0x8] sm:$0xff]
    %v4014 = vld [vmem:[%s7 + $0x10] sm:$0xff]
    %v4015 = vld [vmem:[%s7 + $0x18] sm:$0xff]
    %v4016 = vld [vmem:[%s7 + $0x20] sm:$0xff]
    %v4017 = vld [vmem:[%s7 + $0x28] sm:$0xff]
    %v4018 = vld [vmem:[%s7 + $0x30] sm:$0xff]
    %v4019 = vld [vmem:[%s7 + $0x38] sm:$0xff]
    %v4020 = vld [vmem:[%s7 + $0x40] sm:$0xff]
    %v4021 = vld [vmem:[%s7 + $0x48] sm:$0xff]
    %v4022 = vld [vmem:[%s7 + $0x50] sm:$0xff]
    %v4023 = vld [vmem:[%s7 + $0x58] sm:$0xff]
    %v4024 = vld [vmem:[%s7 + $0x60] sm:$0xff]
    %v4025 = vld [vmem:[%s7 + $0x68] sm:$0xff]
    %v4026 = vld [vmem:[%s7 + $0x70] sm:$0xff]
    %v4027 = vld [vmem:[%s7 + $0x78] sm:$0xff]
    %v4028 = vld [vmem:[%s8] sm:$0x1]
    %v4030 = vperm.slane %v4028, 0
    %4032 = vmatpush.msra.mxu0 %v4027
    %4033 = vmatpush.msra.mxu0 %v4026
    %4034 = vmatpush.msra.mxu0 %v4025
    %4035 = vmatpush.msra.mxu0 %v4024
    %4036 = vmatpush.msra.mxu0 %v4023
    %4037 = vmatpush.msra.mxu0 %v4022
    %4038 = vmatpush.msra.mxu0 %v4021
    %4039 = vmatpush.msra.mxu0 %v4020
    %4040 = vmatpush.msra.mxu0 %v4019
    %4041 = vmatpush.msra.mxu0 %v4018
    %4042 = vmatpush.msra.mxu0 %v4017
    %4043 = vmatpush.msra.mxu0 %v4016
    %4044 = vmatpush.msra.mxu0 %v4015
    %4045 = vmatpush.msra.mxu0 %v4014
    %4046 = vmatpush.msra.mxu0 %v4013
    %4047 = vmatpush.msra.mxu0 %v4012
    %4048 = vmatmul.f32.gmra.mxu0 %v4011
    %v4049 = vpop.f32.mrf.mxu0
    %v4050 = vadd.f32 %v4030, %v4049
    %4051 = vdwg.mxu0
    %vm4052 = vcmask 74752
    %4053 = vst.msk [vmem:[#allocation10] sm:$0x3] %vm4052, %v4050
    // Predicated region
    $region54: #{lstm_forward.1} parent=1 // pred_check
      _
    $region55: #{lstm_forward.1} parent=1 // pred_check_branch
      %4055 = sbr.rel (0) target = $region57
    $region56: #{lstm_forward.1} parent=1 // pred_region
      %4057 = vsyncadd [#allocation4], 0
      %s4059 = sshll.u32 [#allocation10], 4
      %s4060 = int_to_ptr.vmem [resolvable:$true] %s4059
      %s4061 = sshll.u32 %s9, 4
      %s4062 = int_to_ptr.hbm [resolvable:$true] %s4061
      %4064 = dma.vmem_to_hbm [thread:$0]  %s4060, 32, %s4062, [#allocation4]
    $region57: #{lstm_forward.1} parent=1 // pred_fallthru
      _
    // Predicated region
    $region58: #{lstm_forward.1} parent=1 // pred_check
      _
    $region59: #{lstm_forward.1} parent=1 // pred_check_branch
      %4066 = sbr.rel (0) target = $region61
    $region60: #{lstm_forward.1} parent=1 // pred_region
      %4068 = dma.done [#allocation4], 32
    $region61: #{lstm_forward.1} parent=1 // pred_fallthru
      _
    %4069 = vsyncpa [#allocation3], 1
    %4070 = vsyncpa [#allocation6], 1
    %4071 = vsyncpa [#allocation9], 1
    %4072 = vsyncpa [#allocation4], 1

</llo_original>
